<compile_context>
chip_gen: v7x
topology: tpu7x:2x2x1
jax: 0.10.0
libtpu: 0.0.40
codegen_flags: <defaults>
</compile_context>

<pallas_src>
import functools

import jax
import jax.numpy as jnp
from jax.experimental import pallas as pl
from jax.experimental.pallas import tpu as pltpu

PAD = 128    # every channel axis is zero-padded to 128 lanes (lane-dense MXU/VPU)
ALIGN = 16   # bf16 packs 16 rows per sublane tile -> keep bf16 output tiles 16-aligned
XYZ_OFF = 3  # SA feature lanes start at 3 so lanes 0..2 can hold centered xyz


# ----------------------------------------------------------------------------
# Hardware introspection (cached, with safe fallbacks)
# ----------------------------------------------------------------------------
@functools.lru_cache(maxsize=None)
def _tpu_vmem_and_cores():
    """(per-core VMEM bytes, TensorCores per chip)."""
    vmem = 64 << 20                      # conservative fallback (v7x per-TC VMEM)
    try:
        vmem = int(getattr(pltpu.get_tpu_info(), "vmem_capacity_bytes", vmem))
    except Exception:
        pass
    cores = 1
    try:
        kind = jax.devices()[0].device_kind.lower()
        if "v7" in kind or "7x" in kind:
            cores = 2                    # only v7x has 2 TCs to shard a parallel axis
    except Exception:
        pass
    return vmem, cores


def _sa_step_vmem_bytes(tg, k):
    """Live VMEM per grid step: 2x bf16 input bufs, f32+bf16 MLP intermediates,
    2x bf16 output bufs + f32 pre-cast max, 2x-buffered weights/biases."""
    act = tg * k * PAD * (2 * 2 + 4 + 2)
    out = tg * PAD * (2 * 2 + 4)
    wgt = 2 * 3 * (PAD * PAD * 2 + PAD * 4)
    return act + out + wgt


def _choose_group_tile(n_groups, k):
    """Biggest 16-aligned group tile that divides n_groups and fits the VMEM
    budget; single step on 1-TC chips, >= 2 steps on v7x when worthwhile."""
    vmem, cores = _tpu_vmem_and_cores()
    budget = vmem // 2                               # headroom for compiler scratch
    per_group = k * PAD * 10 + PAD * 8               # bytes that scale with tg
    cap = max(ALIGN, budget // per_group)
    if cores > 1 and n_groups // 2 >= 32:
        cap = min(cap, n_groups // 2)                # shard parallel axis on 2 TCs
    cap = min(cap, n_groups)
    tg = (cap // ALIGN) * ALIGN
    while tg >= ALIGN and n_groups % tg:
        tg -= ALIGN
    # Keep >=256 rows (tg*k) per step for the 256-wide MXU; if the whole group
    # axis fits the budget just run it in one step.
    if (tg < 32 or tg < ALIGN) and n_groups * per_group <= budget:
        return n_groups
    return tg if tg >= ALIGN else n_groups


def _choose_batch_tile(batch, k):
    """Batch tiling for the fused SA3+FC kernel (f32 output -> 8-aligned)."""
    if batch <= 8:
        return batch
    vmem, cores = _tpu_vmem_and_cores()
    per_b = k * PAD * 10 + PAD * 16
    cap = max(8, (vmem // 2) // per_b)
    if cores > 1 and batch // 2 >= 8:
        cap = min(cap, batch // 2)
    cap = min(cap, batch)
    tb = (cap // 8) * 8
    while tb >= 8 and batch % tb:
        tb -= 8
    return tb if tb >= 8 else batch


# ----------------------------------------------------------------------------
# Pallas kernels
# ----------------------------------------------------------------------------
def _sa_mlp_kernel(x_ref, w1_ref, b1_ref, w2_ref, b2_ref, w3_ref, b3_ref,
                   o_ref, *, k):
    """3-layer pointwise MLP (1x1 conv + folded BN + ReLU) + max-pool over K.

    x_ref : [TG*K, 128] bf16 grouped rows (lanes 0..2 centered xyz, 3.. features)
    wX    : [128, 128]  bf16 folded conv weights (last layer column-shifted by 3)
    bX    : [1, 128]    f32  folded conv biases
    o_ref : [TG, 128]   bf16 max over the K points of each group
    """
    tg, c = o_ref.shape
    h = jnp.dot(x_ref[...], w1_ref[...], preferred_element_type=jnp.float32)
    h = jnp.maximum(h + b1_ref[...], 0.0).astype(jnp.bfloat16)
    h = jnp.dot(h, w2_ref[...], preferred_element_type=jnp.float32)
    h = jnp.maximum(h + b2_ref[...], 0.0).astype(jnp.bfloat16)
    h = jnp.dot(h, w3_ref[...], preferred_element_type=jnp.float32)
    h = jnp.maximum(h + b3_ref[...], 0.0)
    # K == 8 -> the group max is a native 8-sublane reduce on (8,128) tiles.
    o_ref[...] = jnp.max(h.reshape(tg, k, c), axis=1).astype(o_ref.dtype)


def _sa3_fc_kernel(x_ref, w1_ref, b1_ref, w2_ref, b2_ref, w3_ref, b3_ref,
                   fw1_ref, fb1_ref, fw2_ref, fb2_ref, fw3_ref, fb3_ref,
                   o_ref, *, k):
    """Fused SA3 pointwise-MLP + max-pool + FC head (BN folded, dropout=eval).

    x_ref : [TB*K, 128] bf16 grouped SA3 input
    o_ref : [TB, 128]   f32  logits (zero padded past n_classes)
    """
    tb, c = o_ref.shape
    h = jnp.dot(x_ref[...], w1_ref[...], preferred_element_type=jnp.float32)
    h = jnp.maximum(h + b1_ref[...], 0.0).astype(jnp.bfloat16)
    h = jnp.dot(h, w2_ref[...], preferred_element_type=jnp.float32)
    h = jnp.maximum(h + b2_ref[...], 0.0).astype(jnp.bfloat16)
    h = jnp.dot(h, w3_ref[...], preferred_element_type=jnp.float32)
    h = jnp.maximum(h + b3_ref[...], 0.0)
    feat = jnp.max(h.reshape(tb, k, c), axis=1).astype(jnp.bfloat16)   # [TB, 128]
    # relu(bn1(fc1(.))) -> relu(bn2(fc2(.))) -> fc3(.)
    g = jnp.dot(feat, fw1_ref[...], preferred_element_type=jnp.float32)
    g = jnp.maximum(g + fb1_ref[...], 0.0).astype(jnp.bfloat16)
    g = jnp.dot(g, fw2_ref[...], preferred_element_type=jnp.float32)
    g = jnp.maximum(g + fb2_ref[...], 0.0).astype(jnp.bfloat16)
    o_ref[...] = (jnp.dot(g, fw3_ref[...], preferred_element_type=jnp.float32)
                  + fb3_ref[...])


# ----------------------------------------------------------------------------
# pallas_call wrappers
# ----------------------------------------------------------------------------
def _layer_args_and_specs(weights, biases):
    # TODO(synk): these constant blocks could use pipeline_mode=pl.Buffered(1)
    # (they never change across grid steps) to save ~0.4 MiB of double-buffer VMEM.
    args, specs = [], []
    for w, b in zip(weights, biases):
        args += [w, b]
        specs += [pl.BlockSpec((PAD, PAD), lambda i: (0, 0)),
                  pl.BlockSpec((1, PAD), lambda i: (0, 0))]
    return args, specs


def _sa_mlp_pallas(x, weights, biases, n_groups, k):
    """x: [n_groups*k, 128] bf16 -> [n_groups, 128] bf16 (MLP + max over k)."""
    vmem_cap, _ = _tpu_vmem_and_cores()
    tg = _choose_group_tile(n_groups, k)
    rows = tg * k
    layer_args, layer_specs = _layer_args_and_specs(weights, biases)
    flops = int(2 * x.shape[0] * PAD * PAD * len(weights))
    bytes_accessed = int(x.size * 2 + len(weights) * PAD * PAD * 2
                         + len(biases) * PAD * 4 + n_groups * PAD * 2)
    vmem_limit = int(min(vmem_cap,
                         max(32 << 20, _sa_step_vmem_bytes(tg, k) + (4 << 20))))
    return pl.pallas_call(
        functools.partial(_sa_mlp_kernel, k=k),
        out_shape=jax.ShapeDtypeStruct((n_groups, PAD), jnp.bfloat16),
        grid=(n_groups // tg,),
        in_specs=[pl.BlockSpec((rows, PAD), lambda i: (i, 0))] + layer_specs,
        out_specs=pl.BlockSpec((tg, PAD), lambda i: (i, 0)),
        compiler_params=pltpu.CompilerParams(
            dimension_semantics=("parallel",),
            vmem_limit_bytes=vmem_limit),
        cost_estimate=pl.CostEstimate(flops=flops, transcendentals=0,
                                      bytes_accessed=bytes_accessed),
    )(x, *layer_args)


def _sa3_fc_pallas(x, sa_w, sa_b, fc_w, fc_b, batch, k):
    """Fused SA3 MLP + max-pool + FC head.  x: [batch*k, 128] bf16 -> [batch,128] f32."""
    vmem_cap, _ = _tpu_vmem_and_cores()
    tb = _choose_batch_tile(batch, k)
    layer_args, layer_specs = _layer_args_and_specs(sa_w + fc_w, sa_b + fc_b)
    flops = int(2 * (x.shape[0] * PAD * PAD * 3 + batch * PAD * PAD * 3))
    bytes_accessed = int(x.size * 2 + 12 * PAD * PAD * 2 + 12 * PAD * 4
                         + batch * PAD * 4)
    need = tb * (k * PAD * 10 + PAD * 16) + 2 * 6 * (PAD * PAD * 2 + PAD * 4)
    vmem_limit = int(min(vmem_cap, max(32 << 20, need + (4 << 20))))
    return pl.pallas_call(
        functools.partial(_sa3_fc_kernel, k=k),
        out_shape=jax.ShapeDtypeStruct((batch, PAD), jnp.float32),
        grid=(batch // tb,),
        in_specs=[pl.BlockSpec((tb * k, PAD), lambda i: (i, 0))] + layer_specs,
        out_specs=pl.BlockSpec((tb, PAD), lambda i: (i, 0)),
        compiler_params=pltpu.CompilerParams(
            dimension_semantics=("parallel",),
            vmem_limit_bytes=vmem_limit),
        cost_estimate=pl.CostEstimate(flops=flops, transcendentals=0,
                                      bytes_accessed=bytes_accessed),
    )(x, *layer_args)


# ----------------------------------------------------------------------------
# Host-side layout helpers (padding / bf16 casts live in the XLA wrapper)
# ----------------------------------------------------------------------------
def _pad_last(a, to=PAD):
    p = to - a.shape[-1]
    if p <= 0:
        return a
    return jnp.pad(a, [(0, 0)] * (a.ndim - 1) + [(0, p)])


def _pad_params(folded_params, last_col_offset=0):
    """Zero-pad folded (W,b) pairs to 128x128 / 1x128.  The last layer's output
    columns are optionally shifted so its features land at lanes 3..3+c_out,
    leaving lanes 0..2 free for the next stage's centered xyz."""
    ws, bs = [], []
    n = len(folded_params)
    for li, (w, b) in enumerate(folded_params):
        off = last_col_offset if li == n - 1 else 0
        cin, cout = w.shape
        wp = jnp.zeros((PAD, PAD), jnp.float32).at[:cin, off:off + cout].set(w)
        bp = jnp.zeros((1, PAD), jnp.float32).at[:, off:off + cout].set(b)
        ws.append(wp.astype(jnp.bfloat16))
        bs.append(bp)
    return ws, bs


# ----------------------------------------------------------------------------
# Plain-JAX glue: sampling / grouping (data-dependent gathers)
# ----------------------------------------------------------------------------
def farthest_point_sample(xyz, n_samples):
    """xyz: [B, N, 3] -> indices [B, n_samples] (deterministic start at index 0)."""
    # TODO(synk): torch impl starts from a random index; deterministic start here.
    B, N, _ = xyz.shape
    barange = jnp.arange(B)

    def body(i, state):
        dists, farthest, idxs = state
        idxs = idxs.at[:, i].set(farthest)
        centroid = xyz[barange, farthest][:, None, :]             # [B,1,3]
        d = jnp.sum((xyz - centroid) ** 2, axis=-1)               # [B,N]
        dists = jnp.minimum(dists, d)
        farthest = jnp.argmax(dists, axis=-1).astype(jnp.int32)
        return dists, farthest, idxs

    dists = jnp.full((B, N), 1e10, jnp.float32)
    farthest = jnp.zeros((B,), jnp.int32)
    idxs = jnp.zeros((B, n_samples), jnp.int32)
    _, _, idxs = jax.lax.fori_loop(0, n_samples, body, (dists, farthest, idxs))
    return idxs


def query_ball_point(radius, k, xyz, new_xyz):
    """xyz: [B,N,3], new_xyz: [B,S,3] -> group indices [B,S,K]."""
    B, N, _ = xyz.shape
    S = new_xyz.shape[1]
    sqrdists = jnp.sum((new_xyz[:, :, None, :] - xyz[:, None, :, :]) ** 2, axis=-1)
    group_idx = jnp.broadcast_to(jnp.arange(N, dtype=jnp.int32), (B, S, N))
    group_idx = jnp.where(sqrdists > radius ** 2, N, group_idx)
    # k smallest indices (== first k within radius, ascending) via top_k, not sort.
    neg_topk, _ = jax.lax.top_k(-group_idx, k)
    group_idx = -neg_topk
    # Centroids are drawn from xyz, so at least the centroid itself is in-radius
    # and group_first is always a valid index.
    group_first = jnp.broadcast_to(group_idx[:, :, 0:1], group_idx.shape)
    group_idx = jnp.where(group_idx == N, group_first, group_idx)
    return group_idx


def index_points(points, idx):
    """points: [B,N,C], idx: [B,S,K] -> [B,S,K,C]."""
    B = points.shape[0]
    return points[jnp.arange(B)[:, None, None], idx]


def _sample_and_group(xyz, feat128, n_samples, radius, k):
    """Sample centroids, ball-group, and build the kernel-ready [G*K, 128] slab.

    feat128 is the previous SA stage's padded bf16 output [B, N, 128] with
    features already at lanes 3.. and lanes 0..2 zero (or None for SA1)."""
    B = xyz.shape[0]
    fps_idx = farthest_point_sample(xyz, n_samples)
    new_xyz = xyz[jnp.arange(B)[:, None], fps_idx]                 # [B,S,3]
    idx = query_ball_point(radius, k, xyz, new_xyz)                # [B,S,K]
    grouped_xyz = (index_points(xyz, idx)
                   - new_xyz[:, :, None, :]).astype(jnp.bfloat16)  # [B,S,K,3]
    if feat128 is None:
        grouped = _pad_last(grouped_xyz)                           # [B,S,K,128]
    else:
        grouped = index_points(feat128, idx)                       # [B,S,K,128] bf16
        grouped = grouped.at[..., :XYZ_OFF].set(grouped_xyz)       # xyz -> lanes 0..2
    return new_xyz, grouped.reshape(B * n_samples * k, PAD)


def set_abstraction(xyz, feat128, n_samples, radius, k, folded_params):
    """PointNet2SetAbstraction forward (sample -> group -> MLP -> max-pool).

    Returns (new_xyz [B,S,3] f32, features [B,S,128] bf16 with c_out feature
    channels at lanes 3..3+c_out and lanes 0..2 zero)."""
    B = xyz.shape[0]
    new_xyz, x = _sample_and_group(xyz, feat128, n_samples, radius, k)
    ws, bs = _pad_params(folded_params, last_col_offset=XYZ_OFF)
    out = _sa_mlp_pallas(x, ws, bs, B * n_samples, k)              # [B*S, 128] bf16
    return new_xyz, out.reshape(B, n_samples, PAD)


# ----------------------------------------------------------------------------
# Deterministic parameter init + BatchNorm folding
# ----------------------------------------------------------------------------
def _fold_bn(W, b, gamma, beta, mean, var, eps=1e-5):
    scale = gamma / jnp.sqrt(var + eps)
    return W * scale, (b - mean) * scale + beta


def _make_layer(key, cin, cout):
    """One (conv/linear + BatchNorm) layer, BN folded in (eval-mode running stats)."""
    ks = jax.random.split(key, 6)
    W = 0.1 * jax.random.normal(ks[0], (cin, cout), jnp.float32)
    b = 0.1 * jax.random.normal(ks[1], (1, cout), jnp.float32)
    gamma = 1.0 + 0.1 * jax.random.normal(ks[2], (1, cout), jnp.float32)
    beta = 0.1 * jax.random.normal(ks[3], (1, cout), jnp.float32)
    mean = 0.1 * jax.random.normal(ks[4], (1, cout), jnp.float32)
    var = 1.0 + 0.1 * jnp.abs(jax.random.normal(ks[5], (1, cout), jnp.float32))
    return _fold_bn(W, b, gamma, beta, mean, var)


def init_params(key, n_classes=10):
    keys = jax.random.split(key, 16)

    def mlp3(k0, cin, chans):
        layers, c = [], cin
        for i, co in enumerate(chans):
            layers.append(_make_layer(keys[k0 + i], c, co))
            c = co
        return tuple(layers)

    params = {
        "sa1": mlp3(0, 3, [16, 16, 32]),           # in_channels = 3
        "sa2": mlp3(3, 3 + 32, [32, 32, 64]),      # 3 + sa1.out_channels()
        "sa3": mlp3(6, 3 + 64, [64, 64, 128]),     # 3 + sa2.out_channels()
    }
    fc1 = _make_layer(keys[9], 128, 64)            # fc1 + bn1 (folded)
    fc2 = _make_layer(keys[10], 64, 32)            # fc2 + bn2 (folded)
    kf = jax.random.split(keys[11], 2)
    fc3 = (0.1 * jax.random.normal(kf[0], (32, n_classes), jnp.float32),
           0.1 * jax.random.normal(kf[1], (1, n_classes), jnp.float32))
    params["fc"] = (fc1, fc2, fc3)
    return params


# ----------------------------------------------------------------------------
# Full model forward (PointNet2Cls.forward equivalent, inference path)
# ----------------------------------------------------------------------------
def pointnet2_cls_forward(inputs, params):
    """inputs: [B, 3, N] -> logits [B, n_classes]."""
    B = inputs.shape[0]
    xyz = jnp.transpose(inputs, (0, 2, 1))                         # [B, N, 3]
    l1_xyz, l1_feat = set_abstraction(xyz, None, n_samples=16, radius=0.4, k=8,
                                      folded_params=params["sa1"])
    l2_xyz, l2_feat = set_abstraction(l1_xyz, l1_feat, n_samples=8, radius=0.8, k=8,
                                      folded_params=params["sa2"])
    # SA3 (n_samples=1, wide radius) is fused with the FC head into one kernel.
    _, x3 = _sample_and_group(l2_xyz, l2_feat, n_samples=1, radius=1000.0, k=8)
    sa_w, sa_b = _pad_params(params["sa3"])        # feeds FC directly: no lane shift
    fc_w, fc_b = _pad_params(params["fc"])
    n_classes = params["fc"][-1][0].shape[1]
    # TODO(synk): F.dropout(p=0.5, training=True) randomness not replicated;
    # eval/inference path (identity) is implemented.
    logits = _sa3_fc_pallas(x3, sa_w, sa_b, fc_w, fc_b, B, 8)      # [B, 128] f32
    return logits[:, :n_classes]


if __name__ == "__main__":
    key = jax.random.PRNGKey(0)
    k_in, k_par = jax.random.split(key)
    B, N, n_classes = 2, 64, 10
    inputs = jax.random.uniform(k_in, (B, 3, N), jnp.float32, minval=-1.0, maxval=1.0)
    params = init_params(k_par, n_classes=n_classes)

    out = jax.jit(pointnet2_cls_forward)(inputs, params)
    out = jax.block_until_ready(out)
    assert out.shape == (B, n_classes), out.shape
    assert bool(jnp.all(jnp.isfinite(out)))
    print("KERNEL_OK")
</pallas_src>

<mosaic_0001>
module attributes {stable_mosaic.version = 11 : i64} {
  func.func @_sa_mlp_kernel(%arg0: i32, %arg1: memref<256x128xbf16, #tpu.memory_space<vmem>>, %arg2: memref<128x128xbf16, #tpu.memory_space<vmem>>, %arg3: memref<1x128xf32, #tpu.memory_space<vmem>>, %arg4: memref<128x128xbf16, #tpu.memory_space<vmem>>, %arg5: memref<1x128xf32, #tpu.memory_space<vmem>>, %arg6: memref<128x128xbf16, #tpu.memory_space<vmem>>, %arg7: memref<1x128xf32, #tpu.memory_space<vmem>>, %arg8: memref<32x128xbf16, #tpu.memory_space<vmem>>) attributes {dimension_semantics = [#tpu.dimension_semantics<parallel>], iteration_bounds = array<i64: 1>, scalar_prefetch = 0 : i64, scratch_operands = 0 : i64, tpu.core_type = #tpu.core_type<tc>, window_params = [{transform_indices = @transform_0, window_bounds = array<i64: 256, 128>}, {pipeline_mode = #tpu.pipeline_mode<synchronous>, transform_indices = @transform_1, window_bounds = array<i64: 128, 128>}, {pipeline_mode = #tpu.pipeline_mode<synchronous>, transform_indices = @transform_2, window_bounds = array<i64: 1, 128>}, {pipeline_mode = #tpu.pipeline_mode<synchronous>, transform_indices = @transform_3, window_bounds = array<i64: 128, 128>}, {pipeline_mode = #tpu.pipeline_mode<synchronous>, transform_indices = @transform_4, window_bounds = array<i64: 1, 128>}, {pipeline_mode = #tpu.pipeline_mode<synchronous>, transform_indices = @transform_5, window_bounds = array<i64: 128, 128>}, {pipeline_mode = #tpu.pipeline_mode<synchronous>, transform_indices = @transform_6, window_bounds = array<i64: 1, 128>}, {transform_indices = @transform_7, window_bounds = array<i64: 32, 128>}]} {
    %c0 = arith.constant 0 : index
    %c0_0 = arith.constant 0 : index
    %0 = vector.load %arg1[%c0, %c0_0] : memref<256x128xbf16, #tpu.memory_space<vmem>>, vector<256x128xbf16>
    %c0_1 = arith.constant 0 : index
    %c0_2 = arith.constant 0 : index
    %1 = vector.load %arg2[%c0_1, %c0_2] : memref<128x128xbf16, #tpu.memory_space<vmem>>, vector<128x128xbf16>
    %cst = arith.constant dense<0.000000e+00> : vector<256x128xf32>
    %2 = tpu.matmul %0, %1, %cst {dimension_numbers = #tpu.dot_dimension_numbers<[1], [0], [0], [1], [0, 0, 1, 1], [], []>} : vector<256x128xbf16>, vector<128x128xbf16>, vector<256x128xf32> -> vector<256x128xf32>
    %c0_3 = arith.constant 0 : index
    %c0_4 = arith.constant 0 : index
    %3 = vector.load %arg3[%c0_3, %c0_4] : memref<1x128xf32, #tpu.memory_space<vmem>>, vector<1x128xf32>
    %4 = vector.broadcast %3 : vector<1x128xf32> to vector<256x128xf32>
    %5 = arith.addf %2, %4 : vector<256x128xf32>
    %cst_5 = arith.constant 0.000000e+00 : f32
    %6 = vector.broadcast %cst_5 : f32 to vector<256x128xf32>
    %7 = arith.maximumf %5, %6 : vector<256x128xf32>
    %8 = arith.truncf %7 : vector<256x128xf32> to vector<256x128xbf16>
    %c0_6 = arith.constant 0 : index
    %c0_7 = arith.constant 0 : index
    %9 = vector.load %arg4[%c0_6, %c0_7] : memref<128x128xbf16, #tpu.memory_space<vmem>>, vector<128x128xbf16>
    %cst_8 = arith.constant dense<0.000000e+00> : vector<256x128xf32>
    %10 = tpu.matmul %8, %9, %cst_8 {dimension_numbers = #tpu.dot_dimension_numbers<[1], [0], [0], [1], [0, 0, 1, 1], [], []>} : vector<256x128xbf16>, vector<128x128xbf16>, vector<256x128xf32> -> vector<256x128xf32>
    %c0_9 = arith.constant 0 : index
    %c0_10 = arith.constant 0 : index
    %11 = vector.load %arg5[%c0_9, %c0_10] : memref<1x128xf32, #tpu.memory_space<vmem>>, vector<1x128xf32>
    %12 = vector.broadcast %11 : vector<1x128xf32> to vector<256x128xf32>
    %13 = arith.addf %10, %12 : vector<256x128xf32>
    %cst_11 = arith.constant 0.000000e+00 : f32
    %14 = vector.broadcast %cst_11 : f32 to vector<256x128xf32>
    %15 = arith.maximumf %13, %14 : vector<256x128xf32>
    %16 = arith.truncf %15 : vector<256x128xf32> to vector<256x128xbf16>
    %c0_12 = arith.constant 0 : index
    %c0_13 = arith.constant 0 : index
    %17 = vector.load %arg6[%c0_12, %c0_13] : memref<128x128xbf16, #tpu.memory_space<vmem>>, vector<128x128xbf16>
    %cst_14 = arith.constant dense<0.000000e+00> : vector<256x128xf32>
    %18 = tpu.matmul %16, %17, %cst_14 {dimension_numbers = #tpu.dot_dimension_numbers<[1], [0], [0], [1], [0, 0, 1, 1], [], []>} : vector<256x128xbf16>, vector<128x128xbf16>, vector<256x128xf32> -> vector<256x128xf32>
    %c0_15 = arith.constant 0 : index
    %c0_16 = arith.constant 0 : index
    %19 = vector.load %arg7[%c0_15, %c0_16] : memref<1x128xf32, #tpu.memory_space<vmem>>, vector<1x128xf32>
    %20 = vector.broadcast %19 : vector<1x128xf32> to vector<256x128xf32>
    %21 = arith.addf %18, %20 : vector<256x128xf32>
    %cst_17 = arith.constant 0.000000e+00 : f32
    %22 = vector.broadcast %cst_17 : f32 to vector<256x128xf32>
    %23 = arith.maximumf %21, %22 : vector<256x128xf32>
    %24 = vector.shape_cast %23 : vector<256x128xf32> to vector<32x8x128xf32>
    %cst_18 = arith.constant dense<0xFF800000> : vector<32x128xf32>
    %25 = vector.multi_reduction <maximumf>, %24, %cst_18 [1] : vector<32x8x128xf32> to vector<32x128xf32>
    %26 = arith.truncf %25 : vector<32x128xf32> to vector<32x128xbf16>
    %c0_19 = arith.constant 0 : index
    %c0_20 = arith.constant 0 : index
    %27 = vector.load %arg8[%c0_19, %c0_20] : memref<32x128xbf16, #tpu.memory_space<vmem>>, vector<32x128xbf16>
    tpu.vector_store %arg8[%c0_19, %c0_20], %26 {strides = array<i32>} : memref<32x128xbf16, #tpu.memory_space<vmem>>, vector<32x128xbf16>,
    return
  }
  func.func @transform_0(%arg0: i32) -> (i32, i32) {
    %c0_i32 = arith.constant 0 : i32
    %c0_i32_0 = arith.constant 0 : i32
    return %arg0, %c0_i32 : i32, i32
  }
  func.func @transform_1(%arg0: i32) -> (i32, i32) {
    %c0_i32 = arith.constant 0 : i32
    %c0_i32_0 = arith.constant 0 : i32
    %c0_i32_1 = arith.constant 0 : i32
    return %c0_i32, %c0_i32_0 : i32, i32
  }
  func.func @transform_2(%arg0: i32) -> (i32, i32) {
    %c0_i32 = arith.constant 0 : i32
    %c0_i32_0 = arith.constant 0 : i32
    %c0_i32_1 = arith.constant 0 : i32
    return %c0_i32, %c0_i32_0 : i32, i32
  }
  func.func @transform_3(%arg0: i32) -> (i32, i32) {
    %c0_i32 = arith.constant 0 : i32
    %c0_i32_0 = arith.constant 0 : i32
    %c0_i32_1 = arith.constant 0 : i32
    return %c0_i32, %c0_i32_0 : i32, i32
  }
  func.func @transform_4(%arg0: i32) -> (i32, i32) {
    %c0_i32 = arith.constant 0 : i32
    %c0_i32_0 = arith.constant 0 : i32
    %c0_i32_1 = arith.constant 0 : i32
    return %c0_i32, %c0_i32_0 : i32, i32
  }
  func.func @transform_5(%arg0: i32) -> (i32, i32) {
    %c0_i32 = arith.constant 0 : i32
    %c0_i32_0 = arith.constant 0 : i32
    %c0_i32_1 = arith.constant 0 : i32
    return %c0_i32, %c0_i32_0 : i32, i32
  }
  func.func @transform_6(%arg0: i32) -> (i32, i32) {
    %c0_i32 = arith.constant 0 : i32
    %c0_i32_0 = arith.constant 0 : i32
    %c0_i32_1 = arith.constant 0 : i32
    return %c0_i32, %c0_i32_0 : i32, i32
  }
  func.func @transform_7(%arg0: i32) -> (i32, i32) {
    %c0_i32 = arith.constant 0 : i32
    %c0_i32_0 = arith.constant 0 : i32
    return %arg0, %c0_i32 : i32, i32
  }
}

module attributes {stable_mosaic.version = 11 : i64} {
  func.func @_sa_mlp_kernel(%arg0: i32, %arg1: memref<128x128xbf16, #tpu.memory_space<vmem>>, %arg2: memref<128x128xbf16, #tpu.memory_space<vmem>>, %arg3: memref<1x128xf32, #tpu.memory_space<vmem>>, %arg4: memref<128x128xbf16, #tpu.memory_space<vmem>>, %arg5: memref<1x128xf32, #tpu.memory_space<vmem>>, %arg6: memref<128x128xbf16, #tpu.memory_space<vmem>>, %arg7: memref<1x128xf32, #tpu.memory_space<vmem>>, %arg8: memref<16x128xbf16, #tpu.memory_space<vmem>>) attributes {dimension_semantics = [#tpu.dimension_semantics<parallel>], iteration_bounds = array<i64: 1>, scalar_prefetch = 0 : i64, scratch_operands = 0 : i64, tpu.core_type = #tpu.core_type<tc>, window_params = [{transform_indices = @transform_0, window_bounds = array<i64: 128, 128>}, {pipeline_mode = #tpu.pipeline_mode<synchronous>, transform_indices = @transform_1, window_bounds = array<i64: 128, 128>}, {pipeline_mode = #tpu.pipeline_mode<synchronous>, transform_indices = @transform_2, window_bounds = array<i64: 1, 128>}, {pipeline_mode = #tpu.pipeline_mode<synchronous>, transform_indices = @transform_3, window_bounds = array<i64: 128, 128>}, {pipeline_mode = #tpu.pipeline_mode<synchronous>, transform_indices = @transform_4, window_bounds = array<i64: 1, 128>}, {pipeline_mode = #tpu.pipeline_mode<synchronous>, transform_indices = @transform_5, window_bounds = array<i64: 128, 128>}, {pipeline_mode = #tpu.pipeline_mode<synchronous>, transform_indices = @transform_6, window_bounds = array<i64: 1, 128>}, {transform_indices = @transform_7, window_bounds = array<i64: 16, 128>}]} {
    %c0 = arith.constant 0 : index
    %c0_0 = arith.constant 0 : index
    %0 = vector.load %arg1[%c0, %c0_0] : memref<128x128xbf16, #tpu.memory_space<vmem>>, vector<128x128xbf16>
    %c0_1 = arith.constant 0 : index
    %c0_2 = arith.constant 0 : index
    %1 = vector.load %arg2[%c0_1, %c0_2] : memref<128x128xbf16, #tpu.memory_space<vmem>>, vector<128x128xbf16>
    %cst = arith.constant dense<0.000000e+00> : vector<128x128xf32>
    %2 = tpu.matmul %0, %1, %cst {dimension_numbers = #tpu.dot_dimension_numbers<[1], [0], [0], [1], [0, 0, 1, 1], [], []>} : vector<128x128xbf16>, vector<128x128xbf16>, vector<128x128xf32> -> vector<128x128xf32>
    %c0_3 = arith.constant 0 : index
    %c0_4 = arith.constant 0 : index
    %3 = vector.load %arg3[%c0_3, %c0_4] : memref<1x128xf32, #tpu.memory_space<vmem>>, vector<1x128xf32>
    %4 = vector.broadcast %3 : vector<1x128xf32> to vector<128x128xf32>
    %5 = arith.addf %2, %4 : vector<128x128xf32>
    %cst_5 = arith.constant 0.000000e+00 : f32
    %6 = vector.broadcast %cst_5 : f32 to vector<128x128xf32>
    %7 = arith.maximumf %5, %6 : vector<128x128xf32>
    %8 = arith.truncf %7 : vector<128x128xf32> to vector<128x128xbf16>
    %c0_6 = arith.constant 0 : index
    %c0_7 = arith.constant 0 : index
    %9 = vector.load %arg4[%c0_6, %c0_7] : memref<128x128xbf16, #tpu.memory_space<vmem>>, vector<128x128xbf16>
    %cst_8 = arith.constant dense<0.000000e+00> : vector<128x128xf32>
    %10 = tpu.matmul %8, %9, %cst_8 {dimension_numbers = #tpu.dot_dimension_numbers<[1], [0], [0], [1], [0, 0, 1, 1], [], []>} : vector<128x128xbf16>, vector<128x128xbf16>, vector<128x128xf32> -> vector<128x128xf32>
    %c0_9 = arith.constant 0 : index
    %c0_10 = arith.constant 0 : index
    %11 = vector.load %arg5[%c0_9, %c0_10] : memref<1x128xf32, #tpu.memory_space<vmem>>, vector<1x128xf32>
    %12 = vector.broadcast %11 : vector<1x128xf32> to vector<128x128xf32>
    %13 = arith.addf %10, %12 : vector<128x128xf32>
    %cst_11 = arith.constant 0.000000e+00 : f32
    %14 = vector.broadcast %cst_11 : f32 to vector<128x128xf32>
    %15 = arith.maximumf %13, %14 : vector<128x128xf32>
    %16 = arith.truncf %15 : vector<128x128xf32> to vector<128x128xbf16>
    %c0_12 = arith.constant 0 : index
    %c0_13 = arith.constant 0 : index
    %17 = vector.load %arg6[%c0_12, %c0_13] : memref<128x128xbf16, #tpu.memory_space<vmem>>, vector<128x128xbf16>
    %cst_14 = arith.constant dense<0.000000e+00> : vector<128x128xf32>
    %18 = tpu.matmul %16, %17, %cst_14 {dimension_numbers = #tpu.dot_dimension_numbers<[1], [0], [0], [1], [0, 0, 1, 1], [], []>} : vector<128x128xbf16>, vector<128x128xbf16>, vector<128x128xf32> -> vector<128x128xf32>
    %c0_15 = arith.constant 0 : index
    %c0_16 = arith.constant 0 : index
    %19 = vector.load %arg7[%c0_15, %c0_16] : memref<1x128xf32, #tpu.memory_space<vmem>>, vector<1x128xf32>
    %20 = vector.broadcast %19 : vector<1x128xf32> to vector<128x128xf32>
    %21 = arith.addf %18, %20 : vector<128x128xf32>
    %cst_17 = arith.constant 0.000000e+00 : f32
    %22 = vector.broadcast %cst_17 : f32 to vector<128x128xf32>
    %23 = arith.maximumf %21, %22 : vector<128x128xf32>
    %24 = vector.shape_cast %23 : vector<128x128xf32> to vector<16x8x128xf32>
    %cst_18 = arith.constant dense<0xFF800000> : vector<16x128xf32>
    %25 = vector.multi_reduction <maximumf>, %24, %cst_18 [1] : vector<16x8x128xf32> to vector<16x128xf32>
    %26 = arith.truncf %25 : vector<16x128xf32> to vector<16x128xbf16>
    %c0_19 = arith.constant 0 : index
    %c0_20 = arith.constant 0 : index
    %27 = vector.load %arg8[%c0_19, %c0_20] : memref<16x128xbf16, #tpu.memory_space<vmem>>, vector<16x128xbf16>
    tpu.vector_store %arg8[%c0_19, %c0_20], %26 {strides = array<i32>} : memref<16x128xbf16, #tpu.memory_space<vmem>>, vector<16x128xbf16>,
    return
  }
  func.func @transform_0(%arg0: i32) -> (i32, i32) {
    %c0_i32 = arith.constant 0 : i32
    %c0_i32_0 = arith.constant 0 : i32
    return %arg0, %c0_i32 : i32, i32
  }
  func.func @transform_1(%arg0: i32) -> (i32, i32) {
    %c0_i32 = arith.constant 0 : i32
    %c0_i32_0 = arith.constant 0 : i32
    %c0_i32_1 = arith.constant 0 : i32
    return %c0_i32, %c0_i32_0 : i32, i32
  }
  func.func @transform_2(%arg0: i32) -> (i32, i32) {
    %c0_i32 = arith.constant 0 : i32
    %c0_i32_0 = arith.constant 0 : i32
    %c0_i32_1 = arith.constant 0 : i32
    return %c0_i32, %c0_i32_0 : i32, i32
  }
  func.func @transform_3(%arg0: i32) -> (i32, i32) {
    %c0_i32 = arith.constant 0 : i32
    %c0_i32_0 = arith.constant 0 : i32
    %c0_i32_1 = arith.constant 0 : i32
    return %c0_i32, %c0_i32_0 : i32, i32
  }
  func.func @transform_4(%arg0: i32) -> (i32, i32) {
    %c0_i32 = arith.constant 0 : i32
    %c0_i32_0 = arith.constant 0 : i32
    %c0_i32_1 = arith.constant 0 : i32
    return %c0_i32, %c0_i32_0 : i32, i32
  }
  func.func @transform_5(%arg0: i32) -> (i32, i32) {
    %c0_i32 = arith.constant 0 : i32
    %c0_i32_0 = arith.constant 0 : i32
    %c0_i32_1 = arith.constant 0 : i32
    return %c0_i32, %c0_i32_0 : i32, i32
  }
  func.func @transform_6(%arg0: i32) -> (i32, i32) {
    %c0_i32 = arith.constant 0 : i32
    %c0_i32_0 = arith.constant 0 : i32
    %c0_i32_1 = arith.constant 0 : i32
    return %c0_i32, %c0_i32_0 : i32, i32
  }
  func.func @transform_7(%arg0: i32) -> (i32, i32) {
    %c0_i32 = arith.constant 0 : i32
    %c0_i32_0 = arith.constant 0 : i32
    return %arg0, %c0_i32 : i32, i32
  }
}

module attributes {stable_mosaic.version = 11 : i64} {
  func.func @_sa3_fc_kernel(%arg0: i32, %arg1: memref<16x128xbf16, #tpu.memory_space<vmem>>, %arg2: memref<128x128xbf16, #tpu.memory_space<vmem>>, %arg3: memref<1x128xf32, #tpu.memory_space<vmem>>, %arg4: memref<128x128xbf16, #tpu.memory_space<vmem>>, %arg5: memref<1x128xf32, #tpu.memory_space<vmem>>, %arg6: memref<128x128xbf16, #tpu.memory_space<vmem>>, %arg7: memref<1x128xf32, #tpu.memory_space<vmem>>, %arg8: memref<128x128xbf16, #tpu.memory_space<vmem>>, %arg9: memref<1x128xf32, #tpu.memory_space<vmem>>, %arg10: memref<128x128xbf16, #tpu.memory_space<vmem>>, %arg11: memref<1x128xf32, #tpu.memory_space<vmem>>, %arg12: memref<128x128xbf16, #tpu.memory_space<vmem>>, %arg13: memref<1x128xf32, #tpu.memory_space<vmem>>, %arg14: memref<2x128xf32, #tpu.memory_space<vmem>>) attributes {dimension_semantics = [#tpu.dimension_semantics<parallel>], iteration_bounds = array<i64: 1>, scalar_prefetch = 0 : i64, scratch_operands = 0 : i64, tpu.core_type = #tpu.core_type<tc>, window_params = [{transform_indices = @transform_0, window_bounds = array<i64: 16, 128>}, {pipeline_mode = #tpu.pipeline_mode<synchronous>, transform_indices = @transform_1, window_bounds = array<i64: 128, 128>}, {pipeline_mode = #tpu.pipeline_mode<synchronous>, transform_indices = @transform_2, window_bounds = array<i64: 1, 128>}, {pipeline_mode = #tpu.pipeline_mode<synchronous>, transform_indices = @transform_3, window_bounds = array<i64: 128, 128>}, {pipeline_mode = #tpu.pipeline_mode<synchronous>, transform_indices = @transform_4, window_bounds = array<i64: 1, 128>}, {pipeline_mode = #tpu.pipeline_mode<synchronous>, transform_indices = @transform_5, window_bounds = array<i64: 128, 128>}, {pipeline_mode = #tpu.pipeline_mode<synchronous>, transform_indices = @transform_6, window_bounds = array<i64: 1, 128>}, {pipeline_mode = #tpu.pipeline_mode<synchronous>, transform_indices = @transform_7, window_bounds = array<i64: 128, 128>}, {pipeline_mode = #tpu.pipeline_mode<synchronous>, transform_indices = @transform_8, window_bounds = array<i64: 1, 128>}, {pipeline_mode = #tpu.pipeline_mode<synchronous>, transform_indices = @transform_9, window_bounds = array<i64: 128, 128>}, {pipeline_mode = #tpu.pipeline_mode<synchronous>, transform_indices = @transform_10, window_bounds = array<i64: 1, 128>}, {pipeline_mode = #tpu.pipeline_mode<synchronous>, transform_indices = @transform_11, window_bounds = array<i64: 128, 128>}, {pipeline_mode = #tpu.pipeline_mode<synchronous>, transform_indices = @transform_12, window_bounds = array<i64: 1, 128>}, {transform_indices = @transform_13, window_bounds = array<i64: 2, 128>}]} {
    %c0 = arith.constant 0 : index
    %c0_0 = arith.constant 0 : index
    %0 = vector.load %arg1[%c0, %c0_0] : memref<16x128xbf16, #tpu.memory_space<vmem>>, vector<16x128xbf16>
    %c0_1 = arith.constant 0 : index
    %c0_2 = arith.constant 0 : index
    %1 = vector.load %arg2[%c0_1, %c0_2] : memref<128x128xbf16, #tpu.memory_space<vmem>>, vector<128x128xbf16>
    %cst = arith.constant dense<0.000000e+00> : vector<16x128xf32>
    %2 = tpu.matmul %0, %1, %cst {dimension_numbers = #tpu.dot_dimension_numbers<[1], [0], [0], [1], [0, 0, 1, 1], [], []>} : vector<16x128xbf16>, vector<128x128xbf16>, vector<16x128xf32> -> vector<16x128xf32>
    %c0_3 = arith.constant 0 : index
    %c0_4 = arith.constant 0 : index
    %3 = vector.load %arg3[%c0_3, %c0_4] : memref<1x128xf32, #tpu.memory_space<vmem>>, vector<1x128xf32>
    %4 = vector.broadcast %3 : vector<1x128xf32> to vector<16x128xf32>
    %5 = arith.addf %2, %4 : vector<16x128xf32>
    %cst_5 = arith.constant 0.000000e+00 : f32
    %6 = vector.broadcast %cst_5 : f32 to vector<16x128xf32>
    %7 = arith.maximumf %5, %6 : vector<16x128xf32>
    %8 = arith.truncf %7 : vector<16x128xf32> to vector<16x128xbf16>
    %c0_6 = arith.constant 0 : index
    %c0_7 = arith.constant 0 : index
    %9 = vector.load %arg4[%c0_6, %c0_7] : memref<128x128xbf16, #tpu.memory_space<vmem>>, vector<128x128xbf16>
    %cst_8 = arith.constant dense<0.000000e+00> : vector<16x128xf32>
    %10 = tpu.matmul %8, %9, %cst_8 {dimension_numbers = #tpu.dot_dimension_numbers<[1], [0], [0], [1], [0, 0, 1, 1], [], []>} : vector<16x128xbf16>, vector<128x128xbf16>, vector<16x128xf32> -> vector<16x128xf32>
    %c0_9 = arith.constant 0 : index
    %c0_10 = arith.constant 0 : index
    %11 = vector.load %arg5[%c0_9, %c0_10] : memref<1x128xf32, #tpu.memory_space<vmem>>, vector<1x128xf32>
    %12 = vector.broadcast %11 : vector<1x128xf32> to vector<16x128xf32>
    %13 = arith.addf %10, %12 : vector<16x128xf32>
    %cst_11 = arith.constant 0.000000e+00 : f32
    %14 = vector.broadcast %cst_11 : f32 to vector<16x128xf32>
    %15 = arith.maximumf %13, %14 : vector<16x128xf32>
    %16 = arith.truncf %15 : vector<16x128xf32> to vector<16x128xbf16>
    %c0_12 = arith.constant 0 : index
    %c0_13 = arith.constant 0 : index
    %17 = vector.load %arg6[%c0_12, %c0_13] : memref<128x128xbf16, #tpu.memory_space<vmem>>, vector<128x128xbf16>
    %cst_14 = arith.constant dense<0.000000e+00> : vector<16x128xf32>
    %18 = tpu.matmul %16, %17, %cst_14 {dimension_numbers = #tpu.dot_dimension_numbers<[1], [0], [0], [1], [0, 0, 1, 1], [], []>} : vector<16x128xbf16>, vector<128x128xbf16>, vector<16x128xf32> -> vector<16x128xf32>
    %c0_15 = arith.constant 0 : index
    %c0_16 = arith.constant 0 : index
    %19 = vector.load %arg7[%c0_15, %c0_16] : memref<1x128xf32, #tpu.memory_space<vmem>>, vector<1x128xf32>
    %20 = vector.broadcast %19 : vector<1x128xf32> to vector<16x128xf32>
    %21 = arith.addf %18, %20 : vector<16x128xf32>
    %cst_17 = arith.constant 0.000000e+00 : f32
    %22 = vector.broadcast %cst_17 : f32 to vector<16x128xf32>
    %23 = arith.maximumf %21, %22 : vector<16x128xf32>
    %24 = vector.shape_cast %23 : vector<16x128xf32> to vector<2x8x128xf32>
    %cst_18 = arith.constant dense<0xFF800000> : vector<2x128xf32>
    %25 = vector.multi_reduction <maximumf>, %24, %cst_18 [1] : vector<2x8x128xf32> to vector<2x128xf32>
    %26 = arith.truncf %25 : vector<2x128xf32> to vector<2x128xbf16>
    %c0_19 = arith.constant 0 : index
    %c0_20 = arith.constant 0 : index
    %27 = vector.load %arg8[%c0_19, %c0_20] : memref<128x128xbf16, #tpu.memory_space<vmem>>, vector<128x128xbf16>
    %cst_21 = arith.constant dense<0.000000e+00> : vector<2x128xf32>
    %28 = tpu.matmul %26, %27, %cst_21 {dimension_numbers = #tpu.dot_dimension_numbers<[1], [0], [0], [1], [0, 0, 1, 1], [], []>} : vector<2x128xbf16>, vector<128x128xbf16>, vector<2x128xf32> -> vector<2x128xf32>
    %c0_22 = arith.constant 0 : index
    %c0_23 = arith.constant 0 : index
    %29 = vector.load %arg9[%c0_22, %c0_23] : memref<1x128xf32, #tpu.memory_space<vmem>>, vector<1x128xf32>
    %30 = vector.broadcast %29 : vector<1x128xf32> to vector<2x128xf32>
    %31 = arith.addf %28, %30 : vector<2x128xf32>
    %cst_24 = arith.constant 0.000000e+00 : f32
    %32 = vector.broadcast %cst_24 : f32 to vector<2x128xf32>
    %33 = arith.maximumf %31, %32 : vector<2x128xf32>
    %34 = arith.truncf %33 : vector<2x128xf32> to vector<2x128xbf16>
    %c0_25 = arith.constant 0 : index
    %c0_26 = arith.constant 0 : index
    %35 = vector.load %arg10[%c0_25, %c0_26] : memref<128x128xbf16, #tpu.memory_space<vmem>>, vector<128x128xbf16>
    %cst_27 = arith.constant dense<0.000000e+00> : vector<2x128xf32>
    %36 = tpu.matmul %34, %35, %cst_27 {dimension_numbers = #tpu.dot_dimension_numbers<[1], [0], [0], [1], [0, 0, 1, 1], [], []>} : vector<2x128xbf16>, vector<128x128xbf16>, vector<2x128xf32> -> vector<2x128xf32>
    %c0_28 = arith.constant 0 : index
    %c0_29 = arith.constant 0 : index
    %37 = vector.load %arg11[%c0_28, %c0_29] : memref<1x128xf32, #tpu.memory_space<vmem>>, vector<1x128xf32>
    %38 = vector.broadcast %37 : vector<1x128xf32> to vector<2x128xf32>
    %39 = arith.addf %36, %38 : vector<2x128xf32>
    %cst_30 = arith.constant 0.000000e+00 : f32
    %40 = vector.broadcast %cst_30 : f32 to vector<2x128xf32>
    %41 = arith.maximumf %39, %40 : vector<2x128xf32>
    %42 = arith.truncf %41 : vector<2x128xf32> to vector<2x128xbf16>
    %c0_31 = arith.constant 0 : index
    %c0_32 = arith.constant 0 : index
    %43 = vector.load %arg12[%c0_31, %c0_32] : memref<128x128xbf16, #tpu.memory_space<vmem>>, vector<128x128xbf16>
    %cst_33 = arith.constant dense<0.000000e+00> : vector<2x128xf32>
    %44 = tpu.matmul %42, %43, %cst_33 {dimension_numbers = #tpu.dot_dimension_numbers<[1], [0], [0], [1], [0, 0, 1, 1], [], []>} : vector<2x128xbf16>, vector<128x128xbf16>, vector<2x128xf32> -> vector<2x128xf32>
    %c0_34 = arith.constant 0 : index
    %c0_35 = arith.constant 0 : index
    %45 = vector.load %arg13[%c0_34, %c0_35] : memref<1x128xf32, #tpu.memory_space<vmem>>, vector<1x128xf32>
    %46 = vector.broadcast %45 : vector<1x128xf32> to vector<2x128xf32>
    %47 = arith.addf %44, %46 : vector<2x128xf32>
    %c0_36 = arith.constant 0 : index
    %c0_37 = arith.constant 0 : index
    %48 = vector.load %arg14[%c0_36, %c0_37] : memref<2x128xf32, #tpu.memory_space<vmem>>, vector<2x128xf32>
    tpu.vector_store %arg14[%c0_36, %c0_37], %47 {strides = array<i32>} : memref<2x128xf32, #tpu.memory_space<vmem>>, vector<2x128xf32>,
    return
  }
  func.func @transform_0(%arg0: i32) -> (i32, i32) {
    %c0_i32 = arith.constant 0 : i32
    %c0_i32_0 = arith.constant 0 : i32
    return %arg0, %c0_i32 : i32, i32
  }
  func.func @transform_1(%arg0: i32) -> (i32, i32) {
    %c0_i32 = arith.constant 0 : i32
    %c0_i32_0 = arith.constant 0 : i32
    %c0_i32_1 = arith.constant 0 : i32
    return %c0_i32, %c0_i32_0 : i32, i32
  }
  func.func @transform_2(%arg0: i32) -> (i32, i32) {
    %c0_i32 = arith.constant 0 : i32
    %c0_i32_0 = arith.constant 0 : i32
    %c0_i32_1 = arith.constant 0 : i32
    return %c0_i32, %c0_i32_0 : i32, i32
  }
  func.func @transform_3(%arg0: i32) -> (i32, i32) {
    %c0_i32 = arith.constant 0 : i32
    %c0_i32_0 = arith.constant 0 : i32
    %c0_i32_1 = arith.constant 0 : i32
    return %c0_i32, %c0_i32_0 : i32, i32
  }
  func.func @transform_4(%arg0: i32) -> (i32, i32) {
    %c0_i32 = arith.constant 0 : i32
    %c0_i32_0 = arith.constant 0 : i32
    %c0_i32_1 = arith.constant 0 : i32
    return %c0_i32, %c0_i32_0 : i32, i32
  }
  func.func @transform_5(%arg0: i32) -> (i32, i32) {
    %c0_i32 = arith.constant 0 : i32
    %c0_i32_0 = arith.constant 0 : i32
    %c0_i32_1 = arith.constant 0 : i32
    return %c0_i32, %c0_i32_0 : i32, i32
  }
  func.func @transform_6(%arg0: i32) -> (i32, i32) {
    %c0_i32 = arith.constant 0 : i32
    %c0_i32_0 = arith.constant 0 : i32
    %c0_i32_1 = arith.constant 0 : i32
    return %c0_i32, %c0_i32_0 : i32, i32
  }
  func.func @transform_7(%arg0: i32) -> (i32, i32) {
    %c0_i32 = arith.constant 0 : i32
    %c0_i32_0 = arith.constant 0 : i32
    %c0_i32_1 = arith.constant 0 : i32
    return %c0_i32, %c0_i32_0 : i32, i32
  }
  func.func @transform_8(%arg0: i32) -> (i32, i32) {
    %c0_i32 = arith.constant 0 : i32
    %c0_i32_0 = arith.constant 0 : i32
    %c0_i32_1 = arith.constant 0 : i32
    return %c0_i32, %c0_i32_0 : i32, i32
  }
  func.func @transform_9(%arg0: i32) -> (i32, i32) {
    %c0_i32 = arith.constant 0 : i32
    %c0_i32_0 = arith.constant 0 : i32
    %c0_i32_1 = arith.constant 0 : i32
    return %c0_i32, %c0_i32_0 : i32, i32
  }
  func.func @transform_10(%arg0: i32) -> (i32, i32) {
    %c0_i32 = arith.constant 0 : i32
    %c0_i32_0 = arith.constant 0 : i32
    %c0_i32_1 = arith.constant 0 : i32
    return %c0_i32, %c0_i32_0 : i32, i32
  }
  func.func @transform_11(%arg0: i32) -> (i32, i32) {
    %c0_i32 = arith.constant 0 : i32
    %c0_i32_0 = arith.constant 0 : i32
    %c0_i32_1 = arith.constant 0 : i32
    return %c0_i32, %c0_i32_0 : i32, i32
  }
  func.func @transform_12(%arg0: i32) -> (i32, i32) {
    %c0_i32 = arith.constant 0 : i32
    %c0_i32_0 = arith.constant 0 : i32
    %c0_i32_1 = arith.constant 0 : i32
    return %c0_i32, %c0_i32_0 : i32, i32
  }
  func.func @transform_13(%arg0: i32) -> (i32, i32) {
    %c0_i32 = arith.constant 0 : i32
    %c0_i32_0 = arith.constant 0 : i32
    return %arg0, %c0_i32 : i32, i32
  }
}

</mosaic_0001>

<llo_original>
// kernel: custom-call.20
$region0: #{custom-call.20}
  %s0 = inlined_call_operand.vmem [shape: f32[2,64], index: 0, kind: output, shape index: {}]

// kernel: custom-call.21
$region0: #{custom-call.21}
  %s0 = inlined_call_operand.vmem [shape: f32[2,16], index: 0, kind: output, shape index: {}]

// kernel: pointnet2_cls_forward.3
$region0: #{pointnet2_cls_forward.3}
  #allocation0 [shape = 'u32[]', space=smem, size = 0x4, offset = 0x4, fixed_abs, tag = 'smem constant byte address 0x4 - core index']
  #allocation1 [shape = 'u32[144,128]{1,0:T(1,128)}', space=vmem, size = 0x12000, scoped, tag = 'internal scratch']
  %s0 = inlined_call_operand.vmem [shape: bf16[256,128], index: 0, kind: input, shape index: {}]
  %s1 = inlined_call_operand.vmem [shape: bf16[128,128], index: 1, kind: input, shape index: {}]
  %s2 = inlined_call_operand.vmem [shape: f32[1,128], index: 2, kind: input, shape index: {}]
  %s3 = inlined_call_operand.vmem [shape: bf16[128,128], index: 3, kind: input, shape index: {}]
  %s4 = inlined_call_operand.vmem [shape: f32[1,128], index: 4, kind: input, shape index: {}]
  %s5 = inlined_call_operand.vmem [shape: bf16[128,128], index: 5, kind: input, shape index: {}]
  %s6 = inlined_call_operand.vmem [shape: f32[1,128], index: 6, kind: input, shape index: {}]
  %s7 = inlined_call_operand.vmem [shape: bf16[32,128], index: 7, kind: output, shape index: {}]
  %s8 = sld [smem:[#allocation0]]
  $region38: #{pointnet2_cls_forward.3} parent=0
    _
  %s10 = ssub.s32 1, %s8
  %s11 = scalar_select 0, %s10, %s8
  // Predicated region
  $region2: #{pointnet2_cls_forward.3} parent=0 // pred_check
    _
  $region3: #{pointnet2_cls_forward.3} parent=0 // pred_check_branch
    %13 = sbr.rel (0) target = $region5
  $region4: #{pointnet2_cls_forward.3} parent=0 // pred_region
    _
  $region5: #{pointnet2_cls_forward.3} parent=0 // pred_fallthru
    _
  // Predicated region
  $region6: #{pointnet2_cls_forward.3} parent=0 // pred_check
    _
  $region7: #{pointnet2_cls_forward.3} parent=0 // pred_check_branch
    %15 = sbr.rel (0) target = $region9
  $region8: #{pointnet2_cls_forward.3} parent=0 // pred_region
    _
  $region9: #{pointnet2_cls_forward.3} parent=0 // pred_fallthru
    _
  // Predicated region
  $region10: #{pointnet2_cls_forward.3} parent=0 // pred_check
    _
  $region11: #{pointnet2_cls_forward.3} parent=0 // pred_check_branch
    %17 = sbr.rel (0) target = $region13
  $region12: #{pointnet2_cls_forward.3} parent=0 // pred_region
    _
  $region13: #{pointnet2_cls_forward.3} parent=0 // pred_fallthru
    _
  // Predicated region
  $region14: #{pointnet2_cls_forward.3} parent=0 // pred_check
    _
  $region15: #{pointnet2_cls_forward.3} parent=0 // pred_check_branch
    %19 = sbr.rel (0) target = $region17
  $region16: #{pointnet2_cls_forward.3} parent=0 // pred_region
    _
  $region17: #{pointnet2_cls_forward.3} parent=0 // pred_fallthru
    _
  // Predicated region
  $region18: #{pointnet2_cls_forward.3} parent=0 // pred_check
    _
  $region19: #{pointnet2_cls_forward.3} parent=0 // pred_check_branch
    %21 = sbr.rel (0) target = $region21
  $region20: #{pointnet2_cls_forward.3} parent=0 // pred_region
    _
  $region21: #{pointnet2_cls_forward.3} parent=0 // pred_fallthru
    _
  // Predicated region
  $region22: #{pointnet2_cls_forward.3} parent=0 // pred_check
    _
  $region23: #{pointnet2_cls_forward.3} parent=0 // pred_check_branch
    %23 = sbr.rel (0) target = $region25
  $region24: #{pointnet2_cls_forward.3} parent=0 // pred_region
    _
  $region25: #{pointnet2_cls_forward.3} parent=0 // pred_fallthru
    _
  // Predicated region
  $region26: #{pointnet2_cls_forward.3} parent=0 // pred_check
    _
  $region27: #{pointnet2_cls_forward.3} parent=0 // pred_check_branch
    %25 = sbr.rel (0) target = $region29
  $region28: #{pointnet2_cls_forward.3} parent=0 // pred_region
    _
  $region29: #{pointnet2_cls_forward.3} parent=0 // pred_fallthru
    _
  %v27 = vld [vmem:[%s0] sm:$0xf]
  %v28 = vld [vmem:[%s0 + $0x4] sm:$0xf]
  %v29 = vld [vmem:[%s0 + $0x8] sm:$0xf]
  %v30 = vld [vmem:[%s0 + $0xc] sm:$0xf]
  %v31 = vld [vmem:[%s0 + $0x10] sm:$0xf]
  %v32 = vld [vmem:[%s0 + $0x14] sm:$0xf]
  %v33 = vld [vmem:[%s0 + $0x18] sm:$0xf]
  %v34 = vld [vmem:[%s0 + $0x1c] sm:$0xf]
  %v35 = vld [vmem:[%s0 + $0x20] sm:$0xf]
  %v36 = vld [vmem:[%s0 + $0x24] sm:$0xf]
  %v37 = vld [vmem:[%s0 + $0x28] sm:$0xf]
  %v38 = vld [vmem:[%s0 + $0x2c] sm:$0xf]
  %v39 = vld [vmem:[%s0 + $0x30] sm:$0xf]
  %v40 = vld [vmem:[%s0 + $0x34] sm:$0xf]
  %v41 = vld [vmem:[%s0 + $0x38] sm:$0xf]
  %v42 = vld [vmem:[%s0 + $0x3c] sm:$0xf]
  %v43 = vld [vmem:[%s0 + $0x40] sm:$0xf]
  %v44 = vld [vmem:[%s0 + $0x44] sm:$0xf]
  %v45 = vld [vmem:[%s0 + $0x48] sm:$0xf]
  %v46 = vld [vmem:[%s0 + $0x4c] sm:$0xf]
  %v47 = vld [vmem:[%s0 + $0x50] sm:$0xf]
  %v48 = vld [vmem:[%s0 + $0x54] sm:$0xf]
  %v49 = vld [vmem:[%s0 + $0x58] sm:$0xf]
  %v50 = vld [vmem:[%s0 + $0x5c] sm:$0xf]
  %v51 = vld [vmem:[%s0 + $0x60] sm:$0xf]
  %v52 = vld [vmem:[%s0 + $0x64] sm:$0xf]
  %v53 = vld [vmem:[%s0 + $0x68] sm:$0xf]
  %v54 = vld [vmem:[%s0 + $0x6c] sm:$0xf]
  %v55 = vld [vmem:[%s0 + $0x70] sm:$0xf]
  %v56 = vld [vmem:[%s0 + $0x74] sm:$0xf]
  %v57 = vld [vmem:[%s0 + $0x78] sm:$0xf]
  %v58 = vld [vmem:[%s0 + $0x7c] sm:$0xf]
  %v59 = vld [vmem:[%s1] sm:$0xf]
  %v60 = vld [vmem:[%s1 + $0x4] sm:$0xf]
  %v61 = vld [vmem:[%s1 + $0x8] sm:$0xf]
  %v62 = vld [vmem:[%s1 + $0xc] sm:$0xf]
  %v63 = vld [vmem:[%s1 + $0x10] sm:$0xf]
  %v64 = vld [vmem:[%s1 + $0x14] sm:$0xf]
  %v65 = vld [vmem:[%s1 + $0x18] sm:$0xf]
  %v66 = vld [vmem:[%s1 + $0x1c] sm:$0xf]
  %v67 = vld [vmem:[%s1 + $0x20] sm:$0xf]
  %v68 = vld [vmem:[%s1 + $0x24] sm:$0xf]
  %v69 = vld [vmem:[%s1 + $0x28] sm:$0xf]
  %v70 = vld [vmem:[%s1 + $0x2c] sm:$0xf]
  %v71 = vld [vmem:[%s1 + $0x30] sm:$0xf]
  %v72 = vld [vmem:[%s1 + $0x34] sm:$0xf]
  %v73 = vld [vmem:[%s1 + $0x38] sm:$0xf]
  %v74 = vld [vmem:[%s1 + $0x3c] sm:$0xf]
  %v75 = vld [vmem:[%s2] sm:$0x1]
  %v77 = vlaneseq
  %v78 = vshrl.u32 %v77, 7
  %v79 = vsub.s32 0, %v78
  %v80 = vrot.slane %v75, %v79
  %v114 = vunpack.c.l.b16 %v27
  %v115 = vunpack.c.l.b16 %v28
  %v116 = vunpack.c.l.b16 %v29
  %v117 = vunpack.c.l.b16 %v30
  %v118 = vunpack.c.l.b16 %v31
  %v119 = vunpack.c.l.b16 %v32
  %v120 = vunpack.c.l.b16 %v33
  %v121 = vunpack.c.l.b16 %v34
  %v122 = vunpack.c.l.b16 %v35
  %v123 = vunpack.c.l.b16 %v36
  %v124 = vunpack.c.l.b16 %v37
  %v125 = vunpack.c.l.b16 %v38
  %v126 = vunpack.c.l.b16 %v39
  %v127 = vunpack.c.l.b16 %v40
  %v128 = vunpack.c.l.b16 %v41
  %v129 = vunpack.c.l.b16 %v42
  %v130 = vunpack.c.l.b16 %v43
  %v131 = vunpack.c.l.b16 %v44
  %v132 = vunpack.c.l.b16 %v45
  %v133 = vunpack.c.l.b16 %v46
  %v134 = vunpack.c.l.b16 %v47
  %v135 = vunpack.c.l.b16 %v48
  %v136 = vunpack.c.l.b16 %v49
  %v137 = vunpack.c.l.b16 %v50
  %v138 = vunpack.c.l.b16 %v51
  %v139 = vunpack.c.l.b16 %v52
  %v140 = vunpack.c.l.b16 %v53
  %v141 = vunpack.c.l.b16 %v54
  %v142 = vunpack.c.l.b16 %v55
  %v143 = vunpack.c.l.b16 %v56
  %v144 = vunpack.c.l.b16 %v57
  %v145 = vunpack.c.l.b16 %v58
  %v146 = vpack.c.b16 %v115, %v114
  %v147 = vpack.c.b16 %v117, %v116
  %v148 = vpack.c.b16 %v119, %v118
  %v149 = vpack.c.b16 %v121, %v120
  %v150 = vpack.c.b16 %v123, %v122
  %v151 = vpack.c.b16 %v125, %v124
  %v152 = vpack.c.b16 %v127, %v126
  %v153 = vpack.c.b16 %v129, %v128
  %v154 = vpack.c.b16 %v131, %v130
  %v155 = vpack.c.b16 %v133, %v132
  %v156 = vpack.c.b16 %v135, %v134
  %v157 = vpack.c.b16 %v137, %v136
  %v158 = vpack.c.b16 %v139, %v138
  %v159 = vpack.c.b16 %v141, %v140
  %v160 = vpack.c.b16 %v143, %v142
  %v161 = vpack.c.b16 %v145, %v144
  %v194 = vunpack.c.l.b16 %v59
  %v195 = vunpack.c.l.b16 %v60
  %v196 = vunpack.c.l.b16 %v61
  %v197 = vunpack.c.l.b16 %v62
  %v198 = vunpack.c.l.b16 %v63
  %v199 = vunpack.c.l.b16 %v64
  %v200 = vunpack.c.l.b16 %v65
  %v201 = vunpack.c.l.b16 %v66
  %v202 = vunpack.c.l.b16 %v67
  %v203 = vunpack.c.l.b16 %v68
  %v204 = vunpack.c.l.b16 %v69
  %v205 = vunpack.c.l.b16 %v70
  %v206 = vunpack.c.l.b16 %v71
  %v207 = vunpack.c.l.b16 %v72
  %v208 = vunpack.c.l.b16 %v73
  %v209 = vunpack.c.l.b16 %v74
  %v210 = vpack.c.b16 %v195, %v194
  %v211 = vpack.c.b16 %v197, %v196
  %v212 = vpack.c.b16 %v199, %v198
  %v213 = vpack.c.b16 %v201, %v200
  %v214 = vpack.c.b16 %v203, %v202
  %v215 = vpack.c.b16 %v205, %v204
  %v216 = vpack.c.b16 %v207, %v206
  %v217 = vpack.c.b16 %v209, %v208
  %226 = vmatprep.subr.bf16.mxu0 0
  %227 = vmatpush1.bf16.msra.mxu0 %v210
  %228 = vmatprep.subr.bf16.mxu0 0
  %229 = vmatpush1.bf16.msra.mxu0 %v211
  %230 = vmatprep.subr.bf16.mxu0 0
  %231 = vmatpush1.bf16.msra.mxu0 %v212
  %232 = vmatprep.subr.bf16.mxu0 0
  %233 = vmatpush1.bf16.msra.mxu0 %v213
  %234 = vmatprep.subr.bf16.mxu0 0
  %235 = vmatpush1.bf16.msra.mxu0 %v214
  %236 = vmatprep.subr.bf16.mxu0 0
  %237 = vmatpush1.bf16.msra.mxu0 %v215
  %238 = vmatprep.subr.bf16.mxu0 0
  %239 = vmatpush1.bf16.msra.mxu0 %v216
  %240 = vmatprep.subr.bf16.mxu0 0
  %241 = vmatpush1.bf16.msra.mxu0 %v217
  %242 = vmatprep.subr.bf16.mxu0 0
  %243 = vmatpush1.bf16.msra.mxu0 0
  %244 = vmatprep.subr.bf16.mxu0 0
  %245 = vmatpush1.bf16.msra.mxu0 0
  %246 = vmatprep.subr.bf16.mxu0 0
  %247 = vmatpush1.bf16.msra.mxu0 0
  %248 = vmatprep.subr.bf16.mxu0 0
  %249 = vmatpush1.bf16.msra.mxu0 0
  %250 = vmatprep.subr.bf16.mxu0 0
  %251 = vmatpush1.bf16.msra.mxu0 0
  %252 = vmatprep.subr.bf16.mxu0 0
  %253 = vmatpush1.bf16.msra.mxu0 0
  %254 = vmatprep.subr.bf16.mxu0 0
  %255 = vmatpush1.bf16.msra.mxu0 0
  %256 = vmatprep.subr.bf16.mxu0 0
  %257 = vmatpush1.bf16.msra.mxu0 0
  %258 = vmatprep.mubr.bf16.mxu0 0
  %259 = vmatmul.mubr.bf16.gmra.mrb[0].mxu0 %v146
  %v260 = vpop.f32.mrb[0].mxu0
  %v261 = vadd.f32 %v80, %v260
  %v262 = vpop.f32.mrb[0].mxu0
  %v263 = vpop.f32.mrb[0].mxu0
  %v264 = vadd.f32 %v80, %v263
  %v265 = vpop.f32.mrb[0].mxu0
  %266 = vmatprep.mubr.bf16.mxu0 0
  %267 = vmatmul.mubr.bf16.gmra.mrb[0].mxu0 %v147
  %v268 = vpop.f32.mrb[0].mxu0
  %v269 = vadd.f32 %v80, %v268
  %v270 = vpop.f32.mrb[0].mxu0
  %v271 = vpop.f32.mrb[0].mxu0
  %v272 = vadd.f32 %v80, %v271
  %v273 = vpop.f32.mrb[0].mxu0
  %274 = vmatprep.mubr.bf16.mxu0 0
  %275 = vmatmul.mubr.bf16.gmra.mrb[0].mxu0 %v148
  %v276 = vpop.f32.mrb[0].mxu0
  %v277 = vadd.f32 %v80, %v276
  %v278 = vpop.f32.mrb[0].mxu0
  %v279 = vpop.f32.mrb[0].mxu0
  %v280 = vadd.f32 %v80, %v279
  %v281 = vpop.f32.mrb[0].mxu0
  %282 = vmatprep.mubr.bf16.mxu0 0
  %283 = vmatmul.mubr.bf16.gmra.mrb[0].mxu0 %v149
  %v284 = vpop.f32.mrb[0].mxu0
  %v285 = vadd.f32 %v80, %v284
  %v286 = vpop.f32.mrb[0].mxu0
  %v287 = vpop.f32.mrb[0].mxu0
  %v288 = vadd.f32 %v80, %v287
  %v289 = vpop.f32.mrb[0].mxu0
  %290 = vmatprep.mubr.bf16.mxu0 0
  %291 = vmatmul.mubr.bf16.gmra.mrb[0].mxu0 %v150
  %v292 = vpop.f32.mrb[0].mxu0
  %v293 = vadd.f32 %v80, %v292
  %v294 = vpop.f32.mrb[0].mxu0
  %v295 = vpop.f32.mrb[0].mxu0
  %v296 = vadd.f32 %v80, %v295
  %v297 = vpop.f32.mrb[0].mxu0
  %298 = vmatprep.mubr.bf16.mxu0 0
  %299 = vmatmul.mubr.bf16.gmra.mrb[0].mxu0 %v151
  %v300 = vpop.f32.mrb[0].mxu0
  %v301 = vadd.f32 %v80, %v300
  %v302 = vpop.f32.mrb[0].mxu0
  %v303 = vpop.f32.mrb[0].mxu0
  %v304 = vadd.f32 %v80, %v303
  %v305 = vpop.f32.mrb[0].mxu0
  %306 = vmatprep.mubr.bf16.mxu0 0
  %307 = vmatmul.mubr.bf16.gmra.mrb[0].mxu0 %v152
  %v308 = vpop.f32.mrb[0].mxu0
  %v309 = vadd.f32 %v80, %v308
  %v310 = vpop.f32.mrb[0].mxu0
  %v311 = vpop.f32.mrb[0].mxu0
  %v312 = vadd.f32 %v80, %v311
  %v313 = vpop.f32.mrb[0].mxu0
  %314 = vmatprep.mubr.bf16.mxu0 0
  %315 = vmatmul.mubr.bf16.gmra.mrb[0].mxu0 %v153
  %v316 = vpop.f32.mrb[0].mxu0
  %v317 = vadd.f32 %v80, %v316
  %v318 = vpop.f32.mrb[0].mxu0
  %v319 = vpop.f32.mrb[0].mxu0
  %v320 = vadd.f32 %v80, %v319
  %v321 = vpop.f32.mrb[0].mxu0
  %322 = vmatprep.mubr.bf16.mxu0 0
  %323 = vmatmul.mubr.bf16.gmra.mrb[0].mxu0 %v154
  %v324 = vpop.f32.mrb[0].mxu0
  %v325 = vadd.f32 %v80, %v324
  %v326 = vpop.f32.mrb[0].mxu0
  %v327 = vpop.f32.mrb[0].mxu0
  %v328 = vadd.f32 %v80, %v327
  %v329 = vpop.f32.mrb[0].mxu0
  %330 = vmatprep.mubr.bf16.mxu0 0
  %331 = vmatmul.mubr.bf16.gmra.mrb[0].mxu0 %v155
  %v332 = vpop.f32.mrb[0].mxu0
  %v333 = vadd.f32 %v80, %v332
  %v334 = vpop.f32.mrb[0].mxu0
  %v335 = vpop.f32.mrb[0].mxu0
  %v336 = vadd.f32 %v80, %v335
  %v337 = vpop.f32.mrb[0].mxu0
  %338 = vmatprep.mubr.bf16.mxu0 0
  %339 = vmatmul.mubr.bf16.gmra.mrb[0].mxu0 %v156
  %v340 = vpop.f32.mrb[0].mxu0
  %v341 = vadd.f32 %v80, %v340
  %v342 = vpop.f32.mrb[0].mxu0
  %v343 = vpop.f32.mrb[0].mxu0
  %v344 = vadd.f32 %v80, %v343
  %v345 = vpop.f32.mrb[0].mxu0
  %346 = vmatprep.mubr.bf16.mxu0 0
  %347 = vmatmul.mubr.bf16.gmra.mrb[0].mxu0 %v157
  %v348 = vpop.f32.mrb[0].mxu0
  %v349 = vadd.f32 %v80, %v348
  %v350 = vpop.f32.mrb[0].mxu0
  %v351 = vpop.f32.mrb[0].mxu0
  %v352 = vadd.f32 %v80, %v351
  %v353 = vpop.f32.mrb[0].mxu0
  %354 = vmatprep.mubr.bf16.mxu0 0
  %355 = vmatmul.mubr.bf16.gmra.mrb[0].mxu0 %v158
  %v356 = vpop.f32.mrb[0].mxu0
  %v357 = vadd.f32 %v80, %v356
  %v358 = vpop.f32.mrb[0].mxu0
  %v359 = vpop.f32.mrb[0].mxu0
  %v360 = vadd.f32 %v80, %v359
  %v361 = vpop.f32.mrb[0].mxu0
  %362 = vmatprep.mubr.bf16.mxu0 0
  %363 = vmatmul.mubr.bf16.gmra.mrb[0].mxu0 %v159
  %v364 = vpop.f32.mrb[0].mxu0
  %v365 = vadd.f32 %v80, %v364
  %v366 = vpop.f32.mrb[0].mxu0
  %v367 = vpop.f32.mrb[0].mxu0
  %v368 = vadd.f32 %v80, %v367
  %v369 = vpop.f32.mrb[0].mxu0
  %370 = vmatprep.mubr.bf16.mxu0 0
  %371 = vmatmul.mubr.bf16.gmra.mrb[0].mxu0 %v160
  %v372 = vpop.f32.mrb[0].mxu0
  %v373 = vadd.f32 %v80, %v372
  %v374 = vpop.f32.mrb[0].mxu0
  %v375 = vpop.f32.mrb[0].mxu0
  %v376 = vadd.f32 %v80, %v375
  %v377 = vpop.f32.mrb[0].mxu0
  %378 = vmatprep.mubr.bf16.mxu0 0
  %379 = vmatmul.mubr.bf16.gmra.mrb[0].mxu0 %v161
  %v380 = vpop.f32.mrb[0].mxu0
  %v381 = vadd.f32 %v80, %v380
  %v382 = vpop.f32.mrb[0].mxu0
  %v383 = vpop.f32.mrb[0].mxu0
  %v384 = vadd.f32 %v80, %v383
  %v385 = vpop.f32.mrb[0].mxu0
  %386 = vdwg.mxu0
  %v387 = vmax.f32 %v261, 0.0
  %v388 = vmax.f32 %v264, 0.0
  %v389 = vmax.f32 %v269, 0.0
  %v390 = vmax.f32 %v272, 0.0
  %v391 = vmax.f32 %v277, 0.0
  %v392 = vmax.f32 %v280, 0.0
  %v393 = vmax.f32 %v285, 0.0
  %v394 = vmax.f32 %v288, 0.0
  %v395 = vmax.f32 %v293, 0.0
  %v396 = vmax.f32 %v296, 0.0
  %v397 = vmax.f32 %v301, 0.0
  %v398 = vmax.f32 %v304, 0.0
  %v399 = vmax.f32 %v309, 0.0
  %v400 = vmax.f32 %v312, 0.0
  %v401 = vmax.f32 %v317, 0.0
  %v402 = vmax.f32 %v320, 0.0
  %v403 = vmax.f32 %v325, 0.0
  %v404 = vmax.f32 %v328, 0.0
  %v405 = vmax.f32 %v333, 0.0
  %v406 = vmax.f32 %v336, 0.0
  %v407 = vmax.f32 %v341, 0.0
  %v408 = vmax.f32 %v344, 0.0
  %v409 = vmax.f32 %v349, 0.0
  %v410 = vmax.f32 %v352, 0.0
  %v411 = vmax.f32 %v357, 0.0
  %v412 = vmax.f32 %v360, 0.0
  %v413 = vmax.f32 %v365, 0.0
  %v414 = vmax.f32 %v368, 0.0
  %v415 = vmax.f32 %v373, 0.0
  %v416 = vmax.f32 %v376, 0.0
  %v417 = vmax.f32 %v381, 0.0
  %v418 = vmax.f32 %v384, 0.0
  %v419 = vpack.c.bf16 %v388, %v387
  %v420 = vpack.c.bf16 %v390, %v389
  %v421 = vpack.c.bf16 %v392, %v391
  %v422 = vpack.c.bf16 %v394, %v393
  %v423 = vpack.c.bf16 %v396, %v395
  %v424 = vpack.c.bf16 %v398, %v397
  %v425 = vpack.c.bf16 %v400, %v399
  %v426 = vpack.c.bf16 %v402, %v401
  %v427 = vpack.c.bf16 %v404, %v403
  %v428 = vpack.c.bf16 %v406, %v405
  %v429 = vpack.c.bf16 %v408, %v407
  %v430 = vpack.c.bf16 %v410, %v409
  %v431 = vpack.c.bf16 %v412, %v411
  %v432 = vpack.c.bf16 %v414, %v413
  %v433 = vpack.c.bf16 %v416, %v415
  %v434 = vpack.c.bf16 %v418, %v417
  %v435 = vld [vmem:[%s3] sm:$0xf]
  %v436 = vld [vmem:[%s3 + $0x4] sm:$0xf]
  %v437 = vld [vmem:[%s3 + $0x8] sm:$0xf]
  %v438 = vld [vmem:[%s3 + $0xc] sm:$0xf]
  %v439 = vld [vmem:[%s3 + $0x10] sm:$0xf]
  %v440 = vld [vmem:[%s3 + $0x14] sm:$0xf]
  %v441 = vld [vmem:[%s3 + $0x18] sm:$0xf]
  %v442 = vld [vmem:[%s3 + $0x1c] sm:$0xf]
  %v443 = vld [vmem:[%s3 + $0x20] sm:$0xf]
  %v444 = vld [vmem:[%s3 + $0x24] sm:$0xf]
  %v445 = vld [vmem:[%s3 + $0x28] sm:$0xf]
  %v446 = vld [vmem:[%s3 + $0x2c] sm:$0xf]
  %v447 = vld [vmem:[%s3 + $0x30] sm:$0xf]
  %v448 = vld [vmem:[%s3 + $0x34] sm:$0xf]
  %v449 = vld [vmem:[%s3 + $0x38] sm:$0xf]
  %v450 = vld [vmem:[%s3 + $0x3c] sm:$0xf]
  %v451 = vld [vmem:[%s4] sm:$0x1]
  %v453 = vlaneseq
  %v454 = vshrl.u32 %v453, 7
  %v455 = vsub.s32 0, %v454
  %v456 = vrot.slane %v451, %v455
  %v474 = vunpack.c.l.b16 %v435
  %v475 = vunpack.c.l.b16 %v436
  %v476 = vunpack.c.l.b16 %v437
  %v477 = vunpack.c.l.b16 %v438
  %v478 = vunpack.c.l.b16 %v439
  %v479 = vunpack.c.l.b16 %v440
  %v480 = vunpack.c.l.b16 %v441
  %v481 = vunpack.c.l.b16 %v442
  %v482 = vunpack.c.l.b16 %v443
  %v483 = vunpack.c.l.b16 %v444
  %v484 = vunpack.c.l.b16 %v445
  %v485 = vunpack.c.l.b16 %v446
  %v486 = vunpack.c.l.b16 %v447
  %v487 = vunpack.c.l.b16 %v448
  %v488 = vunpack.c.l.b16 %v449
  %v489 = vunpack.c.l.b16 %v450
  %v490 = vpack.c.b16 %v475, %v474
  %v491 = vpack.c.b16 %v477, %v476
  %v492 = vpack.c.b16 %v479, %v478
  %v493 = vpack.c.b16 %v481, %v480
  %v494 = vpack.c.b16 %v483, %v482
  %v495 = vpack.c.b16 %v485, %v484
  %v496 = vpack.c.b16 %v487, %v486
  %v497 = vpack.c.b16 %v489, %v488
  %506 = vmatprep.subr.bf16.mxu0 0
  %507 = vmatpush1.bf16.msra.mxu0 %v490
  %508 = vmatprep.subr.bf16.mxu0 0
  %509 = vmatpush1.bf16.msra.mxu0 %v491
  %510 = vmatprep.subr.bf16.mxu0 0
  %511 = vmatpush1.bf16.msra.mxu0 %v492
  %512 = vmatprep.subr.bf16.mxu0 0
  %513 = vmatpush1.bf16.msra.mxu0 %v493
  %514 = vmatprep.subr.bf16.mxu0 0
  %515 = vmatpush1.bf16.msra.mxu0 %v494
  %516 = vmatprep.subr.bf16.mxu0 0
  %517 = vmatpush1.bf16.msra.mxu0 %v495
  %518 = vmatprep.subr.bf16.mxu0 0
  %519 = vmatpush1.bf16.msra.mxu0 %v496
  %520 = vmatprep.subr.bf16.mxu0 0
  %521 = vmatpush1.bf16.msra.mxu0 %v497
  %522 = vmatprep.subr.bf16.mxu0 0
  %523 = vmatpush1.bf16.msra.mxu0 0
  %524 = vmatprep.subr.bf16.mxu0 0
  %525 = vmatpush1.bf16.msra.mxu0 0
  %526 = vmatprep.subr.bf16.mxu0 0
  %527 = vmatpush1.bf16.msra.mxu0 0
  %528 = vmatprep.subr.bf16.mxu0 0
  %529 = vmatpush1.bf16.msra.mxu0 0
  %530 = vmatprep.subr.bf16.mxu0 0
  %531 = vmatpush1.bf16.msra.mxu0 0
  %532 = vmatprep.subr.bf16.mxu0 0
  %533 = vmatpush1.bf16.msra.mxu0 0
  %534 = vmatprep.subr.bf16.mxu0 0
  %535 = vmatpush1.bf16.msra.mxu0 0
  %536 = vmatprep.subr.bf16.mxu0 0
  %537 = vmatpush1.bf16.msra.mxu0 0
  %538 = vmatprep.mubr.bf16.mxu0 0
  %539 = vmatmul.mubr.bf16.gmra.mrb[0].mxu0 %v419
  %v540 = vpop.f32.mrb[0].mxu0
  %v541 = vadd.f32 %v456, %v540
  %v542 = vpop.f32.mrb[0].mxu0
  %v543 = vpop.f32.mrb[0].mxu0
  %v544 = vadd.f32 %v456, %v543
  %v545 = vpop.f32.mrb[0].mxu0
  %546 = vmatprep.mubr.bf16.mxu0 0
  %547 = vmatmul.mubr.bf16.gmra.mrb[0].mxu0 %v420
  %v548 = vpop.f32.mrb[0].mxu0
  %v549 = vadd.f32 %v456, %v548
  %v550 = vpop.f32.mrb[0].mxu0
  %v551 = vpop.f32.mrb[0].mxu0
  %v552 = vadd.f32 %v456, %v551
  %v553 = vpop.f32.mrb[0].mxu0
  %554 = vmatprep.mubr.bf16.mxu0 0
  %555 = vmatmul.mubr.bf16.gmra.mrb[0].mxu0 %v421
  %v556 = vpop.f32.mrb[0].mxu0
  %v557 = vadd.f32 %v456, %v556
  %v558 = vpop.f32.mrb[0].mxu0
  %v559 = vpop.f32.mrb[0].mxu0
  %v560 = vadd.f32 %v456, %v559
  %v561 = vpop.f32.mrb[0].mxu0
  %562 = vmatprep.mubr.bf16.mxu0 0
  %563 = vmatmul.mubr.bf16.gmra.mrb[0].mxu0 %v422
  %v564 = vpop.f32.mrb[0].mxu0
  %v565 = vadd.f32 %v456, %v564
  %v566 = vpop.f32.mrb[0].mxu0
  %v567 = vpop.f32.mrb[0].mxu0
  %v568 = vadd.f32 %v456, %v567
  %v569 = vpop.f32.mrb[0].mxu0
  %570 = vmatprep.mubr.bf16.mxu0 0
  %571 = vmatmul.mubr.bf16.gmra.mrb[0].mxu0 %v423
  %v572 = vpop.f32.mrb[0].mxu0
  %v573 = vadd.f32 %v456, %v572
  %v574 = vpop.f32.mrb[0].mxu0
  %v575 = vpop.f32.mrb[0].mxu0
  %v576 = vadd.f32 %v456, %v575
  %v577 = vpop.f32.mrb[0].mxu0
  %578 = vmatprep.mubr.bf16.mxu0 0
  %579 = vmatmul.mubr.bf16.gmra.mrb[0].mxu0 %v424
  %v580 = vpop.f32.mrb[0].mxu0
  %v581 = vadd.f32 %v456, %v580
  %v582 = vpop.f32.mrb[0].mxu0
  %v583 = vpop.f32.mrb[0].mxu0
  %v584 = vadd.f32 %v456, %v583
  %v585 = vpop.f32.mrb[0].mxu0
  %586 = vmatprep.mubr.bf16.mxu0 0
  %587 = vmatmul.mubr.bf16.gmra.mrb[0].mxu0 %v425
  %v588 = vpop.f32.mrb[0].mxu0
  %v589 = vadd.f32 %v456, %v588
  %v590 = vpop.f32.mrb[0].mxu0
  %v591 = vpop.f32.mrb[0].mxu0
  %v592 = vadd.f32 %v456, %v591
  %v593 = vpop.f32.mrb[0].mxu0
  %594 = vmatprep.mubr.bf16.mxu0 0
  %595 = vmatmul.mubr.bf16.gmra.mrb[0].mxu0 %v426
  %v596 = vpop.f32.mrb[0].mxu0
  %v597 = vadd.f32 %v456, %v596
  %v598 = vpop.f32.mrb[0].mxu0
  %v599 = vpop.f32.mrb[0].mxu0
  %v600 = vadd.f32 %v456, %v599
  %v601 = vpop.f32.mrb[0].mxu0
  %602 = vmatprep.mubr.bf16.mxu0 0
  %603 = vmatmul.mubr.bf16.gmra.mrb[0].mxu0 %v427
  %v604 = vpop.f32.mrb[0].mxu0
  %v605 = vadd.f32 %v456, %v604
  %v606 = vpop.f32.mrb[0].mxu0
  %v607 = vpop.f32.mrb[0].mxu0
  %v608 = vadd.f32 %v456, %v607
  %v609 = vpop.f32.mrb[0].mxu0
  %610 = vmatprep.mubr.bf16.mxu0 0
  %611 = vmatmul.mubr.bf16.gmra.mrb[0].mxu0 %v428
  %v612 = vpop.f32.mrb[0].mxu0
  %v613 = vadd.f32 %v456, %v612
  %v614 = vpop.f32.mrb[0].mxu0
  %v615 = vpop.f32.mrb[0].mxu0
  %v616 = vadd.f32 %v456, %v615
  %v617 = vpop.f32.mrb[0].mxu0
  %618 = vmatprep.mubr.bf16.mxu0 0
  %619 = vmatmul.mubr.bf16.gmra.mrb[0].mxu0 %v429
  %v620 = vpop.f32.mrb[0].mxu0
  %v621 = vadd.f32 %v456, %v620
  %v622 = vpop.f32.mrb[0].mxu0
  %v623 = vpop.f32.mrb[0].mxu0
  %v624 = vadd.f32 %v456, %v623
  %v625 = vpop.f32.mrb[0].mxu0
  %626 = vmatprep.mubr.bf16.mxu0 0
  %627 = vmatmul.mubr.bf16.gmra.mrb[0].mxu0 %v430
  %v628 = vpop.f32.mrb[0].mxu0
  %v629 = vadd.f32 %v456, %v628
  %v630 = vpop.f32.mrb[0].mxu0
  %v631 = vpop.f32.mrb[0].mxu0
  %v632 = vadd.f32 %v456, %v631
  %v633 = vpop.f32.mrb[0].mxu0
  %634 = vmatprep.mubr.bf16.mxu0 0
  %635 = vmatmul.mubr.bf16.gmra.mrb[0].mxu0 %v431
  %v636 = vpop.f32.mrb[0].mxu0
  %v637 = vadd.f32 %v456, %v636
  %v638 = vpop.f32.mrb[0].mxu0
  %v639 = vpop.f32.mrb[0].mxu0
  %v640 = vadd.f32 %v456, %v639
  %v641 = vpop.f32.mrb[0].mxu0
  %642 = vmatprep.mubr.bf16.mxu0 0
  %643 = vmatmul.mubr.bf16.gmra.mrb[0].mxu0 %v432
  %v644 = vpop.f32.mrb[0].mxu0
  %v645 = vadd.f32 %v456, %v644
  %v646 = vpop.f32.mrb[0].mxu0
  %v647 = vpop.f32.mrb[0].mxu0
  %v648 = vadd.f32 %v456, %v647
  %v649 = vpop.f32.mrb[0].mxu0
  %650 = vmatprep.mubr.bf16.mxu0 0
  %651 = vmatmul.mubr.bf16.gmra.mrb[0].mxu0 %v433
  %v652 = vpop.f32.mrb[0].mxu0
  %v653 = vadd.f32 %v456, %v652
  %v654 = vpop.f32.mrb[0].mxu0
  %v655 = vpop.f32.mrb[0].mxu0
  %v656 = vadd.f32 %v456, %v655
  %v657 = vpop.f32.mrb[0].mxu0
  %658 = vmatprep.mubr.bf16.mxu0 0
  %659 = vmatmul.mubr.bf16.gmra.mrb[0].mxu0 %v434
  %v660 = vpop.f32.mrb[0].mxu0
  %v661 = vadd.f32 %v456, %v660
  %v662 = vpop.f32.mrb[0].mxu0
  %v663 = vpop.f32.mrb[0].mxu0
  %v664 = vadd.f32 %v456, %v663
  %v665 = vpop.f32.mrb[0].mxu0
  %666 = vdwg.mxu0
  %v667 = vmax.f32 %v541, 0.0
  %v668 = vmax.f32 %v544, 0.0
  %v669 = vmax.f32 %v549, 0.0
  %v670 = vmax.f32 %v552, 0.0
  %v671 = vmax.f32 %v557, 0.0
  %v672 = vmax.f32 %v560, 0.0
  %v673 = vmax.f32 %v565, 0.0
  %v674 = vmax.f32 %v568, 0.0
  %v675 = vmax.f32 %v573, 0.0
  %v676 = vmax.f32 %v576, 0.0
  %v677 = vmax.f32 %v581, 0.0
  %v678 = vmax.f32 %v584, 0.0
  %v679 = vmax.f32 %v589, 0.0
  %v680 = vmax.f32 %v592, 0.0
  %v681 = vmax.f32 %v597, 0.0
  %v682 = vmax.f32 %v600, 0.0
  %v683 = vmax.f32 %v605, 0.0
  %v684 = vmax.f32 %v608, 0.0
  %v685 = vmax.f32 %v613, 0.0
  %v686 = vmax.f32 %v616, 0.0
  %v687 = vmax.f32 %v621, 0.0
  %v688 = vmax.f32 %v624, 0.0
  %v689 = vmax.f32 %v629, 0.0
  %v690 = vmax.f32 %v632, 0.0
  %v691 = vmax.f32 %v637, 0.0
  %v692 = vmax.f32 %v640, 0.0
  %v693 = vmax.f32 %v645, 0.0
  %v694 = vmax.f32 %v648, 0.0
  %v695 = vmax.f32 %v653, 0.0
  %v696 = vmax.f32 %v656, 0.0
  %v697 = vmax.f32 %v661, 0.0
  %v698 = vmax.f32 %v664, 0.0
  %v699 = vpack.c.bf16 %v668, %v667
  %v700 = vpack.c.bf16 %v670, %v669
  %v701 = vpack.c.bf16 %v672, %v671
  %v702 = vpack.c.bf16 %v674, %v673
  %v703 = vpack.c.bf16 %v676, %v675
  %v704 = vpack.c.bf16 %v678, %v677
  %v705 = vpack.c.bf16 %v680, %v679
  %v706 = vpack.c.bf16 %v682, %v681
  %v707 = vpack.c.bf16 %v684, %v683
  %v708 = vpack.c.bf16 %v686, %v685
  %v709 = vpack.c.bf16 %v688, %v687
  %v710 = vpack.c.bf16 %v690, %v689
  %v711 = vpack.c.bf16 %v692, %v691
  %v712 = vpack.c.bf16 %v694, %v693
  %v713 = vpack.c.bf16 %v696, %v695
  %v714 = vpack.c.bf16 %v698, %v697
  %v715 = vld [vmem:[%s5] sm:$0xf]
  %v716 = vld [vmem:[%s5 + $0x4] sm:$0xf]
  %v717 = vld [vmem:[%s5 + $0x8] sm:$0xf]
  %v718 = vld [vmem:[%s5 + $0xc] sm:$0xf]
  %v719 = vld [vmem:[%s5 + $0x10] sm:$0xf]
  %v720 = vld [vmem:[%s5 + $0x14] sm:$0xf]
  %v721 = vld [vmem:[%s5 + $0x18] sm:$0xf]
  %v722 = vld [vmem:[%s5 + $0x1c] sm:$0xf]
  %v723 = vld [vmem:[%s5 + $0x20] sm:$0xf]
  %v724 = vld [vmem:[%s5 + $0x24] sm:$0xf]
  %v725 = vld [vmem:[%s5 + $0x28] sm:$0xf]
  %v726 = vld [vmem:[%s5 + $0x2c] sm:$0xf]
  %v727 = vld [vmem:[%s5 + $0x30] sm:$0xf]
  %v728 = vld [vmem:[%s5 + $0x34] sm:$0xf]
  %v729 = vld [vmem:[%s5 + $0x38] sm:$0xf]
  %v730 = vld [vmem:[%s5 + $0x3c] sm:$0xf]
  %v731 = vld [vmem:[%s6] sm:$0x1]
  %v733 = vlaneseq
  %v734 = vshrl.u32 %v733, 7
  %v735 = vsub.s32 0, %v734
  %v736 = vrot.slane %v731, %v735
  %v754 = vunpack.c.l.b16 %v715
  %v755 = vunpack.c.l.b16 %v716
  %v756 = vunpack.c.l.b16 %v717
  %v757 = vunpack.c.l.b16 %v718
  %v758 = vunpack.c.l.b16 %v719
  %v759 = vunpack.c.l.b16 %v720
  %v760 = vunpack.c.l.b16 %v721
  %v761 = vunpack.c.l.b16 %v722
  %v762 = vunpack.c.l.b16 %v723
  %v763 = vunpack.c.l.b16 %v724
  %v764 = vunpack.c.l.b16 %v725
  %v765 = vunpack.c.l.b16 %v726
  %v766 = vunpack.c.l.b16 %v727
  %v767 = vunpack.c.l.b16 %v728
  %v768 = vunpack.c.l.b16 %v729
  %v769 = vunpack.c.l.b16 %v730
  %v770 = vpack.c.b16 %v755, %v754
  %v771 = vpack.c.b16 %v757, %v756
  %v772 = vpack.c.b16 %v759, %v758
  %v773 = vpack.c.b16 %v761, %v760
  %v774 = vpack.c.b16 %v763, %v762
  %v775 = vpack.c.b16 %v765, %v764
  %v776 = vpack.c.b16 %v767, %v766
  %v777 = vpack.c.b16 %v769, %v768
  %786 = vmatprep.subr.bf16.mxu0 0
  %787 = vmatpush1.bf16.msra.mxu0 %v770
  %788 = vmatprep.subr.bf16.mxu0 0
  %789 = vmatpush1.bf16.msra.mxu0 %v771
  %790 = vmatprep.subr.bf16.mxu0 0
  %791 = vmatpush1.bf16.msra.mxu0 %v772
  %792 = vmatprep.subr.bf16.mxu0 0
  %793 = vmatpush1.bf16.msra.mxu0 %v773
  %794 = vmatprep.subr.bf16.mxu0 0
  %795 = vmatpush1.bf16.msra.mxu0 %v774
  %796 = vmatprep.subr.bf16.mxu0 0
  %797 = vmatpush1.bf16.msra.mxu0 %v775
  %798 = vmatprep.subr.bf16.mxu0 0
  %799 = vmatpush1.bf16.msra.mxu0 %v776
  %800 = vmatprep.subr.bf16.mxu0 0
  %801 = vmatpush1.bf16.msra.mxu0 %v777
  %802 = vmatprep.subr.bf16.mxu0 0
  %803 = vmatpush1.bf16.msra.mxu0 0
  %804 = vmatprep.subr.bf16.mxu0 0
  %805 = vmatpush1.bf16.msra.mxu0 0
  %806 = vmatprep.subr.bf16.mxu0 0
  %807 = vmatpush1.bf16.msra.mxu0 0
  %808 = vmatprep.subr.bf16.mxu0 0
  %809 = vmatpush1.bf16.msra.mxu0 0
  %810 = vmatprep.subr.bf16.mxu0 0
  %811 = vmatpush1.bf16.msra.mxu0 0
  %812 = vmatprep.subr.bf16.mxu0 0
  %813 = vmatpush1.bf16.msra.mxu0 0
  %814 = vmatprep.subr.bf16.mxu0 0
  %815 = vmatpush1.bf16.msra.mxu0 0
  %816 = vmatprep.subr.bf16.mxu0 0
  %817 = vmatpush1.bf16.msra.mxu0 0
  %818 = vmatprep.mubr.bf16.mxu0 0
  %819 = vmatmul.mubr.bf16.gmra.mrb[0].mxu0 %v699
  %v820 = vpop.f32.mrb[0].mxu0
  %v821 = vadd.f32 %v736, %v820
  %v822 = vpop.f32.mrb[0].mxu0
  %v823 = vpop.f32.mrb[0].mxu0
  %v824 = vadd.f32 %v736, %v823
  %v825 = vpop.f32.mrb[0].mxu0
  %826 = vmatprep.mubr.bf16.mxu0 0
  %827 = vmatmul.mubr.bf16.gmra.mrb[0].mxu0 %v700
  %v828 = vpop.f32.mrb[0].mxu0
  %v829 = vadd.f32 %v736, %v828
  %v830 = vpop.f32.mrb[0].mxu0
  %v831 = vpop.f32.mrb[0].mxu0
  %v832 = vadd.f32 %v736, %v831
  %v833 = vpop.f32.mrb[0].mxu0
  %834 = vmatprep.mubr.bf16.mxu0 0
  %835 = vmatmul.mubr.bf16.gmra.mrb[0].mxu0 %v701
  %v836 = vpop.f32.mrb[0].mxu0
  %v837 = vadd.f32 %v736, %v836
  %v838 = vpop.f32.mrb[0].mxu0
  %v839 = vpop.f32.mrb[0].mxu0
  %v840 = vadd.f32 %v736, %v839
  %v841 = vpop.f32.mrb[0].mxu0
  %842 = vmatprep.mubr.bf16.mxu0 0
  %843 = vmatmul.mubr.bf16.gmra.mrb[0].mxu0 %v702
  %v844 = vpop.f32.mrb[0].mxu0
  %v845 = vadd.f32 %v736, %v844
  %v846 = vpop.f32.mrb[0].mxu0
  %v847 = vpop.f32.mrb[0].mxu0
  %v848 = vadd.f32 %v736, %v847
  %v849 = vpop.f32.mrb[0].mxu0
  %850 = vmatprep.mubr.bf16.mxu0 0
  %851 = vmatmul.mubr.bf16.gmra.mrb[0].mxu0 %v703
  %v852 = vpop.f32.mrb[0].mxu0
  %v853 = vadd.f32 %v736, %v852
  %v854 = vpop.f32.mrb[0].mxu0
  %v855 = vpop.f32.mrb[0].mxu0
  %v856 = vadd.f32 %v736, %v855
  %v857 = vpop.f32.mrb[0].mxu0
  %858 = vmatprep.mubr.bf16.mxu0 0
  %859 = vmatmul.mubr.bf16.gmra.mrb[0].mxu0 %v704
  %v860 = vpop.f32.mrb[0].mxu0
  %v861 = vadd.f32 %v736, %v860
  %v862 = vpop.f32.mrb[0].mxu0
  %v863 = vpop.f32.mrb[0].mxu0
  %v864 = vadd.f32 %v736, %v863
  %v865 = vpop.f32.mrb[0].mxu0
  %866 = vmatprep.mubr.bf16.mxu0 0
  %867 = vmatmul.mubr.bf16.gmra.mrb[0].mxu0 %v705
  %v868 = vpop.f32.mrb[0].mxu0
  %v869 = vadd.f32 %v736, %v868
  %v870 = vpop.f32.mrb[0].mxu0
  %v871 = vpop.f32.mrb[0].mxu0
  %v872 = vadd.f32 %v736, %v871
  %v873 = vpop.f32.mrb[0].mxu0
  %874 = vmatprep.mubr.bf16.mxu0 0
  %875 = vmatmul.mubr.bf16.gmra.mrb[0].mxu0 %v706
  %v876 = vpop.f32.mrb[0].mxu0
  %v877 = vadd.f32 %v736, %v876
  %v878 = vpop.f32.mrb[0].mxu0
  %v879 = vpop.f32.mrb[0].mxu0
  %v880 = vadd.f32 %v736, %v879
  %v881 = vpop.f32.mrb[0].mxu0
  %882 = vmatprep.mubr.bf16.mxu0 0
  %883 = vmatmul.mubr.bf16.gmra.mrb[0].mxu0 %v707
  %v884 = vpop.f32.mrb[0].mxu0
  %v885 = vadd.f32 %v736, %v884
  %v886 = vpop.f32.mrb[0].mxu0
  %v887 = vpop.f32.mrb[0].mxu0
  %v888 = vadd.f32 %v736, %v887
  %v889 = vpop.f32.mrb[0].mxu0
  %890 = vmatprep.mubr.bf16.mxu0 0
  %891 = vmatmul.mubr.bf16.gmra.mrb[0].mxu0 %v708
  %v892 = vpop.f32.mrb[0].mxu0
  %v893 = vadd.f32 %v736, %v892
  %v894 = vpop.f32.mrb[0].mxu0
  %v895 = vpop.f32.mrb[0].mxu0
  %v896 = vadd.f32 %v736, %v895
  %v897 = vpop.f32.mrb[0].mxu0
  %898 = vmatprep.mubr.bf16.mxu0 0
  %899 = vmatmul.mubr.bf16.gmra.mrb[0].mxu0 %v709
  %v900 = vpop.f32.mrb[0].mxu0
  %v901 = vadd.f32 %v736, %v900
  %v902 = vpop.f32.mrb[0].mxu0
  %v903 = vpop.f32.mrb[0].mxu0
  %v904 = vadd.f32 %v736, %v903
  %v905 = vpop.f32.mrb[0].mxu0
  %906 = vmatprep.mubr.bf16.mxu0 0
  %907 = vmatmul.mubr.bf16.gmra.mrb[0].mxu0 %v710
  %v908 = vpop.f32.mrb[0].mxu0
  %v909 = vadd.f32 %v736, %v908
  %v910 = vpop.f32.mrb[0].mxu0
  %v911 = vpop.f32.mrb[0].mxu0
  %v912 = vadd.f32 %v736, %v911
  %v913 = vpop.f32.mrb[0].mxu0
  %914 = vmatprep.mubr.bf16.mxu0 0
  %915 = vmatmul.mubr.bf16.gmra.mrb[0].mxu0 %v711
  %v916 = vpop.f32.mrb[0].mxu0
  %v917 = vadd.f32 %v736, %v916
  %v918 = vpop.f32.mrb[0].mxu0
  %v919 = vpop.f32.mrb[0].mxu0
  %v920 = vadd.f32 %v736, %v919
  %v921 = vpop.f32.mrb[0].mxu0
  %922 = vmatprep.mubr.bf16.mxu0 0
  %923 = vmatmul.mubr.bf16.gmra.mrb[0].mxu0 %v712
  %v924 = vpop.f32.mrb[0].mxu0
  %v925 = vadd.f32 %v736, %v924
  %v926 = vpop.f32.mrb[0].mxu0
  %v927 = vpop.f32.mrb[0].mxu0
  %v928 = vadd.f32 %v736, %v927
  %v929 = vpop.f32.mrb[0].mxu0
  %930 = vmatprep.mubr.bf16.mxu0 0
  %931 = vmatmul.mubr.bf16.gmra.mrb[0].mxu0 %v713
  %v932 = vpop.f32.mrb[0].mxu0
  %v933 = vadd.f32 %v736, %v932
  %v934 = vpop.f32.mrb[0].mxu0
  %v935 = vpop.f32.mrb[0].mxu0
  %v936 = vadd.f32 %v736, %v935
  %v937 = vpop.f32.mrb[0].mxu0
  %938 = vmatprep.mubr.bf16.mxu0 0
  %939 = vmatmul.mubr.bf16.gmra.mrb[0].mxu0 %v714
  %v940 = vpop.f32.mrb[0].mxu0
  %v941 = vadd.f32 %v736, %v940
  %v942 = vpop.f32.mrb[0].mxu0
  %v943 = vpop.f32.mrb[0].mxu0
  %v944 = vadd.f32 %v736, %v943
  %v945 = vpop.f32.mrb[0].mxu0
  %946 = vdwg.mxu0
  %v947 = vmax.f32 %v821, 0.0
  %v948 = vmax.f32 %v824, 0.0
  %v949 = vmax.f32 %v829, 0.0
  %v950 = vmax.f32 %v832, 0.0
  %v951 = vmax.f32 %v837, 0.0
  %v952 = vmax.f32 %v840, 0.0
  %v953 = vmax.f32 %v845, 0.0
  %v954 = vmax.f32 %v848, 0.0
  %v955 = vmax.f32 %v853, 0.0
  %v956 = vmax.f32 %v856, 0.0
  %v957 = vmax.f32 %v861, 0.0
  %v958 = vmax.f32 %v864, 0.0
  %v959 = vmax.f32 %v869, 0.0
  %v960 = vmax.f32 %v872, 0.0
  %v961 = vmax.f32 %v877, 0.0
  %v962 = vmax.f32 %v880, 0.0
  %v963 = vmax.f32 %v885, 0.0
  %v964 = vmax.f32 %v888, 0.0
  %v965 = vmax.f32 %v893, 0.0
  %v966 = vmax.f32 %v896, 0.0
  %v967 = vmax.f32 %v901, 0.0
  %v968 = vmax.f32 %v904, 0.0
  %v969 = vmax.f32 %v909, 0.0
  %v970 = vmax.f32 %v912, 0.0
  %v971 = vmax.f32 %v917, 0.0
  %v972 = vmax.f32 %v920, 0.0
  %v973 = vmax.f32 %v925, 0.0
  %v974 = vmax.f32 %v928, 0.0
  %v975 = vmax.f32 %v933, 0.0
  %v976 = vmax.f32 %v936, 0.0
  %v977 = vmax.f32 %v941, 0.0
  %v978 = vmax.f32 %v944, 0.0
  %v979 = vrot.slane %v947, 4
  %v980 = vmax.f32 %v947, %v979
  %v981 = vrot.slane %v980, 2
  %v982 = vmax.f32 %v980, %v981
  %v983 = vrot.slane %v982, 1
  %v984 = vmax.f32 %v982, %v983
  %v985 = vrot.slane %v948, 4
  %v986 = vmax.f32 %v948, %v985
  %v987 = vrot.slane %v986, 2
  %v988 = vmax.f32 %v986, %v987
  %v989 = vrot.slane %v988, 1
  %v990 = vmax.f32 %v988, %v989
  %v991 = vrot.slane %v949, 4
  %v992 = vmax.f32 %v949, %v991
  %v993 = vrot.slane %v992, 2
  %v994 = vmax.f32 %v992, %v993
  %v995 = vrot.slane %v994, 1
  %v996 = vmax.f32 %v994, %v995
  %v997 = vrot.slane %v950, 4
  %v998 = vmax.f32 %v950, %v997
  %v999 = vrot.slane %v998, 2
  %v1000 = vmax.f32 %v998, %v999
  %v1001 = vrot.slane %v1000, 1
  %v1002 = vmax.f32 %v1000, %v1001
  %v1003 = vrot.slane %v951, 4
  %v1004 = vmax.f32 %v951, %v1003
  %v1005 = vrot.slane %v1004, 2
  %v1006 = vmax.f32 %v1004, %v1005
  %v1007 = vrot.slane %v1006, 1
  %v1008 = vmax.f32 %v1006, %v1007
  %v1009 = vrot.slane %v952, 4
  %v1010 = vmax.f32 %v952, %v1009
  %v1011 = vrot.slane %v1010, 2
  %v1012 = vmax.f32 %v1010, %v1011
  %v1013 = vrot.slane %v1012, 1
  %v1014 = vmax.f32 %v1012, %v1013
  %v1015 = vrot.slane %v953, 4
  %v1016 = vmax.f32 %v953, %v1015
  %v1017 = vrot.slane %v1016, 2
  %v1018 = vmax.f32 %v1016, %v1017
  %v1019 = vrot.slane %v1018, 1
  %v1020 = vmax.f32 %v1018, %v1019
  %v1021 = vrot.slane %v954, 4
  %v1022 = vmax.f32 %v954, %v1021
  %v1023 = vrot.slane %v1022, 2
  %v1024 = vmax.f32 %v1022, %v1023
  %v1025 = vrot.slane %v1024, 1
  %v1026 = vmax.f32 %v1024, %v1025
  %v1027 = vrot.slane %v955, 4
  %v1028 = vmax.f32 %v955, %v1027
  %v1029 = vrot.slane %v1028, 2
  %v1030 = vmax.f32 %v1028, %v1029
  %v1031 = vrot.slane %v1030, 1
  %v1032 = vmax.f32 %v1030, %v1031
  %v1033 = vrot.slane %v956, 4
  %v1034 = vmax.f32 %v956, %v1033
  %v1035 = vrot.slane %v1034, 2
  %v1036 = vmax.f32 %v1034, %v1035
  %v1037 = vrot.slane %v1036, 1
  %v1038 = vmax.f32 %v1036, %v1037
  %v1039 = vrot.slane %v957, 4
  %v1040 = vmax.f32 %v957, %v1039
  %v1041 = vrot.slane %v1040, 2
  %v1042 = vmax.f32 %v1040, %v1041
  %v1043 = vrot.slane %v1042, 1
  %v1044 = vmax.f32 %v1042, %v1043
  %v1045 = vrot.slane %v958, 4
  %v1046 = vmax.f32 %v958, %v1045
  %v1047 = vrot.slane %v1046, 2
  %v1048 = vmax.f32 %v1046, %v1047
  %v1049 = vrot.slane %v1048, 1
  %v1050 = vmax.f32 %v1048, %v1049
  %v1051 = vrot.slane %v959, 4
  %v1052 = vmax.f32 %v959, %v1051
  %v1053 = vrot.slane %v1052, 2
  %v1054 = vmax.f32 %v1052, %v1053
  %v1055 = vrot.slane %v1054, 1
  %v1056 = vmax.f32 %v1054, %v1055
  %v1057 = vrot.slane %v960, 4
  %v1058 = vmax.f32 %v960, %v1057
  %v1059 = vrot.slane %v1058, 2
  %v1060 = vmax.f32 %v1058, %v1059
  %v1061 = vrot.slane %v1060, 1
  %v1062 = vmax.f32 %v1060, %v1061
  %v1063 = vrot.slane %v961, 4
  %v1064 = vmax.f32 %v961, %v1063
  %v1065 = vrot.slane %v1064, 2
  %v1066 = vmax.f32 %v1064, %v1065
  %v1067 = vrot.slane %v1066, 1
  %v1068 = vmax.f32 %v1066, %v1067
  %v1069 = vrot.slane %v962, 4
  %v1070 = vmax.f32 %v962, %v1069
  %v1071 = vrot.slane %v1070, 2
  %v1072 = vmax.f32 %v1070, %v1071
  %v1073 = vrot.slane %v1072, 1
  %v1074 = vmax.f32 %v1072, %v1073
  %v1075 = vrot.slane %v963, 4
  %v1076 = vmax.f32 %v963, %v1075
  %v1077 = vrot.slane %v1076, 2
  %v1078 = vmax.f32 %v1076, %v1077
  %v1079 = vrot.slane %v1078, 1
  %v1080 = vmax.f32 %v1078, %v1079
  %v1081 = vrot.slane %v964, 4
  %v1082 = vmax.f32 %v964, %v1081
  %v1083 = vrot.slane %v1082, 2
  %v1084 = vmax.f32 %v1082, %v1083
  %v1085 = vrot.slane %v1084, 1
  %v1086 = vmax.f32 %v1084, %v1085
  %v1087 = vrot.slane %v965, 4
  %v1088 = vmax.f32 %v965, %v1087
  %v1089 = vrot.slane %v1088, 2
  %v1090 = vmax.f32 %v1088, %v1089
  %v1091 = vrot.slane %v1090, 1
  %v1092 = vmax.f32 %v1090, %v1091
  %v1093 = vrot.slane %v966, 4
  %v1094 = vmax.f32 %v966, %v1093
  %v1095 = vrot.slane %v1094, 2
  %v1096 = vmax.f32 %v1094, %v1095
  %v1097 = vrot.slane %v1096, 1
  %v1098 = vmax.f32 %v1096, %v1097
  %v1099 = vrot.slane %v967, 4
  %v1100 = vmax.f32 %v967, %v1099
  %v1101 = vrot.slane %v1100, 2
  %v1102 = vmax.f32 %v1100, %v1101
  %v1103 = vrot.slane %v1102, 1
  %v1104 = vmax.f32 %v1102, %v1103
  %v1105 = vrot.slane %v968, 4
  %v1106 = vmax.f32 %v968, %v1105
  %v1107 = vrot.slane %v1106, 2
  %v1108 = vmax.f32 %v1106, %v1107
  %v1109 = vrot.slane %v1108, 1
  %v1110 = vmax.f32 %v1108, %v1109
  %v1111 = vrot.slane %v969, 4
  %v1112 = vmax.f32 %v969, %v1111
  %v1113 = vrot.slane %v1112, 2
  %v1114 = vmax.f32 %v1112, %v1113
  %v1115 = vrot.slane %v1114, 1
  %v1116 = vmax.f32 %v1114, %v1115
  %v1117 = vrot.slane %v970, 4
  %v1118 = vmax.f32 %v970, %v1117
  %v1119 = vrot.slane %v1118, 2
  %v1120 = vmax.f32 %v1118, %v1119
  %v1121 = vrot.slane %v1120, 1
  %v1122 = vmax.f32 %v1120, %v1121
  %v1123 = vrot.slane %v971, 4
  %v1124 = vmax.f32 %v971, %v1123
  %v1125 = vrot.slane %v1124, 2
  %v1126 = vmax.f32 %v1124, %v1125
  %v1127 = vrot.slane %v1126, 1
  %v1128 = vmax.f32 %v1126, %v1127
  %v1129 = vrot.slane %v972, 4
  %v1130 = vmax.f32 %v972, %v1129
  %v1131 = vrot.slane %v1130, 2
  %v1132 = vmax.f32 %v1130, %v1131
  %v1133 = vrot.slane %v1132, 1
  %v1134 = vmax.f32 %v1132, %v1133
  %v1135 = vrot.slane %v973, 4
  %v1136 = vmax.f32 %v973, %v1135
  %v1137 = vrot.slane %v1136, 2
  %v1138 = vmax.f32 %v1136, %v1137
  %v1139 = vrot.slane %v1138, 1
  %v1140 = vmax.f32 %v1138, %v1139
  %v1141 = vrot.slane %v974, 4
  %v1142 = vmax.f32 %v974, %v1141
  %v1143 = vrot.slane %v1142, 2
  %v1144 = vmax.f32 %v1142, %v1143
  %v1145 = vrot.slane %v1144, 1
  %v1146 = vmax.f32 %v1144, %v1145
  %v1147 = vrot.slane %v975, 4
  %v1148 = vmax.f32 %v975, %v1147
  %v1149 = vrot.slane %v1148, 2
  %v1150 = vmax.f32 %v1148, %v1149
  %v1151 = vrot.slane %v1150, 1
  %v1152 = vmax.f32 %v1150, %v1151
  %v1153 = vrot.slane %v976, 4
  %v1154 = vmax.f32 %v976, %v1153
  %v1155 = vrot.slane %v1154, 2
  %v1156 = vmax.f32 %v1154, %v1155
  %v1157 = vrot.slane %v1156, 1
  %v1158 = vmax.f32 %v1156, %v1157
  %v1159 = vrot.slane %v977, 4
  %v1160 = vmax.f32 %v977, %v1159
  %v1161 = vrot.slane %v1160, 2
  %v1162 = vmax.f32 %v1160, %v1161
  %v1163 = vrot.slane %v1162, 1
  %v1164 = vmax.f32 %v1162, %v1163
  %v1165 = vrot.slane %v978, 4
  %v1166 = vmax.f32 %v978, %v1165
  %v1167 = vrot.slane %v1166, 2
  %v1168 = vmax.f32 %v1166, %v1167
  %v1169 = vrot.slane %v1168, 1
  %v1170 = vmax.f32 %v1168, %v1169
  %v1171 = vpack.c.bf16 %v984, %v984
  %v1172 = vpack.c.bf16 %v990, %v990
  %v1173 = vpack.c.bf16 %v996, %v996
  %v1174 = vpack.c.bf16 %v1002, %v1002
  %v1175 = vpack.c.bf16 %v1008, %v1008
  %v1176 = vpack.c.bf16 %v1014, %v1014
  %v1177 = vpack.c.bf16 %v1020, %v1020
  %v1178 = vpack.c.bf16 %v1026, %v1026
  %v1179 = vpack.c.bf16 %v1032, %v1032
  %v1180 = vpack.c.bf16 %v1038, %v1038
  %v1181 = vpack.c.bf16 %v1044, %v1044
  %v1182 = vpack.c.bf16 %v1050, %v1050
  %v1183 = vpack.c.bf16 %v1056, %v1056
  %v1184 = vpack.c.bf16 %v1062, %v1062
  %v1185 = vpack.c.bf16 %v1068, %v1068
  %v1186 = vpack.c.bf16 %v1074, %v1074
  %v1187 = vpack.c.bf16 %v1080, %v1080
  %v1188 = vpack.c.bf16 %v1086, %v1086
  %v1189 = vpack.c.bf16 %v1092, %v1092
  %v1190 = vpack.c.bf16 %v1098, %v1098
  %v1191 = vpack.c.bf16 %v1104, %v1104
  %v1192 = vpack.c.bf16 %v1110, %v1110
  %v1193 = vpack.c.bf16 %v1116, %v1116
  %v1194 = vpack.c.bf16 %v1122, %v1122
  %v1195 = vpack.c.bf16 %v1128, %v1128
  %v1196 = vpack.c.bf16 %v1134, %v1134
  %v1197 = vpack.c.bf16 %v1140, %v1140
  %v1198 = vpack.c.bf16 %v1146, %v1146
  %v1199 = vpack.c.bf16 %v1152, %v1152
  %v1200 = vpack.c.bf16 %v1158, %v1158
  %v1201 = vpack.c.bf16 %v1164, %v1164
  %v1202 = vpack.c.bf16 %v1170, %v1170
  %v1235 = vunpack.c.l.b16 %v1171
  %v1236 = vunpack.c.l.b16 %v1172
  %v1237 = vunpack.c.l.b16 %v1173
  %v1238 = vunpack.c.l.b16 %v1174
  %v1239 = vunpack.c.l.b16 %v1175
  %v1240 = vunpack.c.l.b16 %v1176
  %v1241 = vunpack.c.l.b16 %v1177
  %v1242 = vunpack.c.l.b16 %v1178
  %v1243 = vunpack.c.l.b16 %v1179
  %v1244 = vunpack.c.l.b16 %v1180
  %v1245 = vunpack.c.l.b16 %v1181
  %v1246 = vunpack.c.l.b16 %v1182
  %v1247 = vunpack.c.l.b16 %v1183
  %v1248 = vunpack.c.l.b16 %v1184
  %v1249 = vunpack.c.l.b16 %v1185
  %v1250 = vunpack.c.l.b16 %v1186
  %v1251 = vunpack.c.l.b16 %v1187
  %v1252 = vunpack.c.l.b16 %v1188
  %v1253 = vunpack.c.l.b16 %v1189
  %v1254 = vunpack.c.l.b16 %v1190
  %v1255 = vunpack.c.l.b16 %v1191
  %v1256 = vunpack.c.l.b16 %v1192
  %v1257 = vunpack.c.l.b16 %v1193
  %v1258 = vunpack.c.l.b16 %v1194
  %v1259 = vunpack.c.l.b16 %v1195
  %v1260 = vunpack.c.l.b16 %v1196
  %v1261 = vunpack.c.l.b16 %v1197
  %v1262 = vunpack.c.l.b16 %v1198
  %v1263 = vunpack.c.l.b16 %v1199
  %v1264 = vunpack.c.l.b16 %v1200
  %v1265 = vunpack.c.l.b16 %v1201
  %v1266 = vunpack.c.l.b16 %v1202
  %v1267 = vpack.c.b16 %v1235, %v1235
  %v1268 = vpack.c.b16 %v1236, %v1236
  %v1269 = vpack.c.b16 %v1237, %v1237
  %v1270 = vpack.c.b16 %v1238, %v1238
  %v1271 = vpack.c.b16 %v1239, %v1239
  %v1272 = vpack.c.b16 %v1240, %v1240
  %v1273 = vpack.c.b16 %v1241, %v1241
  %v1274 = vpack.c.b16 %v1242, %v1242
  %v1275 = vpack.c.b16 %v1243, %v1243
  %v1276 = vpack.c.b16 %v1244, %v1244
  %v1277 = vpack.c.b16 %v1245, %v1245
  %v1278 = vpack.c.b16 %v1246, %v1246
  %v1279 = vpack.c.b16 %v1247, %v1247
  %v1280 = vpack.c.b16 %v1248, %v1248
  %v1281 = vpack.c.b16 %v1249, %v1249
  %v1282 = vpack.c.b16 %v1250, %v1250
  %v1283 = vpack.c.b16 %v1251, %v1251
  %v1284 = vpack.c.b16 %v1252, %v1252
  %v1285 = vpack.c.b16 %v1253, %v1253
  %v1286 = vpack.c.b16 %v1254, %v1254
  %v1287 = vpack.c.b16 %v1255, %v1255
  %v1288 = vpack.c.b16 %v1256, %v1256
  %v1289 = vpack.c.b16 %v1257, %v1257
  %v1290 = vpack.c.b16 %v1258, %v1258
  %v1291 = vpack.c.b16 %v1259, %v1259
  %v1292 = vpack.c.b16 %v1260, %v1260
  %v1293 = vpack.c.b16 %v1261, %v1261
  %v1294 = vpack.c.b16 %v1262, %v1262
  %v1295 = vpack.c.b16 %v1263, %v1263
  %v1296 = vpack.c.b16 %v1264, %v1264
  %v1297 = vpack.c.b16 %v1265, %v1265
  %v1298 = vpack.c.b16 %v1266, %v1266
  %v1299 = vunpack.c.l.b16 %v1267
  %v1300 = vunpack.c.l.b16 %v1268
  %v1301 = vunpack.c.l.b16 %v1269
  %v1302 = vunpack.c.l.b16 %v1270
  %v1303 = vunpack.c.l.b16 %v1271
  %v1304 = vunpack.c.l.b16 %v1272
  %v1305 = vunpack.c.l.b16 %v1273
  %v1306 = vunpack.c.l.b16 %v1274
  %v1307 = vunpack.c.l.b16 %v1275
  %v1308 = vunpack.c.l.b16 %v1276
  %v1309 = vunpack.c.l.b16 %v1277
  %v1310 = vunpack.c.l.b16 %v1278
  %v1311 = vunpack.c.l.b16 %v1279
  %v1312 = vunpack.c.l.b16 %v1280
  %v1313 = vunpack.c.l.b16 %v1281
  %v1314 = vunpack.c.l.b16 %v1282
  %v1315 = vunpack.c.l.b16 %v1283
  %v1316 = vunpack.c.l.b16 %v1284
  %v1317 = vunpack.c.l.b16 %v1285
  %v1318 = vunpack.c.l.b16 %v1286
  %v1319 = vunpack.c.l.b16 %v1287
  %v1320 = vunpack.c.l.b16 %v1288
  %v1321 = vunpack.c.l.b16 %v1289
  %v1322 = vunpack.c.l.b16 %v1290
  %v1323 = vunpack.c.l.b16 %v1291
  %v1324 = vunpack.c.l.b16 %v1292
  %v1325 = vunpack.c.l.b16 %v1293
  %v1326 = vunpack.c.l.b16 %v1294
  %v1327 = vunpack.c.l.b16 %v1295
  %v1328 = vunpack.c.l.b16 %v1296
  %v1329 = vunpack.c.l.b16 %v1297
  %v1330 = vunpack.c.l.b16 %v1298
  %vm1331 = vcmask 1041409
  %v1332 = vsel %vm1331, %v1300, %v1299
  %vm1333 = vcmask 1042434
  %v1334 = vsel %vm1333, %v1301, %v1332
  %vm1335 = vcmask 1043459
  %v1336 = vsel %vm1335, %v1302, %v1334
  %vm1337 = vcmask 1044484
  %v1338 = vsel %vm1337, %v1303, %v1336
  %vm1339 = vcmask 1045509
  %v1340 = vsel %vm1339, %v1304, %v1338
  %vm1341 = vcmask 1046534
  %v1342 = vsel %vm1341, %v1305, %v1340
  %vm1343 = vcmask 1047559
  %v1344 = vsel %vm1343, %v1306, %v1342
  %v1345 = vsel %vm1331, %v1308, %v1307
  %v1346 = vsel %vm1333, %v1309, %v1345
  %v1347 = vsel %vm1335, %v1310, %v1346
  %v1348 = vsel %vm1337, %v1311, %v1347
  %v1349 = vsel %vm1339, %v1312, %v1348
  %v1350 = vsel %vm1341, %v1313, %v1349
  %v1351 = vsel %vm1343, %v1314, %v1350
  %v1352 = vsel %vm1331, %v1316, %v1315
  %v1353 = vsel %vm1333, %v1317, %v1352
  %v1354 = vsel %vm1335, %v1318, %v1353
  %v1355 = vsel %vm1337, %v1319, %v1354
  %v1356 = vsel %vm1339, %v1320, %v1355
  %v1357 = vsel %vm1341, %v1321, %v1356
  %v1358 = vsel %vm1343, %v1322, %v1357
  %v1359 = vsel %vm1331, %v1324, %v1323
  %v1360 = vsel %vm1333, %v1325, %v1359
  %v1361 = vsel %vm1335, %v1326, %v1360
  %v1362 = vsel %vm1337, %v1327, %v1361
  %v1363 = vsel %vm1339, %v1328, %v1362
  %v1364 = vsel %vm1341, %v1329, %v1363
  %v1365 = vsel %vm1343, %v1330, %v1364
  %v1366 = vpack.c.b16 %v1344, %v1344
  %v1367 = vpack.c.b16 %v1351, %v1351
  %v1368 = vpack.c.b16 %v1358, %v1358
  %v1369 = vpack.c.b16 %v1365, %v1365
  %1374 = vst [vmem:[%s7] sm:$0xf] %v1366
  %1375 = vst [vmem:[%s7 + $0x4] sm:$0xf] %v1367
  %1376 = vst [vmem:[%s7 + $0x8] sm:$0xf] %v1368
  %1377 = vst [vmem:[%s7 + $0xc] sm:$0xf] %v1369
  // Predicated region
  $region30: #{pointnet2_cls_forward.3} parent=0 // pred_check
    _
  $region31: #{pointnet2_cls_forward.3} parent=0 // pred_check_branch
    %1379 = sbr.rel (0) target = $region33
  $region32: #{pointnet2_cls_forward.3} parent=0 // pred_region
    _
  $region33: #{pointnet2_cls_forward.3} parent=0 // pred_fallthru
    _
  // Predicated region
  $region34: #{pointnet2_cls_forward.3} parent=0 // pred_check
    _
  $region35: #{pointnet2_cls_forward.3} parent=0 // pred_check_branch
    %1381 = sbr.rel (0) target = $region37
  $region36: #{pointnet2_cls_forward.3} parent=0 // pred_region
    _
  $region37: #{pointnet2_cls_forward.3} parent=0 // pred_fallthru
    _

// kernel: neg.11
$region0: #{neg.11}
  #allocation0 [shape = 's32[1]{0}', space=sflag, size = 0x4, scoped, tag = 'scoped memory for neg.11']
  %s0 = inlined_call_operand.vmem [shape: s32[2,1,8], index: 0, kind: input, shape index: {}]
  %s1 = inlined_call_operand.vmem [shape: s32[2,1,8], index: 1, kind: output, shape index: {}]
  %v2 = vld [vmem:[%s0] sm:$0xff]
  %3 = xla_tuple %v2
  %4 = xla_tuple %3
  %v5 = vsub.s32 0, %v2
  %6 = xla_tuple %v5
  %7 = vst [vmem:[%s1] sm:$0xff] %v5

// kernel: pointnet2_cls_forward.4
$region0: #{pointnet2_cls_forward.4}
  #allocation0 [shape = 'u32[]', space=smem, size = 0x4, offset = 0x4, fixed_abs, tag = 'smem constant byte address 0x4 - core index']
  #allocation1 [shape = 'u32[144,128]{1,0:T(1,128)}', space=vmem, size = 0x12000, scoped, tag = 'internal scratch']
  %s0 = inlined_call_operand.vmem [shape: bf16[128,128], index: 0, kind: input, shape index: {}]
  %s1 = inlined_call_operand.vmem [shape: bf16[128,128], index: 1, kind: input, shape index: {}]
  %s2 = inlined_call_operand.vmem [shape: f32[1,128], index: 2, kind: input, shape index: {}]
  %s3 = inlined_call_operand.vmem [shape: bf16[128,128], index: 3, kind: input, shape index: {}]
  %s4 = inlined_call_operand.vmem [shape: f32[1,128], index: 4, kind: input, shape index: {}]
  %s5 = inlined_call_operand.vmem [shape: bf16[128,128], index: 5, kind: input, shape index: {}]
  %s6 = inlined_call_operand.vmem [shape: f32[1,128], index: 6, kind: input, shape index: {}]
  %s7 = inlined_call_operand.vmem [shape: bf16[16,128], index: 7, kind: output, shape index: {}]
  %s8 = sld [smem:[#allocation0]]
  $region38: #{pointnet2_cls_forward.4} parent=0
    _
  %s10 = ssub.s32 1, %s8
  %s11 = scalar_select 0, %s10, %s8
  // Predicated region
  $region2: #{pointnet2_cls_forward.4} parent=0 // pred_check
    _
  $region3: #{pointnet2_cls_forward.4} parent=0 // pred_check_branch
    %13 = sbr.rel (0) target = $region5
  $region4: #{pointnet2_cls_forward.4} parent=0 // pred_region
    _
  $region5: #{pointnet2_cls_forward.4} parent=0 // pred_fallthru
    _
  // Predicated region
  $region6: #{pointnet2_cls_forward.4} parent=0 // pred_check
    _
  $region7: #{pointnet2_cls_forward.4} parent=0 // pred_check_branch
    %15 = sbr.rel (0) target = $region9
  $region8: #{pointnet2_cls_forward.4} parent=0 // pred_region
    _
  $region9: #{pointnet2_cls_forward.4} parent=0 // pred_fallthru
    _
  // Predicated region
  $region10: #{pointnet2_cls_forward.4} parent=0 // pred_check
    _
  $region11: #{pointnet2_cls_forward.4} parent=0 // pred_check_branch
    %17 = sbr.rel (0) target = $region13
  $region12: #{pointnet2_cls_forward.4} parent=0 // pred_region
    _
  $region13: #{pointnet2_cls_forward.4} parent=0 // pred_fallthru
    _
  // Predicated region
  $region14: #{pointnet2_cls_forward.4} parent=0 // pred_check
    _
  $region15: #{pointnet2_cls_forward.4} parent=0 // pred_check_branch
    %19 = sbr.rel (0) target = $region17
  $region16: #{pointnet2_cls_forward.4} parent=0 // pred_region
    _
  $region17: #{pointnet2_cls_forward.4} parent=0 // pred_fallthru
    _
  // Predicated region
  $region18: #{pointnet2_cls_forward.4} parent=0 // pred_check
    _
  $region19: #{pointnet2_cls_forward.4} parent=0 // pred_check_branch
    %21 = sbr.rel (0) target = $region21
  $region20: #{pointnet2_cls_forward.4} parent=0 // pred_region
    _
  $region21: #{pointnet2_cls_forward.4} parent=0 // pred_fallthru
    _
  // Predicated region
  $region22: #{pointnet2_cls_forward.4} parent=0 // pred_check
    _
  $region23: #{pointnet2_cls_forward.4} parent=0 // pred_check_branch
    %23 = sbr.rel (0) target = $region25
  $region24: #{pointnet2_cls_forward.4} parent=0 // pred_region
    _
  $region25: #{pointnet2_cls_forward.4} parent=0 // pred_fallthru
    _
  // Predicated region
  $region26: #{pointnet2_cls_forward.4} parent=0 // pred_check
    _
  $region27: #{pointnet2_cls_forward.4} parent=0 // pred_check_branch
    %25 = sbr.rel (0) target = $region29
  $region28: #{pointnet2_cls_forward.4} parent=0 // pred_region
    _
  $region29: #{pointnet2_cls_forward.4} parent=0 // pred_fallthru
    _
  %v27 = vld [vmem:[%s0] sm:$0xf]
  %v28 = vld [vmem:[%s0 + $0x4] sm:$0xf]
  %v29 = vld [vmem:[%s0 + $0x8] sm:$0xf]
  %v30 = vld [vmem:[%s0 + $0xc] sm:$0xf]
  %v31 = vld [vmem:[%s0 + $0x10] sm:$0xf]
  %v32 = vld [vmem:[%s0 + $0x14] sm:$0xf]
  %v33 = vld [vmem:[%s0 + $0x18] sm:$0xf]
  %v34 = vld [vmem:[%s0 + $0x1c] sm:$0xf]
  %v35 = vld [vmem:[%s0 + $0x20] sm:$0xf]
  %v36 = vld [vmem:[%s0 + $0x24] sm:$0xf]
  %v37 = vld [vmem:[%s0 + $0x28] sm:$0xf]
  %v38 = vld [vmem:[%s0 + $0x2c] sm:$0xf]
  %v39 = vld [vmem:[%s0 + $0x30] sm:$0xf]
  %v40 = vld [vmem:[%s0 + $0x34] sm:$0xf]
  %v41 = vld [vmem:[%s0 + $0x38] sm:$0xf]
  %v42 = vld [vmem:[%s0 + $0x3c] sm:$0xf]
  %v43 = vld [vmem:[%s1] sm:$0xf]
  %v44 = vld [vmem:[%s1 + $0x4] sm:$0xf]
  %v45 = vld [vmem:[%s1 + $0x8] sm:$0xf]
  %v46 = vld [vmem:[%s1 + $0xc] sm:$0xf]
  %v47 = vld [vmem:[%s1 + $0x10] sm:$0xf]
  %v48 = vld [vmem:[%s1 + $0x14] sm:$0xf]
  %v49 = vld [vmem:[%s1 + $0x18] sm:$0xf]
  %v50 = vld [vmem:[%s1 + $0x1c] sm:$0xf]
  %v51 = vld [vmem:[%s1 + $0x20] sm:$0xf]
  %v52 = vld [vmem:[%s1 + $0x24] sm:$0xf]
  %v53 = vld [vmem:[%s1 + $0x28] sm:$0xf]
  %v54 = vld [vmem:[%s1 + $0x2c] sm:$0xf]
  %v55 = vld [vmem:[%s1 + $0x30] sm:$0xf]
  %v56 = vld [vmem:[%s1 + $0x34] sm:$0xf]
  %v57 = vld [vmem:[%s1 + $0x38] sm:$0xf]
  %v58 = vld [vmem:[%s1 + $0x3c] sm:$0xf]
  %v59 = vld [vmem:[%s2] sm:$0x1]
  %v61 = vlaneseq
  %v62 = vshrl.u32 %v61, 7
  %v63 = vsub.s32 0, %v62
  %v64 = vrot.slane %v59, %v63
  %v82 = vunpack.c.l.b16 %v27
  %v83 = vunpack.c.l.b16 %v28
  %v84 = vunpack.c.l.b16 %v29
  %v85 = vunpack.c.l.b16 %v30
  %v86 = vunpack.c.l.b16 %v31
  %v87 = vunpack.c.l.b16 %v32
  %v88 = vunpack.c.l.b16 %v33
  %v89 = vunpack.c.l.b16 %v34
  %v90 = vunpack.c.l.b16 %v35
  %v91 = vunpack.c.l.b16 %v36
  %v92 = vunpack.c.l.b16 %v37
  %v93 = vunpack.c.l.b16 %v38
  %v94 = vunpack.c.l.b16 %v39
  %v95 = vunpack.c.l.b16 %v40
  %v96 = vunpack.c.l.b16 %v41
  %v97 = vunpack.c.l.b16 %v42
  %v98 = vpack.c.b16 %v83, %v82
  %v99 = vpack.c.b16 %v85, %v84
  %v100 = vpack.c.b16 %v87, %v86
  %v101 = vpack.c.b16 %v89, %v88
  %v102 = vpack.c.b16 %v91, %v90
  %v103 = vpack.c.b16 %v93, %v92
  %v104 = vpack.c.b16 %v95, %v94
  %v105 = vpack.c.b16 %v97, %v96
  %v130 = vunpack.c.l.b16 %v43
  %v131 = vunpack.c.l.b16 %v44
  %v132 = vunpack.c.l.b16 %v45
  %v133 = vunpack.c.l.b16 %v46
  %v134 = vunpack.c.l.b16 %v47
  %v135 = vunpack.c.l.b16 %v48
  %v136 = vunpack.c.l.b16 %v49
  %v137 = vunpack.c.l.b16 %v50
  %v138 = vunpack.c.l.b16 %v51
  %v139 = vunpack.c.l.b16 %v52
  %v140 = vunpack.c.l.b16 %v53
  %v141 = vunpack.c.l.b16 %v54
  %v142 = vunpack.c.l.b16 %v55
  %v143 = vunpack.c.l.b16 %v56
  %v144 = vunpack.c.l.b16 %v57
  %v145 = vunpack.c.l.b16 %v58
  %v146 = vpack.c.b16 %v131, %v130
  %v147 = vpack.c.b16 %v133, %v132
  %v148 = vpack.c.b16 %v135, %v134
  %v149 = vpack.c.b16 %v137, %v136
  %v150 = vpack.c.b16 %v139, %v138
  %v151 = vpack.c.b16 %v141, %v140
  %v152 = vpack.c.b16 %v143, %v142
  %v153 = vpack.c.b16 %v145, %v144
  %162 = vmatprep.subr.bf16.mxu0 0
  %163 = vmatpush1.bf16.msra.mxu0 %v146
  %164 = vmatprep.subr.bf16.mxu0 0
  %165 = vmatpush1.bf16.msra.mxu0 %v147
  %166 = vmatprep.subr.bf16.mxu0 0
  %167 = vmatpush1.bf16.msra.mxu0 %v148
  %168 = vmatprep.subr.bf16.mxu0 0
  %169 = vmatpush1.bf16.msra.mxu0 %v149
  %170 = vmatprep.subr.bf16.mxu0 0
  %171 = vmatpush1.bf16.msra.mxu0 %v150
  %172 = vmatprep.subr.bf16.mxu0 0
  %173 = vmatpush1.bf16.msra.mxu0 %v151
  %174 = vmatprep.subr.bf16.mxu0 0
  %175 = vmatpush1.bf16.msra.mxu0 %v152
  %176 = vmatprep.subr.bf16.mxu0 0
  %177 = vmatpush1.bf16.msra.mxu0 %v153
  %178 = vmatprep.subr.bf16.mxu0 0
  %179 = vmatpush1.bf16.msra.mxu0 0
  %180 = vmatprep.subr.bf16.mxu0 0
  %181 = vmatpush1.bf16.msra.mxu0 0
  %182 = vmatprep.subr.bf16.mxu0 0
  %183 = vmatpush1.bf16.msra.mxu0 0
  %184 = vmatprep.subr.bf16.mxu0 0
  %185 = vmatpush1.bf16.msra.mxu0 0
  %186 = vmatprep.subr.bf16.mxu0 0
  %187 = vmatpush1.bf16.msra.mxu0 0
  %188 = vmatprep.subr.bf16.mxu0 0
  %189 = vmatpush1.bf16.msra.mxu0 0
  %190 = vmatprep.subr.bf16.mxu0 0
  %191 = vmatpush1.bf16.msra.mxu0 0
  %192 = vmatprep.subr.bf16.mxu0 0
  %193 = vmatpush1.bf16.msra.mxu0 0
  %194 = vmatprep.mubr.bf16.mxu0 0
  %195 = vmatmul.mubr.bf16.gmra.mrb[0].mxu0 %v98
  %v196 = vpop.f32.mrb[0].mxu0
  %v197 = vadd.f32 %v64, %v196
  %v198 = vpop.f32.mrb[0].mxu0
  %v199 = vpop.f32.mrb[0].mxu0
  %v200 = vadd.f32 %v64, %v199
  %v201 = vpop.f32.mrb[0].mxu0
  %202 = vmatprep.mubr.bf16.mxu0 0
  %203 = vmatmul.mubr.bf16.gmra.mrb[0].mxu0 %v99
  %v204 = vpop.f32.mrb[0].mxu0
  %v205 = vadd.f32 %v64, %v204
  %v206 = vpop.f32.mrb[0].mxu0
  %v207 = vpop.f32.mrb[0].mxu0
  %v208 = vadd.f32 %v64, %v207
  %v209 = vpop.f32.mrb[0].mxu0
  %210 = vmatprep.mubr.bf16.mxu0 0
  %211 = vmatmul.mubr.bf16.gmra.mrb[0].mxu0 %v100
  %v212 = vpop.f32.mrb[0].mxu0
  %v213 = vadd.f32 %v64, %v212
  %v214 = vpop.f32.mrb[0].mxu0
  %v215 = vpop.f32.mrb[0].mxu0
  %v216 = vadd.f32 %v64, %v215
  %v217 = vpop.f32.mrb[0].mxu0
  %218 = vmatprep.mubr.bf16.mxu0 0
  %219 = vmatmul.mubr.bf16.gmra.mrb[0].mxu0 %v101
  %v220 = vpop.f32.mrb[0].mxu0
  %v221 = vadd.f32 %v64, %v220
  %v222 = vpop.f32.mrb[0].mxu0
  %v223 = vpop.f32.mrb[0].mxu0
  %v224 = vadd.f32 %v64, %v223
  %v225 = vpop.f32.mrb[0].mxu0
  %226 = vmatprep.mubr.bf16.mxu0 0
  %227 = vmatmul.mubr.bf16.gmra.mrb[0].mxu0 %v102
  %v228 = vpop.f32.mrb[0].mxu0
  %v229 = vadd.f32 %v64, %v228
  %v230 = vpop.f32.mrb[0].mxu0
  %v231 = vpop.f32.mrb[0].mxu0
  %v232 = vadd.f32 %v64, %v231
  %v233 = vpop.f32.mrb[0].mxu0
  %234 = vmatprep.mubr.bf16.mxu0 0
  %235 = vmatmul.mubr.bf16.gmra.mrb[0].mxu0 %v103
  %v236 = vpop.f32.mrb[0].mxu0
  %v237 = vadd.f32 %v64, %v236
  %v238 = vpop.f32.mrb[0].mxu0
  %v239 = vpop.f32.mrb[0].mxu0
  %v240 = vadd.f32 %v64, %v239
  %v241 = vpop.f32.mrb[0].mxu0
  %242 = vmatprep.mubr.bf16.mxu0 0
  %243 = vmatmul.mubr.bf16.gmra.mrb[0].mxu0 %v104
  %v244 = vpop.f32.mrb[0].mxu0
  %v245 = vadd.f32 %v64, %v244
  %v246 = vpop.f32.mrb[0].mxu0
  %v247 = vpop.f32.mrb[0].mxu0
  %v248 = vadd.f32 %v64, %v247
  %v249 = vpop.f32.mrb[0].mxu0
  %250 = vmatprep.mubr.bf16.mxu0 0
  %251 = vmatmul.mubr.bf16.gmra.mrb[0].mxu0 %v105
  %v252 = vpop.f32.mrb[0].mxu0
  %v253 = vadd.f32 %v64, %v252
  %v254 = vpop.f32.mrb[0].mxu0
  %v255 = vpop.f32.mrb[0].mxu0
  %v256 = vadd.f32 %v64, %v255
  %v257 = vpop.f32.mrb[0].mxu0
  %258 = vdwg.mxu0
  %v259 = vmax.f32 %v197, 0.0
  %v260 = vmax.f32 %v200, 0.0
  %v261 = vmax.f32 %v205, 0.0
  %v262 = vmax.f32 %v208, 0.0
  %v263 = vmax.f32 %v213, 0.0
  %v264 = vmax.f32 %v216, 0.0
  %v265 = vmax.f32 %v221, 0.0
  %v266 = vmax.f32 %v224, 0.0
  %v267 = vmax.f32 %v229, 0.0
  %v268 = vmax.f32 %v232, 0.0
  %v269 = vmax.f32 %v237, 0.0
  %v270 = vmax.f32 %v240, 0.0
  %v271 = vmax.f32 %v245, 0.0
  %v272 = vmax.f32 %v248, 0.0
  %v273 = vmax.f32 %v253, 0.0
  %v274 = vmax.f32 %v256, 0.0
  %v275 = vpack.c.bf16 %v260, %v259
  %v276 = vpack.c.bf16 %v262, %v261
  %v277 = vpack.c.bf16 %v264, %v263
  %v278 = vpack.c.bf16 %v266, %v265
  %v279 = vpack.c.bf16 %v268, %v267
  %v280 = vpack.c.bf16 %v270, %v269
  %v281 = vpack.c.bf16 %v272, %v271
  %v282 = vpack.c.bf16 %v274, %v273
  %v283 = vld [vmem:[%s3] sm:$0xf]
  %v284 = vld [vmem:[%s3 + $0x4] sm:$0xf]
  %v285 = vld [vmem:[%s3 + $0x8] sm:$0xf]
  %v286 = vld [vmem:[%s3 + $0xc] sm:$0xf]
  %v287 = vld [vmem:[%s3 + $0x10] sm:$0xf]
  %v288 = vld [vmem:[%s3 + $0x14] sm:$0xf]
  %v289 = vld [vmem:[%s3 + $0x18] sm:$0xf]
  %v290 = vld [vmem:[%s3 + $0x1c] sm:$0xf]
  %v291 = vld [vmem:[%s3 + $0x20] sm:$0xf]
  %v292 = vld [vmem:[%s3 + $0x24] sm:$0xf]
  %v293 = vld [vmem:[%s3 + $0x28] sm:$0xf]
  %v294 = vld [vmem:[%s3 + $0x2c] sm:$0xf]
  %v295 = vld [vmem:[%s3 + $0x30] sm:$0xf]
  %v296 = vld [vmem:[%s3 + $0x34] sm:$0xf]
  %v297 = vld [vmem:[%s3 + $0x38] sm:$0xf]
  %v298 = vld [vmem:[%s3 + $0x3c] sm:$0xf]
  %v299 = vld [vmem:[%s4] sm:$0x1]
  %v301 = vlaneseq
  %v302 = vshrl.u32 %v301, 7
  %v303 = vsub.s32 0, %v302
  %v304 = vrot.slane %v299, %v303
  %v322 = vunpack.c.l.b16 %v283
  %v323 = vunpack.c.l.b16 %v284
  %v324 = vunpack.c.l.b16 %v285
  %v325 = vunpack.c.l.b16 %v286
  %v326 = vunpack.c.l.b16 %v287
  %v327 = vunpack.c.l.b16 %v288
  %v328 = vunpack.c.l.b16 %v289
  %v329 = vunpack.c.l.b16 %v290
  %v330 = vunpack.c.l.b16 %v291
  %v331 = vunpack.c.l.b16 %v292
  %v332 = vunpack.c.l.b16 %v293
  %v333 = vunpack.c.l.b16 %v294
  %v334 = vunpack.c.l.b16 %v295
  %v335 = vunpack.c.l.b16 %v296
  %v336 = vunpack.c.l.b16 %v297
  %v337 = vunpack.c.l.b16 %v298
  %v338 = vpack.c.b16 %v323, %v322
  %v339 = vpack.c.b16 %v325, %v324
  %v340 = vpack.c.b16 %v327, %v326
  %v341 = vpack.c.b16 %v329, %v328
  %v342 = vpack.c.b16 %v331, %v330
  %v343 = vpack.c.b16 %v333, %v332
  %v344 = vpack.c.b16 %v335, %v334
  %v345 = vpack.c.b16 %v337, %v336
  %354 = vmatprep.subr.bf16.mxu0 0
  %355 = vmatpush1.bf16.msra.mxu0 %v338
  %356 = vmatprep.subr.bf16.mxu0 0
  %357 = vmatpush1.bf16.msra.mxu0 %v339
  %358 = vmatprep.subr.bf16.mxu0 0
  %359 = vmatpush1.bf16.msra.mxu0 %v340
  %360 = vmatprep.subr.bf16.mxu0 0
  %361 = vmatpush1.bf16.msra.mxu0 %v341
  %362 = vmatprep.subr.bf16.mxu0 0
  %363 = vmatpush1.bf16.msra.mxu0 %v342
  %364 = vmatprep.subr.bf16.mxu0 0
  %365 = vmatpush1.bf16.msra.mxu0 %v343
  %366 = vmatprep.subr.bf16.mxu0 0
  %367 = vmatpush1.bf16.msra.mxu0 %v344
  %368 = vmatprep.subr.bf16.mxu0 0
  %369 = vmatpush1.bf16.msra.mxu0 %v345
  %370 = vmatprep.subr.bf16.mxu0 0
  %371 = vmatpush1.bf16.msra.mxu0 0
  %372 = vmatprep.subr.bf16.mxu0 0
  %373 = vmatpush1.bf16.msra.mxu0 0
  %374 = vmatprep.subr.bf16.mxu0 0
  %375 = vmatpush1.bf16.msra.mxu0 0
  %376 = vmatprep.subr.bf16.mxu0 0
  %377 = vmatpush1.bf16.msra.mxu0 0
  %378 = vmatprep.subr.bf16.mxu0 0
  %379 = vmatpush1.bf16.msra.mxu0 0
  %380 = vmatprep.subr.bf16.mxu0 0
  %381 = vmatpush1.bf16.msra.mxu0 0
  %382 = vmatprep.subr.bf16.mxu0 0
  %383 = vmatpush1.bf16.msra.mxu0 0
  %384 = vmatprep.subr.bf16.mxu0 0
  %385 = vmatpush1.bf16.msra.mxu0 0
  %386 = vmatprep.mubr.bf16.mxu0 0
  %387 = vmatmul.mubr.bf16.gmra.mrb[0].mxu0 %v275
  %v388 = vpop.f32.mrb[0].mxu0
  %v389 = vadd.f32 %v304, %v388
  %v390 = vpop.f32.mrb[0].mxu0
  %v391 = vpop.f32.mrb[0].mxu0
  %v392 = vadd.f32 %v304, %v391
  %v393 = vpop.f32.mrb[0].mxu0
  %394 = vmatprep.mubr.bf16.mxu0 0
  %395 = vmatmul.mubr.bf16.gmra.mrb[0].mxu0 %v276
  %v396 = vpop.f32.mrb[0].mxu0
  %v397 = vadd.f32 %v304, %v396
  %v398 = vpop.f32.mrb[0].mxu0
  %v399 = vpop.f32.mrb[0].mxu0
  %v400 = vadd.f32 %v304, %v399
  %v401 = vpop.f32.mrb[0].mxu0
  %402 = vmatprep.mubr.bf16.mxu0 0
  %403 = vmatmul.mubr.bf16.gmra.mrb[0].mxu0 %v277
  %v404 = vpop.f32.mrb[0].mxu0
  %v405 = vadd.f32 %v304, %v404
  %v406 = vpop.f32.mrb[0].mxu0
  %v407 = vpop.f32.mrb[0].mxu0
  %v408 = vadd.f32 %v304, %v407
  %v409 = vpop.f32.mrb[0].mxu0
  %410 = vmatprep.mubr.bf16.mxu0 0
  %411 = vmatmul.mubr.bf16.gmra.mrb[0].mxu0 %v278
  %v412 = vpop.f32.mrb[0].mxu0
  %v413 = vadd.f32 %v304, %v412
  %v414 = vpop.f32.mrb[0].mxu0
  %v415 = vpop.f32.mrb[0].mxu0
  %v416 = vadd.f32 %v304, %v415
  %v417 = vpop.f32.mrb[0].mxu0
  %418 = vmatprep.mubr.bf16.mxu0 0
  %419 = vmatmul.mubr.bf16.gmra.mrb[0].mxu0 %v279
  %v420 = vpop.f32.mrb[0].mxu0
  %v421 = vadd.f32 %v304, %v420
  %v422 = vpop.f32.mrb[0].mxu0
  %v423 = vpop.f32.mrb[0].mxu0
  %v424 = vadd.f32 %v304, %v423
  %v425 = vpop.f32.mrb[0].mxu0
  %426 = vmatprep.mubr.bf16.mxu0 0
  %427 = vmatmul.mubr.bf16.gmra.mrb[0].mxu0 %v280
  %v428 = vpop.f32.mrb[0].mxu0
  %v429 = vadd.f32 %v304, %v428
  %v430 = vpop.f32.mrb[0].mxu0
  %v431 = vpop.f32.mrb[0].mxu0
  %v432 = vadd.f32 %v304, %v431
  %v433 = vpop.f32.mrb[0].mxu0
  %434 = vmatprep.mubr.bf16.mxu0 0
  %435 = vmatmul.mubr.bf16.gmra.mrb[0].mxu0 %v281
  %v436 = vpop.f32.mrb[0].mxu0
  %v437 = vadd.f32 %v304, %v436
  %v438 = vpop.f32.mrb[0].mxu0
  %v439 = vpop.f32.mrb[0].mxu0
  %v440 = vadd.f32 %v304, %v439
  %v441 = vpop.f32.mrb[0].mxu0
  %442 = vmatprep.mubr.bf16.mxu0 0
  %443 = vmatmul.mubr.bf16.gmra.mrb[0].mxu0 %v282
  %v444 = vpop.f32.mrb[0].mxu0
  %v445 = vadd.f32 %v304, %v444
  %v446 = vpop.f32.mrb[0].mxu0
  %v447 = vpop.f32.mrb[0].mxu0
  %v448 = vadd.f32 %v304, %v447
  %v449 = vpop.f32.mrb[0].mxu0
  %450 = vdwg.mxu0
  %v451 = vmax.f32 %v389, 0.0
  %v452 = vmax.f32 %v392, 0.0
  %v453 = vmax.f32 %v397, 0.0
  %v454 = vmax.f32 %v400, 0.0
  %v455 = vmax.f32 %v405, 0.0
  %v456 = vmax.f32 %v408, 0.0
  %v457 = vmax.f32 %v413, 0.0
  %v458 = vmax.f32 %v416, 0.0
  %v459 = vmax.f32 %v421, 0.0
  %v460 = vmax.f32 %v424, 0.0
  %v461 = vmax.f32 %v429, 0.0
  %v462 = vmax.f32 %v432, 0.0
  %v463 = vmax.f32 %v437, 0.0
  %v464 = vmax.f32 %v440, 0.0
  %v465 = vmax.f32 %v445, 0.0
  %v466 = vmax.f32 %v448, 0.0
  %v467 = vpack.c.bf16 %v452, %v451
  %v468 = vpack.c.bf16 %v454, %v453
  %v469 = vpack.c.bf16 %v456, %v455
  %v470 = vpack.c.bf16 %v458, %v457
  %v471 = vpack.c.bf16 %v460, %v459
  %v472 = vpack.c.bf16 %v462, %v461
  %v473 = vpack.c.bf16 %v464, %v463
  %v474 = vpack.c.bf16 %v466, %v465
  %v475 = vld [vmem:[%s5] sm:$0xf]
  %v476 = vld [vmem:[%s5 + $0x4] sm:$0xf]
  %v477 = vld [vmem:[%s5 + $0x8] sm:$0xf]
  %v478 = vld [vmem:[%s5 + $0xc] sm:$0xf]
  %v479 = vld [vmem:[%s5 + $0x10] sm:$0xf]
  %v480 = vld [vmem:[%s5 + $0x14] sm:$0xf]
  %v481 = vld [vmem:[%s5 + $0x18] sm:$0xf]
  %v482 = vld [vmem:[%s5 + $0x1c] sm:$0xf]
  %v483 = vld [vmem:[%s5 + $0x20] sm:$0xf]
  %v484 = vld [vmem:[%s5 + $0x24] sm:$0xf]
  %v485 = vld [vmem:[%s5 + $0x28] sm:$0xf]
  %v486 = vld [vmem:[%s5 + $0x2c] sm:$0xf]
  %v487 = vld [vmem:[%s5 + $0x30] sm:$0xf]
  %v488 = vld [vmem:[%s5 + $0x34] sm:$0xf]
  %v489 = vld [vmem:[%s5 + $0x38] sm:$0xf]
  %v490 = vld [vmem:[%s5 + $0x3c] sm:$0xf]
  %v491 = vld [vmem:[%s6] sm:$0x1]
  %v493 = vlaneseq
  %v494 = vshrl.u32 %v493, 7
  %v495 = vsub.s32 0, %v494
  %v496 = vrot.slane %v491, %v495
  %v514 = vunpack.c.l.b16 %v475
  %v515 = vunpack.c.l.b16 %v476
  %v516 = vunpack.c.l.b16 %v477
  %v517 = vunpack.c.l.b16 %v478
  %v518 = vunpack.c.l.b16 %v479
  %v519 = vunpack.c.l.b16 %v480
  %v520 = vunpack.c.l.b16 %v481
  %v521 = vunpack.c.l.b16 %v482
  %v522 = vunpack.c.l.b16 %v483
  %v523 = vunpack.c.l.b16 %v484
  %v524 = vunpack.c.l.b16 %v485
  %v525 = vunpack.c.l.b16 %v486
  %v526 = vunpack.c.l.b16 %v487
  %v527 = vunpack.c.l.b16 %v488
  %v528 = vunpack.c.l.b16 %v489
  %v529 = vunpack.c.l.b16 %v490
  %v530 = vpack.c.b16 %v515, %v514
  %v531 = vpack.c.b16 %v517, %v516
  %v532 = vpack.c.b16 %v519, %v518
  %v533 = vpack.c.b16 %v521, %v520
  %v534 = vpack.c.b16 %v523, %v522
  %v535 = vpack.c.b16 %v525, %v524
  %v536 = vpack.c.b16 %v527, %v526
  %v537 = vpack.c.b16 %v529, %v528
  %546 = vmatprep.subr.bf16.mxu0 0
  %547 = vmatpush1.bf16.msra.mxu0 %v530
  %548 = vmatprep.subr.bf16.mxu0 0
  %549 = vmatpush1.bf16.msra.mxu0 %v531
  %550 = vmatprep.subr.bf16.mxu0 0
  %551 = vmatpush1.bf16.msra.mxu0 %v532
  %552 = vmatprep.subr.bf16.mxu0 0
  %553 = vmatpush1.bf16.msra.mxu0 %v533
  %554 = vmatprep.subr.bf16.mxu0 0
  %555 = vmatpush1.bf16.msra.mxu0 %v534
  %556 = vmatprep.subr.bf16.mxu0 0
  %557 = vmatpush1.bf16.msra.mxu0 %v535
  %558 = vmatprep.subr.bf16.mxu0 0
  %559 = vmatpush1.bf16.msra.mxu0 %v536
  %560 = vmatprep.subr.bf16.mxu0 0
  %561 = vmatpush1.bf16.msra.mxu0 %v537
  %562 = vmatprep.subr.bf16.mxu0 0
  %563 = vmatpush1.bf16.msra.mxu0 0
  %564 = vmatprep.subr.bf16.mxu0 0
  %565 = vmatpush1.bf16.msra.mxu0 0
  %566 = vmatprep.subr.bf16.mxu0 0
  %567 = vmatpush1.bf16.msra.mxu0 0
  %568 = vmatprep.subr.bf16.mxu0 0
  %569 = vmatpush1.bf16.msra.mxu0 0
  %570 = vmatprep.subr.bf16.mxu0 0
  %571 = vmatpush1.bf16.msra.mxu0 0
  %572 = vmatprep.subr.bf16.mxu0 0
  %573 = vmatpush1.bf16.msra.mxu0 0
  %574 = vmatprep.subr.bf16.mxu0 0
  %575 = vmatpush1.bf16.msra.mxu0 0
  %576 = vmatprep.subr.bf16.mxu0 0
  %577 = vmatpush1.bf16.msra.mxu0 0
  %578 = vmatprep.mubr.bf16.mxu0 0
  %579 = vmatmul.mubr.bf16.gmra.mrb[0].mxu0 %v467
  %v580 = vpop.f32.mrb[0].mxu0
  %v581 = vadd.f32 %v496, %v580
  %v582 = vpop.f32.mrb[0].mxu0
  %v583 = vpop.f32.mrb[0].mxu0
  %v584 = vadd.f32 %v496, %v583
  %v585 = vpop.f32.mrb[0].mxu0
  %586 = vmatprep.mubr.bf16.mxu0 0
  %587 = vmatmul.mubr.bf16.gmra.mrb[0].mxu0 %v468
  %v588 = vpop.f32.mrb[0].mxu0
  %v589 = vadd.f32 %v496, %v588
  %v590 = vpop.f32.mrb[0].mxu0
  %v591 = vpop.f32.mrb[0].mxu0
  %v592 = vadd.f32 %v496, %v591
  %v593 = vpop.f32.mrb[0].mxu0
  %594 = vmatprep.mubr.bf16.mxu0 0
  %595 = vmatmul.mubr.bf16.gmra.mrb[0].mxu0 %v469
  %v596 = vpop.f32.mrb[0].mxu0
  %v597 = vadd.f32 %v496, %v596
  %v598 = vpop.f32.mrb[0].mxu0
  %v599 = vpop.f32.mrb[0].mxu0
  %v600 = vadd.f32 %v496, %v599
  %v601 = vpop.f32.mrb[0].mxu0
  %602 = vmatprep.mubr.bf16.mxu0 0
  %603 = vmatmul.mubr.bf16.gmra.mrb[0].mxu0 %v470
  %v604 = vpop.f32.mrb[0].mxu0
  %v605 = vadd.f32 %v496, %v604
  %v606 = vpop.f32.mrb[0].mxu0
  %v607 = vpop.f32.mrb[0].mxu0
  %v608 = vadd.f32 %v496, %v607
  %v609 = vpop.f32.mrb[0].mxu0
  %610 = vmatprep.mubr.bf16.mxu0 0
  %611 = vmatmul.mubr.bf16.gmra.mrb[0].mxu0 %v471
  %v612 = vpop.f32.mrb[0].mxu0
  %v613 = vadd.f32 %v496, %v612
  %v614 = vpop.f32.mrb[0].mxu0
  %v615 = vpop.f32.mrb[0].mxu0
  %v616 = vadd.f32 %v496, %v615
  %v617 = vpop.f32.mrb[0].mxu0
  %618 = vmatprep.mubr.bf16.mxu0 0
  %619 = vmatmul.mubr.bf16.gmra.mrb[0].mxu0 %v472
  %v620 = vpop.f32.mrb[0].mxu0
  %v621 = vadd.f32 %v496, %v620
  %v622 = vpop.f32.mrb[0].mxu0
  %v623 = vpop.f32.mrb[0].mxu0
  %v624 = vadd.f32 %v496, %v623
  %v625 = vpop.f32.mrb[0].mxu0
  %626 = vmatprep.mubr.bf16.mxu0 0
  %627 = vmatmul.mubr.bf16.gmra.mrb[0].mxu0 %v473
  %v628 = vpop.f32.mrb[0].mxu0
  %v629 = vadd.f32 %v496, %v628
  %v630 = vpop.f32.mrb[0].mxu0
  %v631 = vpop.f32.mrb[0].mxu0
  %v632 = vadd.f32 %v496, %v631
  %v633 = vpop.f32.mrb[0].mxu0
  %634 = vmatprep.mubr.bf16.mxu0 0
  %635 = vmatmul.mubr.bf16.gmra.mrb[0].mxu0 %v474
  %v636 = vpop.f32.mrb[0].mxu0
  %v637 = vadd.f32 %v496, %v636
  %v638 = vpop.f32.mrb[0].mxu0
  %v639 = vpop.f32.mrb[0].mxu0
  %v640 = vadd.f32 %v496, %v639
  %v641 = vpop.f32.mrb[0].mxu0
  %642 = vdwg.mxu0
  %v643 = vmax.f32 %v581, 0.0
  %v644 = vmax.f32 %v584, 0.0
  %v645 = vmax.f32 %v589, 0.0
  %v646 = vmax.f32 %v592, 0.0
  %v647 = vmax.f32 %v597, 0.0
  %v648 = vmax.f32 %v600, 0.0
  %v649 = vmax.f32 %v605, 0.0
  %v650 = vmax.f32 %v608, 0.0
  %v651 = vmax.f32 %v613, 0.0
  %v652 = vmax.f32 %v616, 0.0
  %v653 = vmax.f32 %v621, 0.0
  %v654 = vmax.f32 %v624, 0.0
  %v655 = vmax.f32 %v629, 0.0
  %v656 = vmax.f32 %v632, 0.0
  %v657 = vmax.f32 %v637, 0.0
  %v658 = vmax.f32 %v640, 0.0
  %v659 = vrot.slane %v643, 4
  %v660 = vmax.f32 %v643, %v659
  %v661 = vrot.slane %v660, 2
  %v662 = vmax.f32 %v660, %v661
  %v663 = vrot.slane %v662, 1
  %v664 = vmax.f32 %v662, %v663
  %v665 = vrot.slane %v644, 4
  %v666 = vmax.f32 %v644, %v665
  %v667 = vrot.slane %v666, 2
  %v668 = vmax.f32 %v666, %v667
  %v669 = vrot.slane %v668, 1
  %v670 = vmax.f32 %v668, %v669
  %v671 = vrot.slane %v645, 4
  %v672 = vmax.f32 %v645, %v671
  %v673 = vrot.slane %v672, 2
  %v674 = vmax.f32 %v672, %v673
  %v675 = vrot.slane %v674, 1
  %v676 = vmax.f32 %v674, %v675
  %v677 = vrot.slane %v646, 4
  %v678 = vmax.f32 %v646, %v677
  %v679 = vrot.slane %v678, 2
  %v680 = vmax.f32 %v678, %v679
  %v681 = vrot.slane %v680, 1
  %v682 = vmax.f32 %v680, %v681
  %v683 = vrot.slane %v647, 4
  %v684 = vmax.f32 %v647, %v683
  %v685 = vrot.slane %v684, 2
  %v686 = vmax.f32 %v684, %v685
  %v687 = vrot.slane %v686, 1
  %v688 = vmax.f32 %v686, %v687
  %v689 = vrot.slane %v648, 4
  %v690 = vmax.f32 %v648, %v689
  %v691 = vrot.slane %v690, 2
  %v692 = vmax.f32 %v690, %v691
  %v693 = vrot.slane %v692, 1
  %v694 = vmax.f32 %v692, %v693
  %v695 = vrot.slane %v649, 4
  %v696 = vmax.f32 %v649, %v695
  %v697 = vrot.slane %v696, 2
  %v698 = vmax.f32 %v696, %v697
  %v699 = vrot.slane %v698, 1
  %v700 = vmax.f32 %v698, %v699
  %v701 = vrot.slane %v650, 4
  %v702 = vmax.f32 %v650, %v701
  %v703 = vrot.slane %v702, 2
  %v704 = vmax.f32 %v702, %v703
  %v705 = vrot.slane %v704, 1
  %v706 = vmax.f32 %v704, %v705
  %v707 = vrot.slane %v651, 4
  %v708 = vmax.f32 %v651, %v707
  %v709 = vrot.slane %v708, 2
  %v710 = vmax.f32 %v708, %v709
  %v711 = vrot.slane %v710, 1
  %v712 = vmax.f32 %v710, %v711
  %v713 = vrot.slane %v652, 4
  %v714 = vmax.f32 %v652, %v713
  %v715 = vrot.slane %v714, 2
  %v716 = vmax.f32 %v714, %v715
  %v717 = vrot.slane %v716, 1
  %v718 = vmax.f32 %v716, %v717
  %v719 = vrot.slane %v653, 4
  %v720 = vmax.f32 %v653, %v719
  %v721 = vrot.slane %v720, 2
  %v722 = vmax.f32 %v720, %v721
  %v723 = vrot.slane %v722, 1
  %v724 = vmax.f32 %v722, %v723
  %v725 = vrot.slane %v654, 4
  %v726 = vmax.f32 %v654, %v725
  %v727 = vrot.slane %v726, 2
  %v728 = vmax.f32 %v726, %v727
  %v729 = vrot.slane %v728, 1
  %v730 = vmax.f32 %v728, %v729
  %v731 = vrot.slane %v655, 4
  %v732 = vmax.f32 %v655, %v731
  %v733 = vrot.slane %v732, 2
  %v734 = vmax.f32 %v732, %v733
  %v735 = vrot.slane %v734, 1
  %v736 = vmax.f32 %v734, %v735
  %v737 = vrot.slane %v656, 4
  %v738 = vmax.f32 %v656, %v737
  %v739 = vrot.slane %v738, 2
  %v740 = vmax.f32 %v738, %v739
  %v741 = vrot.slane %v740, 1
  %v742 = vmax.f32 %v740, %v741
  %v743 = vrot.slane %v657, 4
  %v744 = vmax.f32 %v657, %v743
  %v745 = vrot.slane %v744, 2
  %v746 = vmax.f32 %v744, %v745
  %v747 = vrot.slane %v746, 1
  %v748 = vmax.f32 %v746, %v747
  %v749 = vrot.slane %v658, 4
  %v750 = vmax.f32 %v658, %v749
  %v751 = vrot.slane %v750, 2
  %v752 = vmax.f32 %v750, %v751
  %v753 = vrot.slane %v752, 1
  %v754 = vmax.f32 %v752, %v753
  %v755 = vpack.c.bf16 %v664, %v664
  %v756 = vpack.c.bf16 %v670, %v670
  %v757 = vpack.c.bf16 %v676, %v676
  %v758 = vpack.c.bf16 %v682, %v682
  %v759 = vpack.c.bf16 %v688, %v688
  %v760 = vpack.c.bf16 %v694, %v694
  %v761 = vpack.c.bf16 %v700, %v700
  %v762 = vpack.c.bf16 %v706, %v706
  %v763 = vpack.c.bf16 %v712, %v712
  %v764 = vpack.c.bf16 %v718, %v718
  %v765 = vpack.c.bf16 %v724, %v724
  %v766 = vpack.c.bf16 %v730, %v730
  %v767 = vpack.c.bf16 %v736, %v736
  %v768 = vpack.c.bf16 %v742, %v742
  %v769 = vpack.c.bf16 %v748, %v748
  %v770 = vpack.c.bf16 %v754, %v754
  %v787 = vunpack.c.l.b16 %v755
  %v788 = vunpack.c.l.b16 %v756
  %v789 = vunpack.c.l.b16 %v757
  %v790 = vunpack.c.l.b16 %v758
  %v791 = vunpack.c.l.b16 %v759
  %v792 = vunpack.c.l.b16 %v760
  %v793 = vunpack.c.l.b16 %v761
  %v794 = vunpack.c.l.b16 %v762
  %v795 = vunpack.c.l.b16 %v763
  %v796 = vunpack.c.l.b16 %v764
  %v797 = vunpack.c.l.b16 %v765
  %v798 = vunpack.c.l.b16 %v766
  %v799 = vunpack.c.l.b16 %v767
  %v800 = vunpack.c.l.b16 %v768
  %v801 = vunpack.c.l.b16 %v769
  %v802 = vunpack.c.l.b16 %v770
  %v803 = vpack.c.b16 %v787, %v787
  %v804 = vpack.c.b16 %v788, %v788
  %v805 = vpack.c.b16 %v789, %v789
  %v806 = vpack.c.b16 %v790, %v790
  %v807 = vpack.c.b16 %v791, %v791
  %v808 = vpack.c.b16 %v792, %v792
  %v809 = vpack.c.b16 %v793, %v793
  %v810 = vpack.c.b16 %v794, %v794
  %v811 = vpack.c.b16 %v795, %v795
  %v812 = vpack.c.b16 %v796, %v796
  %v813 = vpack.c.b16 %v797, %v797
  %v814 = vpack.c.b16 %v798, %v798
  %v815 = vpack.c.b16 %v799, %v799
  %v816 = vpack.c.b16 %v800, %v800
  %v817 = vpack.c.b16 %v801, %v801
  %v818 = vpack.c.b16 %v802, %v802
  %v819 = vunpack.c.l.b16 %v803
  %v820 = vunpack.c.l.b16 %v804
  %v821 = vunpack.c.l.b16 %v805
  %v822 = vunpack.c.l.b16 %v806
  %v823 = vunpack.c.l.b16 %v807
  %v824 = vunpack.c.l.b16 %v808
  %v825 = vunpack.c.l.b16 %v809
  %v826 = vunpack.c.l.b16 %v810
  %v827 = vunpack.c.l.b16 %v811
  %v828 = vunpack.c.l.b16 %v812
  %v829 = vunpack.c.l.b16 %v813
  %v830 = vunpack.c.l.b16 %v814
  %v831 = vunpack.c.l.b16 %v815
  %v832 = vunpack.c.l.b16 %v816
  %v833 = vunpack.c.l.b16 %v817
  %v834 = vunpack.c.l.b16 %v818
  %vm835 = vcmask 1041409
  %v836 = vsel %vm835, %v820, %v819
  %vm837 = vcmask 1042434
  %v838 = vsel %vm837, %v821, %v836
  %vm839 = vcmask 1043459
  %v840 = vsel %vm839, %v822, %v838
  %vm841 = vcmask 1044484
  %v842 = vsel %vm841, %v823, %v840
  %vm843 = vcmask 1045509
  %v844 = vsel %vm843, %v824, %v842
  %vm845 = vcmask 1046534
  %v846 = vsel %vm845, %v825, %v844
  %vm847 = vcmask 1047559
  %v848 = vsel %vm847, %v826, %v846
  %v849 = vsel %vm835, %v828, %v827
  %v850 = vsel %vm837, %v829, %v849
  %v851 = vsel %vm839, %v830, %v850
  %v852 = vsel %vm841, %v831, %v851
  %v853 = vsel %vm843, %v832, %v852
  %v854 = vsel %vm845, %v833, %v853
  %v855 = vsel %vm847, %v834, %v854
  %v856 = vpack.c.b16 %v848, %v848
  %v857 = vpack.c.b16 %v855, %v855
  %860 = vst [vmem:[%s7] sm:$0xf] %v856
  %861 = vst [vmem:[%s7 + $0x4] sm:$0xf] %v857
  // Predicated region
  $region30: #{pointnet2_cls_forward.4} parent=0 // pred_check
    _
  $region31: #{pointnet2_cls_forward.4} parent=0 // pred_check_branch
    %863 = sbr.rel (0) target = $region33
  $region32: #{pointnet2_cls_forward.4} parent=0 // pred_region
    _
  $region33: #{pointnet2_cls_forward.4} parent=0 // pred_fallthru
    _
  // Predicated region
  $region34: #{pointnet2_cls_forward.4} parent=0 // pred_check
    _
  $region35: #{pointnet2_cls_forward.4} parent=0 // pred_check_branch
    %865 = sbr.rel (0) target = $region37
  $region36: #{pointnet2_cls_forward.4} parent=0 // pred_region
    _
  $region37: #{pointnet2_cls_forward.4} parent=0 // pred_fallthru
    _

// kernel: pointnet2_cls_forward.5
$region0: #{pointnet2_cls_forward.5}
  #allocation0 [shape = 'u32[]', space=smem, size = 0x4, offset = 0x4, fixed_abs, tag = 'smem constant byte address 0x4 - core index']
  #allocation1 [shape = 'u32[144,128]{1,0:T(1,128)}', space=vmem, size = 0x12000, scoped, tag = 'internal scratch']
  %s0 = inlined_call_operand.vmem [shape: bf16[16,128], index: 0, kind: input, shape index: {}]
  %s1 = inlined_call_operand.vmem [shape: bf16[128,128], index: 1, kind: input, shape index: {}]
  %s2 = inlined_call_operand.vmem [shape: f32[1,128], index: 2, kind: input, shape index: {}]
  %s3 = inlined_call_operand.vmem [shape: bf16[128,128], index: 3, kind: input, shape index: {}]
  %s4 = inlined_call_operand.vmem [shape: f32[1,128], index: 4, kind: input, shape index: {}]
  %s5 = inlined_call_operand.vmem [shape: bf16[128,128], index: 5, kind: input, shape index: {}]
  %s6 = inlined_call_operand.vmem [shape: f32[1,128], index: 6, kind: input, shape index: {}]
  %s7 = inlined_call_operand.vmem [shape: bf16[128,128], index: 7, kind: input, shape index: {}]
  %s8 = inlined_call_operand.vmem [shape: f32[1,128], index: 8, kind: input, shape index: {}]
  %s9 = inlined_call_operand.vmem [shape: bf16[128,128], index: 9, kind: input, shape index: {}]
  %s10 = inlined_call_operand.vmem [shape: f32[1,128], index: 10, kind: input, shape index: {}]
  %s11 = inlined_call_operand.vmem [shape: bf16[128,128], index: 11, kind: input, shape index: {}]
  %s12 = inlined_call_operand.vmem [shape: f32[1,128], index: 12, kind: input, shape index: {}]
  %s13 = inlined_call_operand.hbm [shape: f32[2,128], index: 13, kind: output, shape index: {}]
  %s14 = sld [smem:[#allocation0]]
  $region62: #{pointnet2_cls_forward.5} parent=0
    _
  %s16 = ssub.s32 1, %s14
  %s17 = scalar_select 0, %s16, %s14
  $region1: #{pointnet2_cls_forward.5} parent=0
    #allocation2 [shape = 'u8[1024]{0}', space=vmem, size = 0x400, scoped, tag = 'output window, operand 0, single buffered']
    #allocation3 [shape = 's32[1]{0}', space=sflag, size = 0x4, scoped, tag = 'scoped memory for pointnet2_cls_forward.5']
    %18 = vsyncpa [#allocation3], 0
    // Predicated region
    $region2: #{pointnet2_cls_forward.5} parent=1 // pred_check
      _
    $region3: #{pointnet2_cls_forward.5} parent=1 // pred_check_branch
      %20 = sbr.rel (0) target = $region5
    $region4: #{pointnet2_cls_forward.5} parent=1 // pred_region
      _
    $region5: #{pointnet2_cls_forward.5} parent=1 // pred_fallthru
      _
    // Predicated region
    $region6: #{pointnet2_cls_forward.5} parent=1 // pred_check
      _
    $region7: #{pointnet2_cls_forward.5} parent=1 // pred_check_branch
      %22 = sbr.rel (0) target = $region9
    $region8: #{pointnet2_cls_forward.5} parent=1 // pred_region
      _
    $region9: #{pointnet2_cls_forward.5} parent=1 // pred_fallthru
      _
    // Predicated region
    $region10: #{pointnet2_cls_forward.5} parent=1 // pred_check
      _
    $region11: #{pointnet2_cls_forward.5} parent=1 // pred_check_branch
      %24 = sbr.rel (0) target = $region13
    $region12: #{pointnet2_cls_forward.5} parent=1 // pred_region
      _
    $region13: #{pointnet2_cls_forward.5} parent=1 // pred_fallthru
      _
    // Predicated region
    $region14: #{pointnet2_cls_forward.5} parent=1 // pred_check
      _
    $region15: #{pointnet2_cls_forward.5} parent=1 // pred_check_branch
      %26 = sbr.rel (0) target = $region17
    $region16: #{pointnet2_cls_forward.5} parent=1 // pred_region
      _
    $region17: #{pointnet2_cls_forward.5} parent=1 // pred_fallthru
      _
    // Predicated region
    $region18: #{pointnet2_cls_forward.5} parent=1 // pred_check
      _
    $region19: #{pointnet2_cls_forward.5} parent=1 // pred_check_branch
      %28 = sbr.rel (0) target = $region21
    $region20: #{pointnet2_cls_forward.5} parent=1 // pred_region
      _
    $region21: #{pointnet2_cls_forward.5} parent=1 // pred_fallthru
      _
    // Predicated region
    $region22: #{pointnet2_cls_forward.5} parent=1 // pred_check
      _
    $region23: #{pointnet2_cls_forward.5} parent=1 // pred_check_branch
      %30 = sbr.rel (0) target = $region25
    $region24: #{pointnet2_cls_forward.5} parent=1 // pred_region
      _
    $region25: #{pointnet2_cls_forward.5} parent=1 // pred_fallthru
      _
    // Predicated region
    $region26: #{pointnet2_cls_forward.5} parent=1 // pred_check
      _
    $region27: #{pointnet2_cls_forward.5} parent=1 // pred_check_branch
      %32 = sbr.rel (0) target = $region29
    $region28: #{pointnet2_cls_forward.5} parent=1 // pred_region
      _
    $region29: #{pointnet2_cls_forward.5} parent=1 // pred_fallthru
      _
    // Predicated region
    $region30: #{pointnet2_cls_forward.5} parent=1 // pred_check
      _
    $region31: #{pointnet2_cls_forward.5} parent=1 // pred_check_branch
      %34 = sbr.rel (0) target = $region33
    $region32: #{pointnet2_cls_forward.5} parent=1 // pred_region
      _
    $region33: #{pointnet2_cls_forward.5} parent=1 // pred_fallthru
      _
    // Predicated region
    $region34: #{pointnet2_cls_forward.5} parent=1 // pred_check
      _
    $region35: #{pointnet2_cls_forward.5} parent=1 // pred_check_branch
      %36 = sbr.rel (0) target = $region37
    $region36: #{pointnet2_cls_forward.5} parent=1 // pred_region
      _
    $region37: #{pointnet2_cls_forward.5} parent=1 // pred_fallthru
      _
    // Predicated region
    $region38: #{pointnet2_cls_forward.5} parent=1 // pred_check
      _
    $region39: #{pointnet2_cls_forward.5} parent=1 // pred_check_branch
      %38 = sbr.rel (0) target = $region41
    $region40: #{pointnet2_cls_forward.5} parent=1 // pred_region
      _
    $region41: #{pointnet2_cls_forward.5} parent=1 // pred_fallthru
      _
    // Predicated region
    $region42: #{pointnet2_cls_forward.5} parent=1 // pred_check
      _
    $region43: #{pointnet2_cls_forward.5} parent=1 // pred_check_branch
      %40 = sbr.rel (0) target = $region45
    $region44: #{pointnet2_cls_forward.5} parent=1 // pred_region
      _
    $region45: #{pointnet2_cls_forward.5} parent=1 // pred_fallthru
      _
    // Predicated region
    $region46: #{pointnet2_cls_forward.5} parent=1 // pred_check
      _
    $region47: #{pointnet2_cls_forward.5} parent=1 // pred_check_branch
      %42 = sbr.rel (0) target = $region49
    $region48: #{pointnet2_cls_forward.5} parent=1 // pred_region
      _
    $region49: #{pointnet2_cls_forward.5} parent=1 // pred_fallthru
      _
    // Predicated region
    $region50: #{pointnet2_cls_forward.5} parent=1 // pred_check
      _
    $region51: #{pointnet2_cls_forward.5} parent=1 // pred_check_branch
      %44 = sbr.rel (0) target = $region53
    $region52: #{pointnet2_cls_forward.5} parent=1 // pred_region
      _
    $region53: #{pointnet2_cls_forward.5} parent=1 // pred_fallthru
      _
    %v46 = vld [vmem:[%s0] sm:$0xf]
    %v47 = vld [vmem:[%s0 + $0x4] sm:$0xf]
    %v48 = vld [vmem:[%s1] sm:$0xf]
    %v49 = vld [vmem:[%s1 + $0x4] sm:$0xf]
    %v50 = vld [vmem:[%s1 + $0x8] sm:$0xf]
    %v51 = vld [vmem:[%s1 + $0xc] sm:$0xf]
    %v52 = vld [vmem:[%s1 + $0x10] sm:$0xf]
    %v53 = vld [vmem:[%s1 + $0x14] sm:$0xf]
    %v54 = vld [vmem:[%s1 + $0x18] sm:$0xf]
    %v55 = vld [vmem:[%s1 + $0x1c] sm:$0xf]
    %v56 = vld [vmem:[%s1 + $0x20] sm:$0xf]
    %v57 = vld [vmem:[%s1 + $0x24] sm:$0xf]
    %v58 = vld [vmem:[%s1 + $0x28] sm:$0xf]
    %v59 = vld [vmem:[%s1 + $0x2c] sm:$0xf]
    %v60 = vld [vmem:[%s1 + $0x30] sm:$0xf]
    %v61 = vld [vmem:[%s1 + $0x34] sm:$0xf]
    %v62 = vld [vmem:[%s1 + $0x38] sm:$0xf]
    %v63 = vld [vmem:[%s1 + $0x3c] sm:$0xf]
    %v64 = vld [vmem:[%s2] sm:$0x1]
    %v66 = vlaneseq
    %v67 = vshrl.u32 %v66, 7
    %v68 = vsub.s32 0, %v67
    %v69 = vrot.slane %v64, %v68
    %v73 = vunpack.c.l.b16 %v46
    %v74 = vunpack.c.l.b16 %v47
    %v75 = vpack.c.b16 %v74, %v73
    %v93 = vunpack.c.l.b16 %v48
    %v94 = vunpack.c.l.b16 %v49
    %v95 = vunpack.c.l.b16 %v50
    %v96 = vunpack.c.l.b16 %v51
    %v97 = vunpack.c.l.b16 %v52
    %v98 = vunpack.c.l.b16 %v53
    %v99 = vunpack.c.l.b16 %v54
    %v100 = vunpack.c.l.b16 %v55
    %v101 = vunpack.c.l.b16 %v56
    %v102 = vunpack.c.l.b16 %v57
    %v103 = vunpack.c.l.b16 %v58
    %v104 = vunpack.c.l.b16 %v59
    %v105 = vunpack.c.l.b16 %v60
    %v106 = vunpack.c.l.b16 %v61
    %v107 = vunpack.c.l.b16 %v62
    %v108 = vunpack.c.l.b16 %v63
    %v109 = vpack.c.b16 %v94, %v93
    %v110 = vpack.c.b16 %v96, %v95
    %v111 = vpack.c.b16 %v98, %v97
    %v112 = vpack.c.b16 %v100, %v99
    %v113 = vpack.c.b16 %v102, %v101
    %v114 = vpack.c.b16 %v104, %v103
    %v115 = vpack.c.b16 %v106, %v105
    %v116 = vpack.c.b16 %v108, %v107
    %125 = vmatprep.subr.bf16.mxu0 0
    %126 = vmatpush1.bf16.msra.mxu0 %v109
    %127 = vmatprep.subr.bf16.mxu0 0
    %128 = vmatpush1.bf16.msra.mxu0 %v110
    %129 = vmatprep.subr.bf16.mxu0 0
    %130 = vmatpush1.bf16.msra.mxu0 %v111
    %131 = vmatprep.subr.bf16.mxu0 0
    %132 = vmatpush1.bf16.msra.mxu0 %v112
    %133 = vmatprep.subr.bf16.mxu0 0
    %134 = vmatpush1.bf16.msra.mxu0 %v113
    %135 = vmatprep.subr.bf16.mxu0 0
    %136 = vmatpush1.bf16.msra.mxu0 %v114
    %137 = vmatprep.subr.bf16.mxu0 0
    %138 = vmatpush1.bf16.msra.mxu0 %v115
    %139 = vmatprep.subr.bf16.mxu0 0
    %140 = vmatpush1.bf16.msra.mxu0 %v116
    %141 = vmatprep.subr.bf16.mxu0 0
    %142 = vmatpush1.bf16.msra.mxu0 0
    %143 = vmatprep.subr.bf16.mxu0 0
    %144 = vmatpush1.bf16.msra.mxu0 0
    %145 = vmatprep.subr.bf16.mxu0 0
    %146 = vmatpush1.bf16.msra.mxu0 0
    %147 = vmatprep.subr.bf16.mxu0 0
    %148 = vmatpush1.bf16.msra.mxu0 0
    %149 = vmatprep.subr.bf16.mxu0 0
    %150 = vmatpush1.bf16.msra.mxu0 0
    %151 = vmatprep.subr.bf16.mxu0 0
    %152 = vmatpush1.bf16.msra.mxu0 0
    %153 = vmatprep.subr.bf16.mxu0 0
    %154 = vmatpush1.bf16.msra.mxu0 0
    %155 = vmatprep.subr.bf16.mxu0 0
    %156 = vmatpush1.bf16.msra.mxu0 0
    %157 = vmatprep.mubr.bf16.mxu0 0
    %158 = vmatmul.mubr.bf16.gmra.mrb[0].mxu0 %v75
    %v159 = vpop.f32.mrb[0].mxu0
    %v160 = vadd.f32 %v69, %v159
    %v161 = vpop.f32.mrb[0].mxu0
    %v162 = vpop.f32.mrb[0].mxu0
    %v163 = vadd.f32 %v69, %v162
    %v164 = vpop.f32.mrb[0].mxu0
    %165 = vdwg.mxu0
    %v166 = vmax.f32 %v160, 0.0
    %v167 = vmax.f32 %v163, 0.0
    %v168 = vpack.c.bf16 %v167, %v166
    %v169 = vld [vmem:[%s3] sm:$0xf]
    %v170 = vld [vmem:[%s3 + $0x4] sm:$0xf]
    %v171 = vld [vmem:[%s3 + $0x8] sm:$0xf]
    %v172 = vld [vmem:[%s3 + $0xc] sm:$0xf]
    %v173 = vld [vmem:[%s3 + $0x10] sm:$0xf]
    %v174 = vld [vmem:[%s3 + $0x14] sm:$0xf]
    %v175 = vld [vmem:[%s3 + $0x18] sm:$0xf]
    %v176 = vld [vmem:[%s3 + $0x1c] sm:$0xf]
    %v177 = vld [vmem:[%s3 + $0x20] sm:$0xf]
    %v178 = vld [vmem:[%s3 + $0x24] sm:$0xf]
    %v179 = vld [vmem:[%s3 + $0x28] sm:$0xf]
    %v180 = vld [vmem:[%s3 + $0x2c] sm:$0xf]
    %v181 = vld [vmem:[%s3 + $0x30] sm:$0xf]
    %v182 = vld [vmem:[%s3 + $0x34] sm:$0xf]
    %v183 = vld [vmem:[%s3 + $0x38] sm:$0xf]
    %v184 = vld [vmem:[%s3 + $0x3c] sm:$0xf]
    %v185 = vld [vmem:[%s4] sm:$0x1]
    %v187 = vlaneseq
    %v188 = vshrl.u32 %v187, 7
    %v189 = vsub.s32 0, %v188
    %v190 = vrot.slane %v185, %v189
    %v208 = vunpack.c.l.b16 %v169
    %v209 = vunpack.c.l.b16 %v170
    %v210 = vunpack.c.l.b16 %v171
    %v211 = vunpack.c.l.b16 %v172
    %v212 = vunpack.c.l.b16 %v173
    %v213 = vunpack.c.l.b16 %v174
    %v214 = vunpack.c.l.b16 %v175
    %v215 = vunpack.c.l.b16 %v176
    %v216 = vunpack.c.l.b16 %v177
    %v217 = vunpack.c.l.b16 %v178
    %v218 = vunpack.c.l.b16 %v179
    %v219 = vunpack.c.l.b16 %v180
    %v220 = vunpack.c.l.b16 %v181
    %v221 = vunpack.c.l.b16 %v182
    %v222 = vunpack.c.l.b16 %v183
    %v223 = vunpack.c.l.b16 %v184
    %v224 = vpack.c.b16 %v209, %v208
    %v225 = vpack.c.b16 %v211, %v210
    %v226 = vpack.c.b16 %v213, %v212
    %v227 = vpack.c.b16 %v215, %v214
    %v228 = vpack.c.b16 %v217, %v216
    %v229 = vpack.c.b16 %v219, %v218
    %v230 = vpack.c.b16 %v221, %v220
    %v231 = vpack.c.b16 %v223, %v222
    %240 = vmatprep.subr.bf16.mxu0 0
    %241 = vmatpush1.bf16.msra.mxu0 %v224
    %242 = vmatprep.subr.bf16.mxu0 0
    %243 = vmatpush1.bf16.msra.mxu0 %v225
    %244 = vmatprep.subr.bf16.mxu0 0
    %245 = vmatpush1.bf16.msra.mxu0 %v226
    %246 = vmatprep.subr.bf16.mxu0 0
    %247 = vmatpush1.bf16.msra.mxu0 %v227
    %248 = vmatprep.subr.bf16.mxu0 0
    %249 = vmatpush1.bf16.msra.mxu0 %v228
    %250 = vmatprep.subr.bf16.mxu0 0
    %251 = vmatpush1.bf16.msra.mxu0 %v229
    %252 = vmatprep.subr.bf16.mxu0 0
    %253 = vmatpush1.bf16.msra.mxu0 %v230
    %254 = vmatprep.subr.bf16.mxu0 0
    %255 = vmatpush1.bf16.msra.mxu0 %v231
    %256 = vmatprep.subr.bf16.mxu0 0
    %257 = vmatpush1.bf16.msra.mxu0 0
    %258 = vmatprep.subr.bf16.mxu0 0
    %259 = vmatpush1.bf16.msra.mxu0 0
    %260 = vmatprep.subr.bf16.mxu0 0
    %261 = vmatpush1.bf16.msra.mxu0 0
    %262 = vmatprep.subr.bf16.mxu0 0
    %263 = vmatpush1.bf16.msra.mxu0 0
    %264 = vmatprep.subr.bf16.mxu0 0
    %265 = vmatpush1.bf16.msra.mxu0 0
    %266 = vmatprep.subr.bf16.mxu0 0
    %267 = vmatpush1.bf16.msra.mxu0 0
    %268 = vmatprep.subr.bf16.mxu0 0
    %269 = vmatpush1.bf16.msra.mxu0 0
    %270 = vmatprep.subr.bf16.mxu0 0
    %271 = vmatpush1.bf16.msra.mxu0 0
    %272 = vmatprep.mubr.bf16.mxu0 0
    %273 = vmatmul.mubr.bf16.gmra.mrb[0].mxu0 %v168
    %v274 = vpop.f32.mrb[0].mxu0
    %v275 = vadd.f32 %v190, %v274
    %v276 = vpop.f32.mrb[0].mxu0
    %v277 = vpop.f32.mrb[0].mxu0
    %v278 = vadd.f32 %v190, %v277
    %v279 = vpop.f32.mrb[0].mxu0
    %280 = vdwg.mxu0
    %v281 = vmax.f32 %v275, 0.0
    %v282 = vmax.f32 %v278, 0.0
    %v283 = vpack.c.bf16 %v282, %v281
    %v284 = vld [vmem:[%s5] sm:$0xf]
    %v285 = vld [vmem:[%s5 + $0x4] sm:$0xf]
    %v286 = vld [vmem:[%s5 + $0x8] sm:$0xf]
    %v287 = vld [vmem:[%s5 + $0xc] sm:$0xf]
    %v288 = vld [vmem:[%s5 + $0x10] sm:$0xf]
    %v289 = vld [vmem:[%s5 + $0x14] sm:$0xf]
    %v290 = vld [vmem:[%s5 + $0x18] sm:$0xf]
    %v291 = vld [vmem:[%s5 + $0x1c] sm:$0xf]
    %v292 = vld [vmem:[%s5 + $0x20] sm:$0xf]
    %v293 = vld [vmem:[%s5 + $0x24] sm:$0xf]
    %v294 = vld [vmem:[%s5 + $0x28] sm:$0xf]
    %v295 = vld [vmem:[%s5 + $0x2c] sm:$0xf]
    %v296 = vld [vmem:[%s5 + $0x30] sm:$0xf]
    %v297 = vld [vmem:[%s5 + $0x34] sm:$0xf]
    %v298 = vld [vmem:[%s5 + $0x38] sm:$0xf]
    %v299 = vld [vmem:[%s5 + $0x3c] sm:$0xf]
    %v300 = vld [vmem:[%s6] sm:$0x1]
    %v302 = vlaneseq
    %v303 = vshrl.u32 %v302, 7
    %v304 = vsub.s32 0, %v303
    %v305 = vrot.slane %v300, %v304
    %v323 = vunpack.c.l.b16 %v284
    %v324 = vunpack.c.l.b16 %v285
    %v325 = vunpack.c.l.b16 %v286
    %v326 = vunpack.c.l.b16 %v287
    %v327 = vunpack.c.l.b16 %v288
    %v328 = vunpack.c.l.b16 %v289
    %v329 = vunpack.c.l.b16 %v290
    %v330 = vunpack.c.l.b16 %v291
    %v331 = vunpack.c.l.b16 %v292
    %v332 = vunpack.c.l.b16 %v293
    %v333 = vunpack.c.l.b16 %v294
    %v334 = vunpack.c.l.b16 %v295
    %v335 = vunpack.c.l.b16 %v296
    %v336 = vunpack.c.l.b16 %v297
    %v337 = vunpack.c.l.b16 %v298
    %v338 = vunpack.c.l.b16 %v299
    %v339 = vpack.c.b16 %v324, %v323
    %v340 = vpack.c.b16 %v326, %v325
    %v341 = vpack.c.b16 %v328, %v327
    %v342 = vpack.c.b16 %v330, %v329
    %v343 = vpack.c.b16 %v332, %v331
    %v344 = vpack.c.b16 %v334, %v333
    %v345 = vpack.c.b16 %v336, %v335
    %v346 = vpack.c.b16 %v338, %v337
    %355 = vmatprep.subr.bf16.mxu0 0
    %356 = vmatpush1.bf16.msra.mxu0 %v339
    %357 = vmatprep.subr.bf16.mxu0 0
    %358 = vmatpush1.bf16.msra.mxu0 %v340
    %359 = vmatprep.subr.bf16.mxu0 0
    %360 = vmatpush1.bf16.msra.mxu0 %v341
    %361 = vmatprep.subr.bf16.mxu0 0
    %362 = vmatpush1.bf16.msra.mxu0 %v342
    %363 = vmatprep.subr.bf16.mxu0 0
    %364 = vmatpush1.bf16.msra.mxu0 %v343
    %365 = vmatprep.subr.bf16.mxu0 0
    %366 = vmatpush1.bf16.msra.mxu0 %v344
    %367 = vmatprep.subr.bf16.mxu0 0
    %368 = vmatpush1.bf16.msra.mxu0 %v345
    %369 = vmatprep.subr.bf16.mxu0 0
    %370 = vmatpush1.bf16.msra.mxu0 %v346
    %371 = vmatprep.subr.bf16.mxu0 0
    %372 = vmatpush1.bf16.msra.mxu0 0
    %373 = vmatprep.subr.bf16.mxu0 0
    %374 = vmatpush1.bf16.msra.mxu0 0
    %375 = vmatprep.subr.bf16.mxu0 0
    %376 = vmatpush1.bf16.msra.mxu0 0
    %377 = vmatprep.subr.bf16.mxu0 0
    %378 = vmatpush1.bf16.msra.mxu0 0
    %379 = vmatprep.subr.bf16.mxu0 0
    %380 = vmatpush1.bf16.msra.mxu0 0
    %381 = vmatprep.subr.bf16.mxu0 0
    %382 = vmatpush1.bf16.msra.mxu0 0
    %383 = vmatprep.subr.bf16.mxu0 0
    %384 = vmatpush1.bf16.msra.mxu0 0
    %385 = vmatprep.subr.bf16.mxu0 0
    %386 = vmatpush1.bf16.msra.mxu0 0
    %387 = vmatprep.mubr.bf16.mxu0 0
    %388 = vmatmul.mubr.bf16.gmra.mrb[0].mxu0 %v283
    %v389 = vpop.f32.mrb[0].mxu0
    %v390 = vadd.f32 %v305, %v389
    %v391 = vpop.f32.mrb[0].mxu0
    %v392 = vpop.f32.mrb[0].mxu0
    %v393 = vadd.f32 %v305, %v392
    %v394 = vpop.f32.mrb[0].mxu0
    %395 = vdwg.mxu0
    %v396 = vmax.f32 %v390, 0.0
    %v397 = vmax.f32 %v393, 0.0
    %v398 = vrot.slane %v396, 4
    %v399 = vmax.f32 %v396, %v398
    %v400 = vrot.slane %v399, 2
    %v401 = vmax.f32 %v399, %v400
    %v402 = vrot.slane %v401, 1
    %v403 = vmax.f32 %v401, %v402
    %v404 = vrot.slane %v397, 4
    %v405 = vmax.f32 %v397, %v404
    %v406 = vrot.slane %v405, 2
    %v407 = vmax.f32 %v405, %v406
    %v408 = vrot.slane %v407, 1
    %v409 = vmax.f32 %v407, %v408
    %v410 = vpack.c.bf16 %v403, %v403
    %v411 = vpack.c.bf16 %v409, %v409
    %v412 = vld [vmem:[%s7] sm:$0xf]
    %v413 = vld [vmem:[%s7 + $0x4] sm:$0xf]
    %v414 = vld [vmem:[%s7 + $0x8] sm:$0xf]
    %v415 = vld [vmem:[%s7 + $0xc] sm:$0xf]
    %v416 = vld [vmem:[%s7 + $0x10] sm:$0xf]
    %v417 = vld [vmem:[%s7 + $0x14] sm:$0xf]
    %v418 = vld [vmem:[%s7 + $0x18] sm:$0xf]
    %v419 = vld [vmem:[%s7 + $0x1c] sm:$0xf]
    %v420 = vld [vmem:[%s7 + $0x20] sm:$0xf]
    %v421 = vld [vmem:[%s7 + $0x24] sm:$0xf]
    %v422 = vld [vmem:[%s7 + $0x28] sm:$0xf]
    %v423 = vld [vmem:[%s7 + $0x2c] sm:$0xf]
    %v424 = vld [vmem:[%s7 + $0x30] sm:$0xf]
    %v425 = vld [vmem:[%s7 + $0x34] sm:$0xf]
    %v426 = vld [vmem:[%s7 + $0x38] sm:$0xf]
    %v427 = vld [vmem:[%s7 + $0x3c] sm:$0xf]
    %v428 = vld [vmem:[%s8] sm:$0x1]
    %v430 = vlaneseq
    %v431 = vshrl.u32 %v430, 7
    %v432 = vsub.s32 0, %v431
    %v433 = vrot.slane %v428, %v432
    %v437 = vunpack.c.l.b16 %v410
    %v438 = vunpack.c.l.b16 %v411
    %vm439 = vcmask 1041409
    %v440 = vsel %vm439, %v438, %v437
    %v441 = vpack.c.b16 %v440, %v440
    %v459 = vunpack.c.l.b16 %v412
    %v460 = vunpack.c.l.b16 %v413
    %v461 = vunpack.c.l.b16 %v414
    %v462 = vunpack.c.l.b16 %v415
    %v463 = vunpack.c.l.b16 %v416
    %v464 = vunpack.c.l.b16 %v417
    %v465 = vunpack.c.l.b16 %v418
    %v466 = vunpack.c.l.b16 %v419
    %v467 = vunpack.c.l.b16 %v420
    %v468 = vunpack.c.l.b16 %v421
    %v469 = vunpack.c.l.b16 %v422
    %v470 = vunpack.c.l.b16 %v423
    %v471 = vunpack.c.l.b16 %v424
    %v472 = vunpack.c.l.b16 %v425
    %v473 = vunpack.c.l.b16 %v426
    %v474 = vunpack.c.l.b16 %v427
    %v475 = vpack.c.b16 %v460, %v459
    %v476 = vpack.c.b16 %v462, %v461
    %v477 = vpack.c.b16 %v464, %v463
    %v478 = vpack.c.b16 %v466, %v465
    %v479 = vpack.c.b16 %v468, %v467
    %v480 = vpack.c.b16 %v470, %v469
    %v481 = vpack.c.b16 %v472, %v471
    %v482 = vpack.c.b16 %v474, %v473
    %491 = vmatprep.subr.bf16.mxu0 0
    %492 = vmatpush1.bf16.msra.mxu0 %v475
    %493 = vmatprep.subr.bf16.mxu0 0
    %494 = vmatpush1.bf16.msra.mxu0 %v476
    %495 = vmatprep.subr.bf16.mxu0 0
    %496 = vmatpush1.bf16.msra.mxu0 %v477
    %497 = vmatprep.subr.bf16.mxu0 0
    %498 = vmatpush1.bf16.msra.mxu0 %v478
    %499 = vmatprep.subr.bf16.mxu0 0
    %500 = vmatpush1.bf16.msra.mxu0 %v479
    %501 = vmatprep.subr.bf16.mxu0 0
    %502 = vmatpush1.bf16.msra.mxu0 %v480
    %503 = vmatprep.subr.bf16.mxu0 0
    %504 = vmatpush1.bf16.msra.mxu0 %v481
    %505 = vmatprep.subr.bf16.mxu0 0
    %506 = vmatpush1.bf16.msra.mxu0 %v482
    %507 = vmatprep.subr.bf16.mxu0 0
    %508 = vmatpush1.bf16.msra.mxu0 0
    %509 = vmatprep.subr.bf16.mxu0 0
    %510 = vmatpush1.bf16.msra.mxu0 0
    %511 = vmatprep.subr.bf16.mxu0 0
    %512 = vmatpush1.bf16.msra.mxu0 0
    %513 = vmatprep.subr.bf16.mxu0 0
    %514 = vmatpush1.bf16.msra.mxu0 0
    %515 = vmatprep.subr.bf16.mxu0 0
    %516 = vmatpush1.bf16.msra.mxu0 0
    %517 = vmatprep.subr.bf16.mxu0 0
    %518 = vmatpush1.bf16.msra.mxu0 0
    %519 = vmatprep.subr.bf16.mxu0 0
    %520 = vmatpush1.bf16.msra.mxu0 0
    %521 = vmatprep.subr.bf16.mxu0 0
    %522 = vmatpush1.bf16.msra.mxu0 0
    %523 = vmatprep.mubr.bf16.mxu0 0
    %524 = vmatmul.mubr.bf16.gmra.mrb[0].mxu0 %v441
    %v525 = vpop.f32.mrb[0].mxu0
    %v526 = vadd.f32 %v433, %v525
    %v527 = vpop.f32.mrb[0].mxu0
    %v528 = vpop.f32.mrb[0].mxu0
    %v529 = vpop.f32.mrb[0].mxu0
    %530 = vdwg.mxu0
    %v531 = vmax.f32 %v526, 0.0
    %v532 = vpack.c.bf16 %v531, %v531
    %v533 = vld [vmem:[%s9] sm:$0xf]
    %v534 = vld [vmem:[%s9 + $0x4] sm:$0xf]
    %v535 = vld [vmem:[%s9 + $0x8] sm:$0xf]
    %v536 = vld [vmem:[%s9 + $0xc] sm:$0xf]
    %v537 = vld [vmem:[%s9 + $0x10] sm:$0xf]
    %v538 = vld [vmem:[%s9 + $0x14] sm:$0xf]
    %v539 = vld [vmem:[%s9 + $0x18] sm:$0xf]
    %v540 = vld [vmem:[%s9 + $0x1c] sm:$0xf]
    %v541 = vld [vmem:[%s9 + $0x20] sm:$0xf]
    %v542 = vld [vmem:[%s9 + $0x24] sm:$0xf]
    %v543 = vld [vmem:[%s9 + $0x28] sm:$0xf]
    %v544 = vld [vmem:[%s9 + $0x2c] sm:$0xf]
    %v545 = vld [vmem:[%s9 + $0x30] sm:$0xf]
    %v546 = vld [vmem:[%s9 + $0x34] sm:$0xf]
    %v547 = vld [vmem:[%s9 + $0x38] sm:$0xf]
    %v548 = vld [vmem:[%s9 + $0x3c] sm:$0xf]
    %v549 = vld [vmem:[%s10] sm:$0x1]
    %v551 = vlaneseq
    %v552 = vshrl.u32 %v551, 7
    %v553 = vsub.s32 0, %v552
    %v554 = vrot.slane %v549, %v553
    %v572 = vunpack.c.l.b16 %v533
    %v573 = vunpack.c.l.b16 %v534
    %v574 = vunpack.c.l.b16 %v535
    %v575 = vunpack.c.l.b16 %v536
    %v576 = vunpack.c.l.b16 %v537
    %v577 = vunpack.c.l.b16 %v538
    %v578 = vunpack.c.l.b16 %v539
    %v579 = vunpack.c.l.b16 %v540
    %v580 = vunpack.c.l.b16 %v541
    %v581 = vunpack.c.l.b16 %v542
    %v582 = vunpack.c.l.b16 %v543
    %v583 = vunpack.c.l.b16 %v544
    %v584 = vunpack.c.l.b16 %v545
    %v585 = vunpack.c.l.b16 %v546
    %v586 = vunpack.c.l.b16 %v547
    %v587 = vunpack.c.l.b16 %v548
    %v588 = vpack.c.b16 %v573, %v572
    %v589 = vpack.c.b16 %v575, %v574
    %v590 = vpack.c.b16 %v577, %v576
    %v591 = vpack.c.b16 %v579, %v578
    %v592 = vpack.c.b16 %v581, %v580
    %v593 = vpack.c.b16 %v583, %v582
    %v594 = vpack.c.b16 %v585, %v584
    %v595 = vpack.c.b16 %v587, %v586
    %604 = vmatprep.subr.bf16.mxu0 0
    %605 = vmatpush1.bf16.msra.mxu0 %v588
    %606 = vmatprep.subr.bf16.mxu0 0
    %607 = vmatpush1.bf16.msra.mxu0 %v589
    %608 = vmatprep.subr.bf16.mxu0 0
    %609 = vmatpush1.bf16.msra.mxu0 %v590
    %610 = vmatprep.subr.bf16.mxu0 0
    %611 = vmatpush1.bf16.msra.mxu0 %v591
    %612 = vmatprep.subr.bf16.mxu0 0
    %613 = vmatpush1.bf16.msra.mxu0 %v592
    %614 = vmatprep.subr.bf16.mxu0 0
    %615 = vmatpush1.bf16.msra.mxu0 %v593
    %616 = vmatprep.subr.bf16.mxu0 0
    %617 = vmatpush1.bf16.msra.mxu0 %v594
    %618 = vmatprep.subr.bf16.mxu0 0
    %619 = vmatpush1.bf16.msra.mxu0 %v595
    %620 = vmatprep.subr.bf16.mxu0 0
    %621 = vmatpush1.bf16.msra.mxu0 0
    %622 = vmatprep.subr.bf16.mxu0 0
    %623 = vmatpush1.bf16.msra.mxu0 0
    %624 = vmatprep.subr.bf16.mxu0 0
    %625 = vmatpush1.bf16.msra.mxu0 0
    %626 = vmatprep.subr.bf16.mxu0 0
    %627 = vmatpush1.bf16.msra.mxu0 0
    %628 = vmatprep.subr.bf16.mxu0 0
    %629 = vmatpush1.bf16.msra.mxu0 0
    %630 = vmatprep.subr.bf16.mxu0 0
    %631 = vmatpush1.bf16.msra.mxu0 0
    %632 = vmatprep.subr.bf16.mxu0 0
    %633 = vmatpush1.bf16.msra.mxu0 0
    %634 = vmatprep.subr.bf16.mxu0 0
    %635 = vmatpush1.bf16.msra.mxu0 0
    %636 = vmatprep.mubr.bf16.mxu0 0
    %637 = vmatmul.mubr.bf16.gmra.mrb[0].mxu0 %v532
    %v638 = vpop.f32.mrb[0].mxu0
    %v639 = vadd.f32 %v554, %v638
    %v640 = vpop.f32.mrb[0].mxu0
    %v641 = vpop.f32.mrb[0].mxu0
    %v642 = vpop.f32.mrb[0].mxu0
    %643 = vdwg.mxu0
    %v644 = vmax.f32 %v639, 0.0
    %v645 = vpack.c.bf16 %v644, %v644
    %v646 = vld [vmem:[%s11] sm:$0xf]
    %v647 = vld [vmem:[%s11 + $0x4] sm:$0xf]
    %v648 = vld [vmem:[%s11 + $0x8] sm:$0xf]
    %v649 = vld [vmem:[%s11 + $0xc] sm:$0xf]
    %v650 = vld [vmem:[%s11 + $0x10] sm:$0xf]
    %v651 = vld [vmem:[%s11 + $0x14] sm:$0xf]
    %v652 = vld [vmem:[%s11 + $0x18] sm:$0xf]
    %v653 = vld [vmem:[%s11 + $0x1c] sm:$0xf]
    %v654 = vld [vmem:[%s11 + $0x20] sm:$0xf]
    %v655 = vld [vmem:[%s11 + $0x24] sm:$0xf]
    %v656 = vld [vmem:[%s11 + $0x28] sm:$0xf]
    %v657 = vld [vmem:[%s11 + $0x2c] sm:$0xf]
    %v658 = vld [vmem:[%s11 + $0x30] sm:$0xf]
    %v659 = vld [vmem:[%s11 + $0x34] sm:$0xf]
    %v660 = vld [vmem:[%s11 + $0x38] sm:$0xf]
    %v661 = vld [vmem:[%s11 + $0x3c] sm:$0xf]
    %v662 = vld [vmem:[%s12] sm:$0x1]
    %v664 = vlaneseq
    %v665 = vshrl.u32 %v664, 7
    %v666 = vsub.s32 0, %v665
    %v667 = vrot.slane %v662, %v666
    %v685 = vunpack.c.l.b16 %v646
    %v686 = vunpack.c.l.b16 %v647
    %v687 = vunpack.c.l.b16 %v648
    %v688 = vunpack.c.l.b16 %v649
    %v689 = vunpack.c.l.b16 %v650
    %v690 = vunpack.c.l.b16 %v651
    %v691 = vunpack.c.l.b16 %v652
    %v692 = vunpack.c.l.b16 %v653
    %v693 = vunpack.c.l.b16 %v654
    %v694 = vunpack.c.l.b16 %v655
    %v695 = vunpack.c.l.b16 %v656
    %v696 = vunpack.c.l.b16 %v657
    %v697 = vunpack.c.l.b16 %v658
    %v698 = vunpack.c.l.b16 %v659
    %v699 = vunpack.c.l.b16 %v660
    %v700 = vunpack.c.l.b16 %v661
    %v701 = vpack.c.b16 %v686, %v685
    %v702 = vpack.c.b16 %v688, %v687
    %v703 = vpack.c.b16 %v690, %v689
    %v704 = vpack.c.b16 %v692, %v691
    %v705 = vpack.c.b16 %v694, %v693
    %v706 = vpack.c.b16 %v696, %v695
    %v707 = vpack.c.b16 %v698, %v697
    %v708 = vpack.c.b16 %v700, %v699
    %717 = vmatprep.subr.bf16.mxu0 0
    %718 = vmatpush1.bf16.msra.mxu0 %v701
    %719 = vmatprep.subr.bf16.mxu0 0
    %720 = vmatpush1.bf16.msra.mxu0 %v702
    %721 = vmatprep.subr.bf16.mxu0 0
    %722 = vmatpush1.bf16.msra.mxu0 %v703
    %723 = vmatprep.subr.bf16.mxu0 0
    %724 = vmatpush1.bf16.msra.mxu0 %v704
    %725 = vmatprep.subr.bf16.mxu0 0
    %726 = vmatpush1.bf16.msra.mxu0 %v705
    %727 = vmatprep.subr.bf16.mxu0 0
    %728 = vmatpush1.bf16.msra.mxu0 %v706
    %729 = vmatprep.subr.bf16.mxu0 0
    %730 = vmatpush1.bf16.msra.mxu0 %v707
    %731 = vmatprep.subr.bf16.mxu0 0
    %732 = vmatpush1.bf16.msra.mxu0 %v708
    %733 = vmatprep.subr.bf16.mxu0 0
    %734 = vmatpush1.bf16.msra.mxu0 0
    %735 = vmatprep.subr.bf16.mxu0 0
    %736 = vmatpush1.bf16.msra.mxu0 0
    %737 = vmatprep.subr.bf16.mxu0 0
    %738 = vmatpush1.bf16.msra.mxu0 0
    %739 = vmatprep.subr.bf16.mxu0 0
    %740 = vmatpush1.bf16.msra.mxu0 0
    %741 = vmatprep.subr.bf16.mxu0 0
    %742 = vmatpush1.bf16.msra.mxu0 0
    %743 = vmatprep.subr.bf16.mxu0 0
    %744 = vmatpush1.bf16.msra.mxu0 0
    %745 = vmatprep.subr.bf16.mxu0 0
    %746 = vmatpush1.bf16.msra.mxu0 0
    %747 = vmatprep.subr.bf16.mxu0 0
    %748 = vmatpush1.bf16.msra.mxu0 0
    %749 = vmatprep.mubr.bf16.mxu0 0
    %750 = vmatmul.mubr.bf16.gmra.mrb[0].mxu0 %v645
    %v751 = vpop.f32.mrb[0].mxu0
    %v752 = vadd.f32 %v667, %v751
    %v753 = vpop.f32.mrb[0].mxu0
    %v754 = vpop.f32.mrb[0].mxu0
    %v755 = vpop.f32.mrb[0].mxu0
    %756 = vdwg.mxu0
    %757 = vst [vmem:[#allocation2] sm:$0x3] %v752
    // Predicated region
    $region54: #{pointnet2_cls_forward.5} parent=1 // pred_check
      _
    $region55: #{pointnet2_cls_forward.5} parent=1 // pred_check_branch
      %759 = sbr.rel (0) target = $region57
    $region56: #{pointnet2_cls_forward.5} parent=1 // pred_region
      %s761 = ssub.s32 32, 32
      %762 = vsyncadd [#allocation3], %s761
      %s764 = sshll.u32 [#allocation2], 4
      %s765 = int_to_ptr.vmem [resolvable:$true] %s764
      %767 = dma.vmem_to_hbm [thread:$0]  %s765, 32, %s13, [#allocation3]
    $region57: #{pointnet2_cls_forward.5} parent=1 // pred_fallthru
      _
    // Predicated region
    $region58: #{pointnet2_cls_forward.5} parent=1 // pred_check
      _
    $region59: #{pointnet2_cls_forward.5} parent=1 // pred_check_branch
      %769 = sbr.rel (0) target = $region61
    $region60: #{pointnet2_cls_forward.5} parent=1 // pred_region
      %770 = dma.done [#allocation3], 32
    $region61: #{pointnet2_cls_forward.5} parent=1 // pred_fallthru
      _
    %771 = vsyncpa [#allocation3], 1

</llo_original>
